<compile_context>
chip_gen: v6e
topology: v6e:2x2x1
jax: 0.10.0
libtpu: 0.0.40
codegen_flags: <defaults>
</compile_context>

<pallas_src>
import functools

import jax
import jax.numpy as jnp
from jax.experimental import pallas as pl
from jax.experimental.pallas import tpu as pltpu


COMPUTE_DTYPE = jnp.bfloat16   # streamed activation / matmul-operand dtype


# --------------------------- capability probes ------------------------------ #

@functools.lru_cache(maxsize=None)
def _weight_pipeline_mode():
    """pl.Buffered(1) for never-re-fetched (constant index) weight blocks if this
    Pallas build supports single-buffered operands; otherwise None (default)."""
    try:
        def _copy(x_ref, o_ref):
            o_ref[...] = x_ref[...]

        spec = pl.BlockSpec((8, 128), lambda i: (0, 0),
                            pipeline_mode=pl.Buffered(1))
        out = pl.pallas_call(
            _copy,
            grid=(2,),
            in_specs=[spec],
            out_specs=pl.BlockSpec((8, 128), lambda i: (0, 0)),
            out_shape=jax.ShapeDtypeStruct((8, 128), jnp.float32),
        )(jnp.zeros((8, 128), jnp.float32))
        jax.block_until_ready(out)
        return pl.Buffered(1)
    except Exception:
        return None


@functools.lru_cache(maxsize=None)
def _vmem_limit_bytes():
    """~85% of physical VMEM (128 MiB v5e/v6e, 64 MiB v7x), clamped to 100 MiB,
    leaving headroom for Mosaic internals."""
    cap = 128 * 1024 * 1024
    try:
        cap = int(getattr(pltpu.get_tpu_info(), "vmem_capacity_bytes", cap))
    except Exception:
        pass
    return max(32 * 1024 * 1024, min(int(cap * 0.85), 100 * 1024 * 1024))


def _row_tile(n):
    """Largest row tile (multiple of 8, <=512) dividing n that still leaves >=2
    grid steps for v7x's two TensorCores; falls back to n."""
    for t in (512, 256, 128, 64, 32, 16, 8):
        if n % t == 0 and n // t >= 2:
            return t
    return n


# ----------------------------- Pallas kernels ------------------------------- #

def _attn_block_kernel(*refs, nhead, scale, mask_mode, compute_dtype):
    """Fused MHA block: QKV proj -> per-head SDPA -> out proj -> +res -> LN."""
    if mask_mode == "dense":
        (mask_ref, xq_ref, xkv_ref, wq_ref, bq_ref, wkv_ref, bkv_ref,
         wo_ref, bo_ref, g_ref, be_ref, o_ref, q_s, kv_s, ctx_s) = refs
    else:
        mask_ref = None
        (xq_ref, xkv_ref, wq_ref, bq_ref, wkv_ref, bkv_ref,
         wo_ref, bo_ref, g_ref, be_ref, o_ref, q_s, kv_s, ctx_s) = refs

    xq = xq_ref[0]            # (tq, D)  bf16
    xkv = xkv_ref[0]          # (Sk, D)  bf16

    D = wq_ref.shape[1]
    Dh = D // nhead
    tq = xq.shape[0]
    Sk = xkv.shape[0]

    # Fused projections (bf16 operands, f32 accumulation); 1/sqrt(Dh) folded
    # into q (touches tq*D elements, not tq*Sk).  Results parked in VMEM
    # scratch so per-head slices are ref views, not live vreg buffers.
    q = jnp.dot(xq, wq_ref[...], preferred_element_type=jnp.float32) + bq_ref[...]
    q_s[...] = (q * scale).astype(compute_dtype)
    kv = jnp.dot(xkv, wkv_ref[...], preferred_element_type=jnp.float32) + bkv_ref[...]
    kv_s[...] = kv.astype(compute_dtype)

    # Additive mask bias (tq, Sk), computed once, shared across heads.
    if mask_mode == "causal":
        q0 = pl.program_id(1) * tq
        row = jax.lax.broadcasted_iota(jnp.int32, (tq, Sk), 0) + q0
        col = jax.lax.broadcasted_iota(jnp.int32, (tq, Sk), 1)
        mbias = jnp.where(row >= col, 0.0, -1e9).astype(jnp.float32)
    elif mask_mode == "dense":
        mf = mask_ref[0].astype(jnp.float32)          # int8 {0,1} -> f32
        mbias = jnp.where(mf == 0.0, -1e9, 0.0).astype(jnp.float32)
    else:
        mbias = None

    # Per-head SDPA; each head's context is stored straight into ctx scratch
    # (no list + jnp.concatenate, no lane relayout of a concatenated result).
    for h in range(nhead):
        lo = h * Dh
        qh = q_s[:, lo:lo + Dh]                       # (tq, Dh) bf16
        kh = kv_s[:, lo:lo + Dh]                      # (Sk, Dh) bf16
        vh = kv_s[:, D + lo:D + lo + Dh]              # (Sk, Dh) bf16
        # q_h @ k_h^T via dot_general contracting last dims (no explicit .T)
        s = jax.lax.dot_general(qh, kh, (((1,), (1,)), ((), ())),
                                preferred_element_type=jnp.float32)  # (tq, Sk)
        if mbias is not None:
            s = s + mbias
        s = s - jnp.max(s, axis=-1, keepdims=True)
        p = jnp.exp(s)
        p = p * pl.reciprocal(jnp.sum(p, axis=-1, keepdims=True), approx=True)
        ctx_s[:, lo:lo + Dh] = jnp.dot(
            p.astype(compute_dtype), vh,
            preferred_element_type=jnp.float32).astype(compute_dtype)

    attn = jnp.dot(ctx_s[...], wo_ref[...],
                   preferred_element_type=jnp.float32) + bo_ref[...]

    # residual + LayerNorm in f32 (eps = 1e-5 to match PyTorch)
    y = xq.astype(jnp.float32) + attn
    mu = jnp.mean(y, axis=-1, keepdims=True)
    var = jnp.mean((y - mu) ** 2, axis=-1, keepdims=True)
    o_ref[0] = ((y - mu) * jax.lax.rsqrt(var + 1e-5) * g_ref[...]
                + be_ref[...]).astype(o_ref.dtype)


def _ffn_block_kernel(x_ref, w1_ref, b1_ref, w2_ref, b2_ref, g_ref, be_ref,
                      o_ref, *, compute_dtype):
    """Fused FFN block: linear1 -> ReLU -> linear2 -> +residual -> LayerNorm."""
    x = x_ref[...]                                    # (tm, D) bf16
    h = jnp.dot(x, w1_ref[...], preferred_element_type=jnp.float32) + b1_ref[...]
    h = jnp.maximum(h, 0.0)
    y2 = jnp.dot(h.astype(compute_dtype), w2_ref[...],
                 preferred_element_type=jnp.float32) + b2_ref[...]
    y = x.astype(jnp.float32) + y2
    mu = jnp.mean(y, axis=-1, keepdims=True)
    var = jnp.mean((y - mu) ** 2, axis=-1, keepdims=True)
    o_ref[...] = ((y - mu) * jax.lax.rsqrt(var + 1e-5) * g_ref[...]
                  + be_ref[...]).astype(o_ref.dtype)


# ------------------------------ Pallas wrappers ------------------------------ #

def fused_attention_block(x_q, x_kv, mask, attn_p, gamma, beta, *,
                          nhead, mask_mode="dense", compute_dtype=COMPUTE_DTYPE):
    """One pallas_call per attention block.

    mask_mode:
      "causal" - bias generated in-kernel from iota; `mask` is ignored (no DMA).
      "dense"  - `mask` is a (B,1,Sq,Sk) or (B,Sq,Sk) 0/1 mask; streamed as int8.
      "none"   - no masking.
    """
    B, Sq, D = x_q.shape
    Sk = x_kv.shape[1]
    Dh = D // nhead
    wq, bq = attn_p["wq"]
    wkv, bkv = attn_p["wkv"]
    wo, bo = attn_p["wo"]

    x_q = x_q.astype(compute_dtype)
    x_kv = x_kv.astype(compute_dtype)

    tq = _row_tile(Sq)
    nq = Sq // tq
    grid = (B, nq)

    kern = functools.partial(_attn_block_kernel, nhead=nhead,
                             scale=1.0 / (Dh ** 0.5), mask_mode=mask_mode,
                             compute_dtype=compute_dtype)

    pm = _weight_pipeline_mode()

    def cspec(shape):
        # Constant-index weight block: VMEM-resident across the grid;
        # single-buffered (no pointless double buffer) when supported.
        imap = lambda b, qi: (0, 0)
        return (pl.BlockSpec(shape, imap) if pm is None
                else pl.BlockSpec(shape, imap, pipeline_mode=pm))

    in_specs = []
    args = []
    mask_bytes = 0
    if mask_mode == "dense":
        mask = mask.reshape(B, Sq, Sk).astype(jnp.int8)   # 4x smaller than f32
        in_specs.append(pl.BlockSpec((1, tq, Sk), lambda b, qi: (b, qi, 0)))
        args.append(mask)
        mask_bytes = int(mask.size)
    in_specs += [
        pl.BlockSpec((1, tq, D), lambda b, qi: (b, qi, 0)),
        pl.BlockSpec((1, Sk, D), lambda b, qi: (b, 0, 0)),
        cspec((D, D)), cspec((1, D)),
        cspec((D, 2 * D)), cspec((1, 2 * D)),
        cspec((D, D)), cspec((1, D)),
        cspec((1, D)), cspec((1, D)),
    ]
    args += [x_q, x_kv,
             wq, bq.reshape(1, D), wkv, bkv.reshape(1, 2 * D),
             wo, bo.reshape(1, D), gamma.reshape(1, D), beta.reshape(1, D)]

    flops = 2 * B * (Sq * D * D + Sk * D * 2 * D + 2 * Sq * Sk * D + Sq * D * D)
    weight_bytes = sum(int(a.size) * a.dtype.itemsize
                       for a in (wq, bq, wkv, bkv, wo, bo, gamma, beta))
    bytes_accessed = 2 * (int(x_q.size) + int(x_kv.size) + B * Sq * D) \
        + weight_bytes + mask_bytes
    cost = pl.CostEstimate(flops=int(flops),
                           transcendentals=int(B * nhead * Sq * Sk),
                           bytes_accessed=int(bytes_accessed))

    return pl.pallas_call(
        kern,
        out_shape=jax.ShapeDtypeStruct((B, Sq, D), compute_dtype),
        grid=grid,
        in_specs=in_specs,
        out_specs=pl.BlockSpec((1, tq, D), lambda b, qi: (b, qi, 0)),
        scratch_shapes=[
            pltpu.VMEM((tq, D), compute_dtype),        # scaled q
            pltpu.VMEM((Sk, 2 * D), compute_dtype),    # fused k|v
            pltpu.VMEM((tq, D), compute_dtype),        # per-head context
        ],
        compiler_params=pltpu.CompilerParams(
            dimension_semantics=("parallel", "parallel"),
            vmem_limit_bytes=_vmem_limit_bytes()),
        cost_estimate=cost,
    )(*args)


def fused_ffn_block(x, w1, b1, w2, b2, gamma, beta, *,
                    compute_dtype=COMPUTE_DTYPE):
    B, S, D = x.shape
    N = B * S
    F = w1.shape[1]
    x2 = x.astype(compute_dtype).reshape(N, D)
    tm = _row_tile(N)

    kern = functools.partial(_ffn_block_kernel, compute_dtype=compute_dtype)

    pm = _weight_pipeline_mode()

    def cspec(shape):
        imap = lambda i: (0, 0)
        return (pl.BlockSpec(shape, imap) if pm is None
                else pl.BlockSpec(shape, imap, pipeline_mode=pm))

    flops = 2 * N * (D * F + F * D)
    weight_bytes = sum(int(a.size) * a.dtype.itemsize
                       for a in (w1, b1, w2, b2, gamma, beta))
    cost = pl.CostEstimate(flops=int(flops), transcendentals=0,
                           bytes_accessed=int(2 * (2 * N * D) + weight_bytes))

    out = pl.pallas_call(
        kern,
        out_shape=jax.ShapeDtypeStruct((N, D), compute_dtype),
        grid=(N // tm,),
        in_specs=[
            pl.BlockSpec((tm, D), lambda i: (i, 0)),
            cspec((D, F)), cspec((1, F)),
            cspec((F, D)), cspec((1, D)),
            cspec((1, D)), cspec((1, D)),
        ],
        out_specs=pl.BlockSpec((tm, D), lambda i: (i, 0)),
        compiler_params=pltpu.CompilerParams(
            dimension_semantics=("parallel",),
            vmem_limit_bytes=_vmem_limit_bytes()),
        cost_estimate=cost,
    )(x2, w1, b1.reshape(1, F), w2, b2.reshape(1, D),
      gamma.reshape(1, D), beta.reshape(1, D))
    return out.reshape(B, S, D)


# -------------------------------- DecoderLayer ------------------------------- #

def init_decoder_layer_params(key, d_model, nhead, dim_feedforward,
                              compute_dtype=COMPUTE_DTYPE):
    ks = jax.random.split(key, 10)

    def lin(k, din, dout, wdtype):
        kw, kb = jax.random.split(k)
        lim = 1.0 / (din ** 0.5)
        w = jax.random.uniform(kw, (din, dout), jnp.float32, -lim, lim).astype(wdtype)
        b = jax.random.uniform(kb, (dout,), jnp.float32, -lim, lim)  # biases f32
        return w, b

    def mha(keys):
        wq, bq = lin(keys[0], d_model, d_model, compute_dtype)
        wk, bk = lin(keys[1], d_model, d_model, compute_dtype)
        wv, bv = lin(keys[2], d_model, d_model, compute_dtype)
        wo, bo = lin(keys[3], d_model, d_model, compute_dtype)
        # fuse the K/V projections into one (D, 2D) matmul
        return {"wq": (wq, bq),
                "wkv": (jnp.concatenate([wk, wv], axis=1),
                        jnp.concatenate([bk, bv], axis=0)),
                "wo": (wo, bo)}

    ones = jnp.ones((d_model,), jnp.float32)
    zeros = jnp.zeros((d_model,), jnp.float32)
    return {
        "self_attn": mha(ks[0:4]),
        "cross_attn": mha(ks[4:8]),
        "linear1": lin(ks[8], d_model, dim_feedforward, compute_dtype),
        "linear2": lin(ks[9], dim_feedforward, d_model, compute_dtype),
        "norm1": (ones, zeros),
        "norm2": (ones, zeros),
        "norm3": (ones, zeros),
    }


def decoder_layer_forward(params, dec, enc, trg_mask, src_mask, *, nhead,
                          self_mask_mode="causal", cross_mask_mode="dense"):
    """DecoderLayer forward (eval mode: all dropouts are identity).

    self_mask_mode="causal" generates the target mask bias in-kernel (trg_mask
    is only read when self_mask_mode=="dense"); cross_mask_mode="dense" streams
    src_mask as int8.  Activations flow through the kernels in bf16; softmax /
    residual / LayerNorm math is f32 inside the kernels.
    """
    # self-attention + residual + norm1  (single fused kernel)
    dec = fused_attention_block(dec, dec, trg_mask, params["self_attn"],
                                *params["norm1"], nhead=nhead,
                                mask_mode=self_mask_mode)
    # cross-attention + residual + norm2 (single fused kernel)
    if enc is not None:
        dec = fused_attention_block(dec, enc, src_mask, params["cross_attn"],
                                    *params["norm2"], nhead=nhead,
                                    mask_mode=cross_mask_mode)
    # feed-forward + residual + norm3    (single fused kernel)
    w1, b1 = params["linear1"]
    w2, b2 = params["linear2"]
    dec = fused_ffn_block(dec, w1, b1, w2, b2, *params["norm3"])
    return dec


# ------------------------------------ main ----------------------------------- #

if __name__ == "__main__":
    B = 2            # batch
    S_DEC = 8        # decoder sequence length
    S_ENC = 8        # encoder sequence length
    D_MODEL = 32
    NHEAD = 4
    DIM_FF = 64

    # run the one-time capability probes outside jit tracing
    _weight_pipeline_mode()
    _vmem_limit_bytes()

    key = jax.random.PRNGKey(0)
    k_par, k_dec, k_enc = jax.random.split(key, 3)

    params = init_decoder_layer_params(k_par, D_MODEL, NHEAD, DIM_FF)

    dec = jax.random.normal(k_dec, (B, S_DEC, D_MODEL), jnp.float32)
    enc = jax.random.normal(k_enc, (B, S_ENC, D_MODEL), jnp.float32)

    # 0/1 masks kept in int8 (4x smaller than f32): causal target, full source
    trg_mask = jnp.tril(jnp.ones((S_DEC, S_DEC), jnp.int8))[None, None, :, :]
    trg_mask = jnp.broadcast_to(trg_mask, (B, 1, S_DEC, S_DEC))
    src_mask = jnp.ones((B, 1, S_DEC, S_ENC), jnp.int8)

    fwd = jax.jit(decoder_layer_forward,
                  static_argnames=("nhead", "self_mask_mode", "cross_mask_mode"))
    out = fwd(params, dec, enc, trg_mask, src_mask, nhead=NHEAD,
              self_mask_mode="causal", cross_mask_mode="dense")
    out = jax.block_until_ready(out)

    assert out.shape == (B, S_DEC, D_MODEL)
    assert bool(jnp.all(jnp.isfinite(out.astype(jnp.float32))))
    print("KERNEL_OK")
</pallas_src>

<mosaic_0001>
module attributes {stable_mosaic.version = 11 : i64} {
  func.func @_copy(%arg0: i32, %arg1: memref<8x128xf32, #tpu.memory_space<vmem>>, %arg2: memref<8x128xf32, #tpu.memory_space<vmem>>) attributes {dimension_semantics = [#tpu.dimension_semantics<arbitrary>], iteration_bounds = array<i64: 2>, scalar_prefetch = 0 : i64, scratch_operands = 0 : i64, tpu.core_type = #tpu.core_type<tc>, window_params = [{pipeline_mode = #tpu.pipeline_mode<synchronous>, transform_indices = @transform_0, window_bounds = array<i64: 8, 128>}, {pipeline_mode = #tpu.pipeline_mode<synchronous>, transform_indices = @transform_1, window_bounds = array<i64: 8, 128>}]} {
    %c0 = arith.constant 0 : index
    %c0_0 = arith.constant 0 : index
    %0 = vector.load %arg1[%c0, %c0_0] : memref<8x128xf32, #tpu.memory_space<vmem>>, vector<8x128xf32>
    %c0_1 = arith.constant 0 : index
    %c0_2 = arith.constant 0 : index
    %1 = vector.load %arg2[%c0_1, %c0_2] : memref<8x128xf32, #tpu.memory_space<vmem>>, vector<8x128xf32>
    tpu.vector_store %arg2[%c0_1, %c0_2], %0 {strides = array<i32>} : memref<8x128xf32, #tpu.memory_space<vmem>>, vector<8x128xf32>,
    return
  }
  func.func @transform_0(%arg0: i32) -> (i32, i32) {
    %c0_i32 = arith.constant 0 : i32
    %c0_i32_0 = arith.constant 0 : i32
    %c0_i32_1 = arith.constant 0 : i32
    return %c0_i32, %c0_i32_0 : i32, i32
  }
  func.func @transform_1(%arg0: i32) -> (i32, i32) {
    %c0_i32 = arith.constant 0 : i32
    %c0_i32_0 = arith.constant 0 : i32
    %c0_i32_1 = arith.constant 0 : i32
    return %c0_i32, %c0_i32_0 : i32, i32
  }
}

module attributes {stable_mosaic.version = 11 : i64} {
  func.func @_ffn_block_kernel(%arg0: i32, %arg1: memref<8x32xbf16, #tpu.memory_space<vmem>>, %arg2: memref<32x64xbf16, #tpu.memory_space<vmem>>, %arg3: memref<1x64xf32, #tpu.memory_space<vmem>>, %arg4: memref<64x32xbf16, #tpu.memory_space<vmem>>, %arg5: memref<1x32xf32, #tpu.memory_space<vmem>>, %arg6: memref<1x32xf32, #tpu.memory_space<vmem>>, %arg7: memref<1x32xf32, #tpu.memory_space<vmem>>, %arg8: memref<8x32xbf16, #tpu.memory_space<vmem>>) attributes {dimension_semantics = [#tpu.dimension_semantics<parallel>], iteration_bounds = array<i64: 2>, scalar_prefetch = 0 : i64, scratch_operands = 0 : i64, tpu.core_type = #tpu.core_type<tc>, window_params = [{transform_indices = @transform_0, window_bounds = array<i64: 8, 32>}, {pipeline_mode = #tpu.pipeline_mode<synchronous>, transform_indices = @transform_1, window_bounds = array<i64: 32, 64>}, {pipeline_mode = #tpu.pipeline_mode<synchronous>, transform_indices = @transform_2, window_bounds = array<i64: 1, 64>}, {pipeline_mode = #tpu.pipeline_mode<synchronous>, transform_indices = @transform_3, window_bounds = array<i64: 64, 32>}, {pipeline_mode = #tpu.pipeline_mode<synchronous>, transform_indices = @transform_4, window_bounds = array<i64: 1, 32>}, {pipeline_mode = #tpu.pipeline_mode<synchronous>, transform_indices = @transform_5, window_bounds = array<i64: 1, 32>}, {pipeline_mode = #tpu.pipeline_mode<synchronous>, transform_indices = @transform_6, window_bounds = array<i64: 1, 32>}, {transform_indices = @transform_7, window_bounds = array<i64: 8, 32>}]} {
    %c0 = arith.constant 0 : index
    %c0_0 = arith.constant 0 : index
    %0 = vector.load %arg1[%c0, %c0_0] : memref<8x32xbf16, #tpu.memory_space<vmem>>, vector<8x32xbf16>
    %c0_1 = arith.constant 0 : index
    %c0_2 = arith.constant 0 : index
    %1 = vector.load %arg2[%c0_1, %c0_2] : memref<32x64xbf16, #tpu.memory_space<vmem>>, vector<32x64xbf16>
    %cst = arith.constant dense<0.000000e+00> : vector<8x64xf32>
    %2 = tpu.matmul %0, %1, %cst {dimension_numbers = #tpu.dot_dimension_numbers<[1], [0], [0], [1], [0, 0, 1, 1], [], []>} : vector<8x32xbf16>, vector<32x64xbf16>, vector<8x64xf32> -> vector<8x64xf32>
    %c0_3 = arith.constant 0 : index
    %c0_4 = arith.constant 0 : index
    %3 = vector.load %arg3[%c0_3, %c0_4] : memref<1x64xf32, #tpu.memory_space<vmem>>, vector<1x64xf32>
    %4 = vector.broadcast %3 : vector<1x64xf32> to vector<8x64xf32>
    %5 = arith.addf %2, %4 : vector<8x64xf32>
    %cst_5 = arith.constant 0.000000e+00 : f32
    %6 = vector.broadcast %cst_5 : f32 to vector<8x64xf32>
    %7 = arith.maximumf %5, %6 : vector<8x64xf32>
    %8 = arith.truncf %7 : vector<8x64xf32> to vector<8x64xbf16>
    %c0_6 = arith.constant 0 : index
    %c0_7 = arith.constant 0 : index
    %9 = vector.load %arg4[%c0_6, %c0_7] : memref<64x32xbf16, #tpu.memory_space<vmem>>, vector<64x32xbf16>
    %cst_8 = arith.constant dense<0.000000e+00> : vector<8x32xf32>
    %10 = tpu.matmul %8, %9, %cst_8 {dimension_numbers = #tpu.dot_dimension_numbers<[1], [0], [0], [1], [0, 0, 1, 1], [], []>} : vector<8x64xbf16>, vector<64x32xbf16>, vector<8x32xf32> -> vector<8x32xf32>
    %c0_9 = arith.constant 0 : index
    %c0_10 = arith.constant 0 : index
    %11 = vector.load %arg5[%c0_9, %c0_10] : memref<1x32xf32, #tpu.memory_space<vmem>>, vector<1x32xf32>
    %12 = vector.broadcast %11 : vector<1x32xf32> to vector<8x32xf32>
    %13 = arith.addf %10, %12 : vector<8x32xf32>
    %14 = arith.extf %0 : vector<8x32xbf16> to vector<8x32xf32>
    %15 = arith.addf %14, %13 : vector<8x32xf32>
    %cst_11 = arith.constant dense<0.000000e+00> : vector<8xf32>
    %16 = vector.multi_reduction <add>, %15, %cst_11 [1] : vector<8x32xf32> to vector<8xf32>
    %17 = vector.shape_cast %16 : vector<8xf32> to vector<8x1xf32>
    %cst_12 = arith.constant 3.200000e+01 : f32
    %18 = vector.broadcast %cst_12 : f32 to vector<8x1xf32>
    %19 = arith.divf %17, %18 : vector<8x1xf32>
    %20 = vector.broadcast %19 : vector<8x1xf32> to vector<8x32xf32>
    %21 = arith.subf %15, %20 : vector<8x32xf32>
    %22 = arith.mulf %21, %21 : vector<8x32xf32>
    %cst_13 = arith.constant dense<0.000000e+00> : vector<8xf32>
    %23 = vector.multi_reduction <add>, %22, %cst_13 [1] : vector<8x32xf32> to vector<8xf32>
    %24 = vector.shape_cast %23 : vector<8xf32> to vector<8x1xf32>
    %cst_14 = arith.constant 3.200000e+01 : f32
    %25 = vector.broadcast %cst_14 : f32 to vector<8x1xf32>
    %26 = arith.divf %24, %25 : vector<8x1xf32>
    %27 = vector.broadcast %19 : vector<8x1xf32> to vector<8x32xf32>
    %28 = arith.subf %15, %27 : vector<8x32xf32>
    %cst_15 = arith.constant 9.99999974E-6 : f32
    %29 = vector.broadcast %cst_15 : f32 to vector<8x1xf32>
    %30 = arith.addf %26, %29 : vector<8x1xf32>
    %31 = math.rsqrt %30 : vector<8x1xf32>
    %32 = vector.broadcast %31 : vector<8x1xf32> to vector<8x32xf32>
    %33 = arith.mulf %28, %32 : vector<8x32xf32>
    %c0_16 = arith.constant 0 : index
    %c0_17 = arith.constant 0 : index
    %34 = vector.load %arg6[%c0_16, %c0_17] : memref<1x32xf32, #tpu.memory_space<vmem>>, vector<1x32xf32>
    %35 = vector.broadcast %34 : vector<1x32xf32> to vector<8x32xf32>
    %36 = arith.mulf %33, %35 : vector<8x32xf32>
    %c0_18 = arith.constant 0 : index
    %c0_19 = arith.constant 0 : index
    %37 = vector.load %arg7[%c0_18, %c0_19] : memref<1x32xf32, #tpu.memory_space<vmem>>, vector<1x32xf32>
    %38 = vector.broadcast %37 : vector<1x32xf32> to vector<8x32xf32>
    %39 = arith.addf %36, %38 : vector<8x32xf32>
    %40 = arith.truncf %39 : vector<8x32xf32> to vector<8x32xbf16>
    %c0_20 = arith.constant 0 : index
    %c0_21 = arith.constant 0 : index
    %41 = vector.load %arg8[%c0_20, %c0_21] : memref<8x32xbf16, #tpu.memory_space<vmem>>, vector<8x32xbf16>
    tpu.vector_store %arg8[%c0_20, %c0_21], %40 {strides = array<i32>} : memref<8x32xbf16, #tpu.memory_space<vmem>>, vector<8x32xbf16>,
    return
  }
  func.func @transform_0(%arg0: i32) -> (i32, i32) {
    %c0_i32 = arith.constant 0 : i32
    %c0_i32_0 = arith.constant 0 : i32
    return %arg0, %c0_i32 : i32, i32
  }
  func.func @transform_1(%arg0: i32) -> (i32, i32) {
    %c0_i32 = arith.constant 0 : i32
    %c0_i32_0 = arith.constant 0 : i32
    %c0_i32_1 = arith.constant 0 : i32
    return %c0_i32, %c0_i32_0 : i32, i32
  }
  func.func @transform_2(%arg0: i32) -> (i32, i32) {
    %c0_i32 = arith.constant 0 : i32
    %c0_i32_0 = arith.constant 0 : i32
    %c0_i32_1 = arith.constant 0 : i32
    return %c0_i32, %c0_i32_0 : i32, i32
  }
  func.func @transform_3(%arg0: i32) -> (i32, i32) {
    %c0_i32 = arith.constant 0 : i32
    %c0_i32_0 = arith.constant 0 : i32
    %c0_i32_1 = arith.constant 0 : i32
    return %c0_i32, %c0_i32_0 : i32, i32
  }
  func.func @transform_4(%arg0: i32) -> (i32, i32) {
    %c0_i32 = arith.constant 0 : i32
    %c0_i32_0 = arith.constant 0 : i32
    %c0_i32_1 = arith.constant 0 : i32
    return %c0_i32, %c0_i32_0 : i32, i32
  }
  func.func @transform_5(%arg0: i32) -> (i32, i32) {
    %c0_i32 = arith.constant 0 : i32
    %c0_i32_0 = arith.constant 0 : i32
    %c0_i32_1 = arith.constant 0 : i32
    return %c0_i32, %c0_i32_0 : i32, i32
  }
  func.func @transform_6(%arg0: i32) -> (i32, i32) {
    %c0_i32 = arith.constant 0 : i32
    %c0_i32_0 = arith.constant 0 : i32
    %c0_i32_1 = arith.constant 0 : i32
    return %c0_i32, %c0_i32_0 : i32, i32
  }
  func.func @transform_7(%arg0: i32) -> (i32, i32) {
    %c0_i32 = arith.constant 0 : i32
    %c0_i32_0 = arith.constant 0 : i32
    return %arg0, %c0_i32 : i32, i32
  }
}

module attributes {stable_mosaic.version = 11 : i64} {
  func.func @_attn_block_kernel(%arg0: i32, %arg1: i32, %arg2: memref<1x8x32xbf16, #tpu.memory_space<vmem>>, %arg3: memref<1x8x32xbf16, #tpu.memory_space<vmem>>, %arg4: memref<32x32xbf16, #tpu.memory_space<vmem>>, %arg5: memref<1x32xf32, #tpu.memory_space<vmem>>, %arg6: memref<32x64xbf16, #tpu.memory_space<vmem>>, %arg7: memref<1x64xf32, #tpu.memory_space<vmem>>, %arg8: memref<32x32xbf16, #tpu.memory_space<vmem>>, %arg9: memref<1x32xf32, #tpu.memory_space<vmem>>, %arg10: memref<1x32xf32, #tpu.memory_space<vmem>>, %arg11: memref<1x32xf32, #tpu.memory_space<vmem>>, %arg12: memref<1x8x32xbf16, #tpu.memory_space<vmem>>, %arg13: memref<8x32xbf16, #tpu.memory_space<vmem>>, %arg14: memref<8x64xbf16, #tpu.memory_space<vmem>>, %arg15: memref<8x32xbf16, #tpu.memory_space<vmem>>) attributes {dimension_semantics = [#tpu.dimension_semantics<parallel>, #tpu.dimension_semantics<parallel>], iteration_bounds = array<i64: 2, 1>, scalar_prefetch = 0 : i64, scratch_operands = 3 : i64, tpu.core_type = #tpu.core_type<tc>, window_params = [{transform_indices = @transform_0, window_bounds = array<i64: 1, 8, 32>}, {transform_indices = @transform_1, window_bounds = array<i64: 1, 8, 32>}, {pipeline_mode = #tpu.pipeline_mode<synchronous>, transform_indices = @transform_2, window_bounds = array<i64: 32, 32>}, {pipeline_mode = #tpu.pipeline_mode<synchronous>, transform_indices = @transform_3, window_bounds = array<i64: 1, 32>}, {pipeline_mode = #tpu.pipeline_mode<synchronous>, transform_indices = @transform_4, window_bounds = array<i64: 32, 64>}, {pipeline_mode = #tpu.pipeline_mode<synchronous>, transform_indices = @transform_5, window_bounds = array<i64: 1, 64>}, {pipeline_mode = #tpu.pipeline_mode<synchronous>, transform_indices = @transform_6, window_bounds = array<i64: 32, 32>}, {pipeline_mode = #tpu.pipeline_mode<synchronous>, transform_indices = @transform_7, window_bounds = array<i64: 1, 32>}, {pipeline_mode = #tpu.pipeline_mode<synchronous>, transform_indices = @transform_8, window_bounds = array<i64: 1, 32>}, {pipeline_mode = #tpu.pipeline_mode<synchronous>, transform_indices = @transform_9, window_bounds = array<i64: 1, 32>}, {transform_indices = @transform_10, window_bounds = array<i64: 1, 8, 32>}]} {
    %c0 = arith.constant 0 : index
    %c0_0 = arith.constant 0 : index
    %c0_1 = arith.constant 0 : index
    %0 = vector.load %arg2[%c0, %c0_0, %c0_1] : memref<1x8x32xbf16, #tpu.memory_space<vmem>>, vector<1x8x32xbf16>
    %1 = vector.shape_cast %0 : vector<1x8x32xbf16> to vector<8x32xbf16>
    %c0_2 = arith.constant 0 : index
    %c0_3 = arith.constant 0 : index
    %c0_4 = arith.constant 0 : index
    %2 = vector.load %arg3[%c0_2, %c0_3, %c0_4] : memref<1x8x32xbf16, #tpu.memory_space<vmem>>, vector<1x8x32xbf16>
    %3 = vector.shape_cast %2 : vector<1x8x32xbf16> to vector<8x32xbf16>
    %c0_5 = arith.constant 0 : index
    %c0_6 = arith.constant 0 : index
    %4 = vector.load %arg4[%c0_5, %c0_6] : memref<32x32xbf16, #tpu.memory_space<vmem>>, vector<32x32xbf16>
    %cst = arith.constant dense<0.000000e+00> : vector<8x32xf32>
    %5 = tpu.matmul %1, %4, %cst {dimension_numbers = #tpu.dot_dimension_numbers<[1], [0], [0], [1], [0, 0, 1, 1], [], []>} : vector<8x32xbf16>, vector<32x32xbf16>, vector<8x32xf32> -> vector<8x32xf32>
    %c0_7 = arith.constant 0 : index
    %c0_8 = arith.constant 0 : index
    %6 = vector.load %arg5[%c0_7, %c0_8] : memref<1x32xf32, #tpu.memory_space<vmem>>, vector<1x32xf32>
    %7 = vector.broadcast %6 : vector<1x32xf32> to vector<8x32xf32>
    %8 = arith.addf %5, %7 : vector<8x32xf32>
    %cst_9 = arith.constant 0.353553385 : f32
    %9 = vector.broadcast %cst_9 : f32 to vector<8x32xf32>
    %10 = arith.mulf %8, %9 : vector<8x32xf32>
    %11 = arith.truncf %10 : vector<8x32xf32> to vector<8x32xbf16>
    %c0_10 = arith.constant 0 : index
    %c0_11 = arith.constant 0 : index
    %12 = vector.load %arg13[%c0_10, %c0_11] : memref<8x32xbf16, #tpu.memory_space<vmem>>, vector<8x32xbf16>
    tpu.vector_store %arg13[%c0_10, %c0_11], %11 {strides = array<i32>} : memref<8x32xbf16, #tpu.memory_space<vmem>>, vector<8x32xbf16>,
    %c0_12 = arith.constant 0 : index
    %c0_13 = arith.constant 0 : index
    %13 = vector.load %arg6[%c0_12, %c0_13] : memref<32x64xbf16, #tpu.memory_space<vmem>>, vector<32x64xbf16>
    %cst_14 = arith.constant dense<0.000000e+00> : vector<8x64xf32>
    %14 = tpu.matmul %3, %13, %cst_14 {dimension_numbers = #tpu.dot_dimension_numbers<[1], [0], [0], [1], [0, 0, 1, 1], [], []>} : vector<8x32xbf16>, vector<32x64xbf16>, vector<8x64xf32> -> vector<8x64xf32>
    %c0_15 = arith.constant 0 : index
    %c0_16 = arith.constant 0 : index
    %15 = vector.load %arg7[%c0_15, %c0_16] : memref<1x64xf32, #tpu.memory_space<vmem>>, vector<1x64xf32>
    %16 = vector.broadcast %15 : vector<1x64xf32> to vector<8x64xf32>
    %17 = arith.addf %14, %16 : vector<8x64xf32>
    %18 = arith.truncf %17 : vector<8x64xf32> to vector<8x64xbf16>
    %c0_17 = arith.constant 0 : index
    %c0_18 = arith.constant 0 : index
    %19 = vector.load %arg14[%c0_17, %c0_18] : memref<8x64xbf16, #tpu.memory_space<vmem>>, vector<8x64xbf16>
    tpu.vector_store %arg14[%c0_17, %c0_18], %18 {strides = array<i32>} : memref<8x64xbf16, #tpu.memory_space<vmem>>, vector<8x64xbf16>,
    %c8_i32 = arith.constant 8 : i32
    %20 = arith.muli %arg1, %c8_i32 : i32
    %21 = tpu.iota {dimensions = array<i32: 0>} : vector<8x8xi32>
    %22 = vector.broadcast %20 : i32 to vector<8x8xi32>
    %23 = arith.addi %21, %22 : vector<8x8xi32>
    %24 = tpu.iota {dimensions = array<i32: 1>} : vector<8x8xi32>
    %25 = arith.cmpi sge, %23, %24 : vector<8x8xi32>
    %cst_19 = arith.constant 0.000000e+00 : f32
    %cst_20 = arith.constant -1.000000e+09 : f32
    %26 = vector.broadcast %cst_19 : f32 to vector<8x8xf32>
    %27 = vector.broadcast %cst_20 : f32 to vector<8x8xf32>
    %28 = arith.select %25, %26, %27 : vector<8x8xi1>, vector<8x8xf32>
    %c0_21 = arith.constant 0 : index
    %c0_22 = arith.constant 0 : index
    %29 = vector.load %arg13[%c0_21, %c0_22] : memref<8x32xbf16, #tpu.memory_space<vmem>>, vector<8x8xbf16>
    %c0_23 = arith.constant 0 : index
    %c0_24 = arith.constant 0 : index
    %30 = vector.load %arg14[%c0_23, %c0_24] : memref<8x64xbf16, #tpu.memory_space<vmem>>, vector<8x8xbf16>
    %c0_25 = arith.constant 0 : index
    %c32 = arith.constant 32 : index
    %31 = vector.load %arg14[%c0_25, %c32] : memref<8x64xbf16, #tpu.memory_space<vmem>>, vector<8x8xbf16>
    %cst_26 = arith.constant dense<0.000000e+00> : vector<8x8xf32>
    %32 = tpu.matmul %29, %30, %cst_26 {dimension_numbers = #tpu.dot_dimension_numbers<[1], [1], [0], [0], [0, 0, 1, 0], [], []>} : vector<8x8xbf16>, vector<8x8xbf16>, vector<8x8xf32> -> vector<8x8xf32>
    %33 = arith.addf %32, %28 : vector<8x8xf32>
    %cst_27 = arith.constant dense<0xFF800000> : vector<8xf32>
    %34 = vector.multi_reduction <maximumf>, %33, %cst_27 [1] : vector<8x8xf32> to vector<8xf32>
    %35 = vector.shape_cast %34 : vector<8xf32> to vector<8x1xf32>
    %36 = vector.broadcast %35 : vector<8x1xf32> to vector<8x8xf32>
    %37 = arith.subf %33, %36 : vector<8x8xf32>
    %38 = math.exp %37 : vector<8x8xf32>
    %cst_28 = arith.constant dense<0.000000e+00> : vector<8xf32>
    %39 = vector.multi_reduction <add>, %38, %cst_28 [1] : vector<8x8xf32> to vector<8xf32>
    %40 = vector.shape_cast %39 : vector<8xf32> to vector<8x1xf32>
    %41 = tpu.reciprocal %40 {approx = true} : vector<8x1xf32> -> vector<8x1xf32>
    %42 = vector.broadcast %41 : vector<8x1xf32> to vector<8x8xf32>
    %43 = arith.mulf %38, %42 : vector<8x8xf32>
    %44 = arith.truncf %43 : vector<8x8xf32> to vector<8x8xbf16>
    %cst_29 = arith.constant dense<0.000000e+00> : vector<8x8xf32>
    %45 = tpu.matmul %44, %31, %cst_29 {dimension_numbers = #tpu.dot_dimension_numbers<[1], [0], [0], [1], [0, 0, 1, 1], [], []>} : vector<8x8xbf16>, vector<8x8xbf16>, vector<8x8xf32> -> vector<8x8xf32>
    %46 = arith.truncf %45 : vector<8x8xf32> to vector<8x8xbf16>
    %c0_30 = arith.constant 0 : index
    %c0_31 = arith.constant 0 : index
    %47 = vector.load %arg15[%c0_30, %c0_31] : memref<8x32xbf16, #tpu.memory_space<vmem>>, vector<8x8xbf16>
    tpu.vector_store %arg15[%c0_30, %c0_31], %46 {strides = array<i32>} : memref<8x32xbf16, #tpu.memory_space<vmem>>, vector<8x8xbf16>,
    %c0_32 = arith.constant 0 : index
    %c8 = arith.constant 8 : index
    %48 = vector.load %arg13[%c0_32, %c8] : memref<8x32xbf16, #tpu.memory_space<vmem>>, vector<8x8xbf16>
    %c0_33 = arith.constant 0 : index
    %c8_34 = arith.constant 8 : index
    %49 = vector.load %arg14[%c0_33, %c8_34] : memref<8x64xbf16, #tpu.memory_space<vmem>>, vector<8x8xbf16>
    %c0_35 = arith.constant 0 : index
    %c40 = arith.constant 40 : index
    %50 = vector.load %arg14[%c0_35, %c40] : memref<8x64xbf16, #tpu.memory_space<vmem>>, vector<8x8xbf16>
    %cst_36 = arith.constant dense<0.000000e+00> : vector<8x8xf32>
    %51 = tpu.matmul %48, %49, %cst_36 {dimension_numbers = #tpu.dot_dimension_numbers<[1], [1], [0], [0], [0, 0, 1, 0], [], []>} : vector<8x8xbf16>, vector<8x8xbf16>, vector<8x8xf32> -> vector<8x8xf32>
    %52 = arith.addf %51, %28 : vector<8x8xf32>
    %cst_37 = arith.constant dense<0xFF800000> : vector<8xf32>
    %53 = vector.multi_reduction <maximumf>, %52, %cst_37 [1] : vector<8x8xf32> to vector<8xf32>
    %54 = vector.shape_cast %53 : vector<8xf32> to vector<8x1xf32>
    %55 = vector.broadcast %54 : vector<8x1xf32> to vector<8x8xf32>
    %56 = arith.subf %52, %55 : vector<8x8xf32>
    %57 = math.exp %56 : vector<8x8xf32>
    %cst_38 = arith.constant dense<0.000000e+00> : vector<8xf32>
    %58 = vector.multi_reduction <add>, %57, %cst_38 [1] : vector<8x8xf32> to vector<8xf32>
    %59 = vector.shape_cast %58 : vector<8xf32> to vector<8x1xf32>
    %60 = tpu.reciprocal %59 {approx = true} : vector<8x1xf32> -> vector<8x1xf32>
    %61 = vector.broadcast %60 : vector<8x1xf32> to vector<8x8xf32>
    %62 = arith.mulf %57, %61 : vector<8x8xf32>
    %63 = arith.truncf %62 : vector<8x8xf32> to vector<8x8xbf16>
    %cst_39 = arith.constant dense<0.000000e+00> : vector<8x8xf32>
    %64 = tpu.matmul %63, %50, %cst_39 {dimension_numbers = #tpu.dot_dimension_numbers<[1], [0], [0], [1], [0, 0, 1, 1], [], []>} : vector<8x8xbf16>, vector<8x8xbf16>, vector<8x8xf32> -> vector<8x8xf32>
    %65 = arith.truncf %64 : vector<8x8xf32> to vector<8x8xbf16>
    %c0_40 = arith.constant 0 : index
    %c8_41 = arith.constant 8 : index
    %66 = vector.load %arg15[%c0_40, %c8_41] : memref<8x32xbf16, #tpu.memory_space<vmem>>, vector<8x8xbf16>
    tpu.vector_store %arg15[%c0_40, %c8_41], %65 {strides = array<i32>} : memref<8x32xbf16, #tpu.memory_space<vmem>>, vector<8x8xbf16>,
    %c0_42 = arith.constant 0 : index
    %c16 = arith.constant 16 : index
    %67 = vector.load %arg13[%c0_42, %c16] : memref<8x32xbf16, #tpu.memory_space<vmem>>, vector<8x8xbf16>
    %c0_43 = arith.constant 0 : index
    %c16_44 = arith.constant 16 : index
    %68 = vector.load %arg14[%c0_43, %c16_44] : memref<8x64xbf16, #tpu.memory_space<vmem>>, vector<8x8xbf16>
    %c0_45 = arith.constant 0 : index
    %c48 = arith.constant 48 : index
    %69 = vector.load %arg14[%c0_45, %c48] : memref<8x64xbf16, #tpu.memory_space<vmem>>, vector<8x8xbf16>
    %cst_46 = arith.constant dense<0.000000e+00> : vector<8x8xf32>
    %70 = tpu.matmul %67, %68, %cst_46 {dimension_numbers = #tpu.dot_dimension_numbers<[1], [1], [0], [0], [0, 0, 1, 0], [], []>} : vector<8x8xbf16>, vector<8x8xbf16>, vector<8x8xf32> -> vector<8x8xf32>
    %71 = arith.addf %70, %28 : vector<8x8xf32>
    %cst_47 = arith.constant dense<0xFF800000> : vector<8xf32>
    %72 = vector.multi_reduction <maximumf>, %71, %cst_47 [1] : vector<8x8xf32> to vector<8xf32>
    %73 = vector.shape_cast %72 : vector<8xf32> to vector<8x1xf32>
    %74 = vector.broadcast %73 : vector<8x1xf32> to vector<8x8xf32>
    %75 = arith.subf %71, %74 : vector<8x8xf32>
    %76 = math.exp %75 : vector<8x8xf32>
    %cst_48 = arith.constant dense<0.000000e+00> : vector<8xf32>
    %77 = vector.multi_reduction <add>, %76, %cst_48 [1] : vector<8x8xf32> to vector<8xf32>
    %78 = vector.shape_cast %77 : vector<8xf32> to vector<8x1xf32>
    %79 = tpu.reciprocal %78 {approx = true} : vector<8x1xf32> -> vector<8x1xf32>
    %80 = vector.broadcast %79 : vector<8x1xf32> to vector<8x8xf32>
    %81 = arith.mulf %76, %80 : vector<8x8xf32>
    %82 = arith.truncf %81 : vector<8x8xf32> to vector<8x8xbf16>
    %cst_49 = arith.constant dense<0.000000e+00> : vector<8x8xf32>
    %83 = tpu.matmul %82, %69, %cst_49 {dimension_numbers = #tpu.dot_dimension_numbers<[1], [0], [0], [1], [0, 0, 1, 1], [], []>} : vector<8x8xbf16>, vector<8x8xbf16>, vector<8x8xf32> -> vector<8x8xf32>
    %84 = arith.truncf %83 : vector<8x8xf32> to vector<8x8xbf16>
    %c0_50 = arith.constant 0 : index
    %c16_51 = arith.constant 16 : index
    %85 = vector.load %arg15[%c0_50, %c16_51] : memref<8x32xbf16, #tpu.memory_space<vmem>>, vector<8x8xbf16>
    tpu.vector_store %arg15[%c0_50, %c16_51], %84 {strides = array<i32>} : memref<8x32xbf16, #tpu.memory_space<vmem>>, vector<8x8xbf16>,
    %c0_52 = arith.constant 0 : index
    %c24 = arith.constant 24 : index
    %86 = vector.load %arg13[%c0_52, %c24] : memref<8x32xbf16, #tpu.memory_space<vmem>>, vector<8x8xbf16>
    %c0_53 = arith.constant 0 : index
    %c24_54 = arith.constant 24 : index
    %87 = vector.load %arg14[%c0_53, %c24_54] : memref<8x64xbf16, #tpu.memory_space<vmem>>, vector<8x8xbf16>
    %c0_55 = arith.constant 0 : index
    %c56 = arith.constant 56 : index
    %88 = vector.load %arg14[%c0_55, %c56] : memref<8x64xbf16, #tpu.memory_space<vmem>>, vector<8x8xbf16>
    %cst_56 = arith.constant dense<0.000000e+00> : vector<8x8xf32>
    %89 = tpu.matmul %86, %87, %cst_56 {dimension_numbers = #tpu.dot_dimension_numbers<[1], [1], [0], [0], [0, 0, 1, 0], [], []>} : vector<8x8xbf16>, vector<8x8xbf16>, vector<8x8xf32> -> vector<8x8xf32>
    %90 = arith.addf %89, %28 : vector<8x8xf32>
    %cst_57 = arith.constant dense<0xFF800000> : vector<8xf32>
    %91 = vector.multi_reduction <maximumf>, %90, %cst_57 [1] : vector<8x8xf32> to vector<8xf32>
    %92 = vector.shape_cast %91 : vector<8xf32> to vector<8x1xf32>
    %93 = vector.broadcast %92 : vector<8x1xf32> to vector<8x8xf32>
    %94 = arith.subf %90, %93 : vector<8x8xf32>
    %95 = math.exp %94 : vector<8x8xf32>
    %cst_58 = arith.constant dense<0.000000e+00> : vector<8xf32>
    %96 = vector.multi_reduction <add>, %95, %cst_58 [1] : vector<8x8xf32> to vector<8xf32>
    %97 = vector.shape_cast %96 : vector<8xf32> to vector<8x1xf32>
    %98 = tpu.reciprocal %97 {approx = true} : vector<8x1xf32> -> vector<8x1xf32>
    %99 = vector.broadcast %98 : vector<8x1xf32> to vector<8x8xf32>
    %100 = arith.mulf %95, %99 : vector<8x8xf32>
    %101 = arith.truncf %100 : vector<8x8xf32> to vector<8x8xbf16>
    %cst_59 = arith.constant dense<0.000000e+00> : vector<8x8xf32>
    %102 = tpu.matmul %101, %88, %cst_59 {dimension_numbers = #tpu.dot_dimension_numbers<[1], [0], [0], [1], [0, 0, 1, 1], [], []>} : vector<8x8xbf16>, vector<8x8xbf16>, vector<8x8xf32> -> vector<8x8xf32>
    %103 = arith.truncf %102 : vector<8x8xf32> to vector<8x8xbf16>
    %c0_60 = arith.constant 0 : index
    %c24_61 = arith.constant 24 : index
    %104 = vector.load %arg15[%c0_60, %c24_61] : memref<8x32xbf16, #tpu.memory_space<vmem>>, vector<8x8xbf16>
    tpu.vector_store %arg15[%c0_60, %c24_61], %103 {strides = array<i32>} : memref<8x32xbf16, #tpu.memory_space<vmem>>, vector<8x8xbf16>,
    %c0_62 = arith.constant 0 : index
    %c0_63 = arith.constant 0 : index
    %105 = vector.load %arg15[%c0_62, %c0_63] : memref<8x32xbf16, #tpu.memory_space<vmem>>, vector<8x32xbf16>
    %c0_64 = arith.constant 0 : index
    %c0_65 = arith.constant 0 : index
    %106 = vector.load %arg8[%c0_64, %c0_65] : memref<32x32xbf16, #tpu.memory_space<vmem>>, vector<32x32xbf16>
    %cst_66 = arith.constant dense<0.000000e+00> : vector<8x32xf32>
    %107 = tpu.matmul %105, %106, %cst_66 {dimension_numbers = #tpu.dot_dimension_numbers<[1], [0], [0], [1], [0, 0, 1, 1], [], []>} : vector<8x32xbf16>, vector<32x32xbf16>, vector<8x32xf32> -> vector<8x32xf32>
    %c0_67 = arith.constant 0 : index
    %c0_68 = arith.constant 0 : index
    %108 = vector.load %arg9[%c0_67, %c0_68] : memref<1x32xf32, #tpu.memory_space<vmem>>, vector<1x32xf32>
    %109 = vector.broadcast %108 : vector<1x32xf32> to vector<8x32xf32>
    %110 = arith.addf %107, %109 : vector<8x32xf32>
    %111 = arith.extf %1 : vector<8x32xbf16> to vector<8x32xf32>
    %112 = arith.addf %111, %110 : vector<8x32xf32>
    %cst_69 = arith.constant dense<0.000000e+00> : vector<8xf32>
    %113 = vector.multi_reduction <add>, %112, %cst_69 [1] : vector<8x32xf32> to vector<8xf32>
    %114 = vector.shape_cast %113 : vector<8xf32> to vector<8x1xf32>
    %cst_70 = arith.constant 3.200000e+01 : f32
    %115 = vector.broadcast %cst_70 : f32 to vector<8x1xf32>
    %116 = arith.divf %114, %115 : vector<8x1xf32>
    %117 = vector.broadcast %116 : vector<8x1xf32> to vector<8x32xf32>
    %118 = arith.subf %112, %117 : vector<8x32xf32>
    %119 = arith.mulf %118, %118 : vector<8x32xf32>
    %cst_71 = arith.constant dense<0.000000e+00> : vector<8xf32>
    %120 = vector.multi_reduction <add>, %119, %cst_71 [1] : vector<8x32xf32> to vector<8xf32>
    %121 = vector.shape_cast %120 : vector<8xf32> to vector<8x1xf32>
    %cst_72 = arith.constant 3.200000e+01 : f32
    %122 = vector.broadcast %cst_72 : f32 to vector<8x1xf32>
    %123 = arith.divf %121, %122 : vector<8x1xf32>
    %124 = vector.broadcast %116 : vector<8x1xf32> to vector<8x32xf32>
    %125 = arith.subf %112, %124 : vector<8x32xf32>
    %cst_73 = arith.constant 9.99999974E-6 : f32
    %126 = vector.broadcast %cst_73 : f32 to vector<8x1xf32>
    %127 = arith.addf %123, %126 : vector<8x1xf32>
    %128 = math.rsqrt %127 : vector<8x1xf32>
    %129 = vector.broadcast %128 : vector<8x1xf32> to vector<8x32xf32>
    %130 = arith.mulf %125, %129 : vector<8x32xf32>
    %c0_74 = arith.constant 0 : index
    %c0_75 = arith.constant 0 : index
    %131 = vector.load %arg10[%c0_74, %c0_75] : memref<1x32xf32, #tpu.memory_space<vmem>>, vector<1x32xf32>
    %132 = vector.broadcast %131 : vector<1x32xf32> to vector<8x32xf32>
    %133 = arith.mulf %130, %132 : vector<8x32xf32>
    %c0_76 = arith.constant 0 : index
    %c0_77 = arith.constant 0 : index
    %134 = vector.load %arg11[%c0_76, %c0_77] : memref<1x32xf32, #tpu.memory_space<vmem>>, vector<1x32xf32>
    %135 = vector.broadcast %134 : vector<1x32xf32> to vector<8x32xf32>
    %136 = arith.addf %133, %135 : vector<8x32xf32>
    %137 = arith.truncf %136 : vector<8x32xf32> to vector<8x32xbf16>
    %c0_78 = arith.constant 0 : index
    %c0_79 = arith.constant 0 : index
    %c0_80 = arith.constant 0 : index
    %138 = vector.load %arg12[%c0_78, %c0_79, %c0_80] : memref<1x8x32xbf16, #tpu.memory_space<vmem>>, vector<1x8x32xbf16>
    %139 = vector.shape_cast %138 : vector<1x8x32xbf16> to vector<8x32xbf16>
    %140 = vector.shape_cast %137 : vector<8x32xbf16> to vector<1x8x32xbf16>
    tpu.vector_store %arg12[%c0_78, %c0_79, %c0_80], %140 {strides = array<i32>} : memref<1x8x32xbf16, #tpu.memory_space<vmem>>, vector<1x8x32xbf16>,
    return
  }
  func.func @transform_0(%arg0: i32, %arg1: i32) -> (i32, i32, i32) {
    %c0_i32 = arith.constant 0 : i32
    %c0_i32_0 = arith.constant 0 : i32
    return %arg0, %arg1, %c0_i32 : i32, i32, i32
  }
  func.func @transform_1(%arg0: i32, %arg1: i32) -> (i32, i32, i32) {
    %c0_i32 = arith.constant 0 : i32
    %c0_i32_0 = arith.constant 0 : i32
    %c0_i32_1 = arith.constant 0 : i32
    return %arg0, %c0_i32, %c0_i32_0 : i32, i32, i32
  }
  func.func @transform_2(%arg0: i32, %arg1: i32) -> (i32, i32) {
    %c0_i32 = arith.constant 0 : i32
    %c0_i32_0 = arith.constant 0 : i32
    %c0_i32_1 = arith.constant 0 : i32
    return %c0_i32, %c0_i32_0 : i32, i32
  }
  func.func @transform_3(%arg0: i32, %arg1: i32) -> (i32, i32) {
    %c0_i32 = arith.constant 0 : i32
    %c0_i32_0 = arith.constant 0 : i32
    %c0_i32_1 = arith.constant 0 : i32
    return %c0_i32, %c0_i32_0 : i32, i32
  }
  func.func @transform_4(%arg0: i32, %arg1: i32) -> (i32, i32) {
    %c0_i32 = arith.constant 0 : i32
    %c0_i32_0 = arith.constant 0 : i32
    %c0_i32_1 = arith.constant 0 : i32
    return %c0_i32, %c0_i32_0 : i32, i32
  }
  func.func @transform_5(%arg0: i32, %arg1: i32) -> (i32, i32) {
    %c0_i32 = arith.constant 0 : i32
    %c0_i32_0 = arith.constant 0 : i32
    %c0_i32_1 = arith.constant 0 : i32
    return %c0_i32, %c0_i32_0 : i32, i32
  }
  func.func @transform_6(%arg0: i32, %arg1: i32) -> (i32, i32) {
    %c0_i32 = arith.constant 0 : i32
    %c0_i32_0 = arith.constant 0 : i32
    %c0_i32_1 = arith.constant 0 : i32
    return %c0_i32, %c0_i32_0 : i32, i32
  }
  func.func @transform_7(%arg0: i32, %arg1: i32) -> (i32, i32) {
    %c0_i32 = arith.constant 0 : i32
    %c0_i32_0 = arith.constant 0 : i32
    %c0_i32_1 = arith.constant 0 : i32
    return %c0_i32, %c0_i32_0 : i32, i32
  }
  func.func @transform_8(%arg0: i32, %arg1: i32) -> (i32, i32) {
    %c0_i32 = arith.constant 0 : i32
    %c0_i32_0 = arith.constant 0 : i32
    %c0_i32_1 = arith.constant 0 : i32
    return %c0_i32, %c0_i32_0 : i32, i32
  }
  func.func @transform_9(%arg0: i32, %arg1: i32) -> (i32, i32) {
    %c0_i32 = arith.constant 0 : i32
    %c0_i32_0 = arith.constant 0 : i32
    %c0_i32_1 = arith.constant 0 : i32
    return %c0_i32, %c0_i32_0 : i32, i32
  }
  func.func @transform_10(%arg0: i32, %arg1: i32) -> (i32, i32, i32) {
    %c0_i32 = arith.constant 0 : i32
    %c0_i32_0 = arith.constant 0 : i32
    return %arg0, %arg1, %c0_i32 : i32, i32, i32
  }
}

module attributes {stable_mosaic.version = 11 : i64} {
  func.func @_attn_block_kernel(%arg0: i32, %arg1: i32, %arg2: memref<1x8x8xi8, #tpu.memory_space<vmem>>, %arg3: memref<1x8x32xbf16, #tpu.memory_space<vmem>>, %arg4: memref<1x8x32xbf16, #tpu.memory_space<vmem>>, %arg5: memref<32x32xbf16, #tpu.memory_space<vmem>>, %arg6: memref<1x32xf32, #tpu.memory_space<vmem>>, %arg7: memref<32x64xbf16, #tpu.memory_space<vmem>>, %arg8: memref<1x64xf32, #tpu.memory_space<vmem>>, %arg9: memref<32x32xbf16, #tpu.memory_space<vmem>>, %arg10: memref<1x32xf32, #tpu.memory_space<vmem>>, %arg11: memref<1x32xf32, #tpu.memory_space<vmem>>, %arg12: memref<1x32xf32, #tpu.memory_space<vmem>>, %arg13: memref<1x8x32xbf16, #tpu.memory_space<vmem>>, %arg14: memref<8x32xbf16, #tpu.memory_space<vmem>>, %arg15: memref<8x64xbf16, #tpu.memory_space<vmem>>, %arg16: memref<8x32xbf16, #tpu.memory_space<vmem>>) attributes {dimension_semantics = [#tpu.dimension_semantics<parallel>, #tpu.dimension_semantics<parallel>], iteration_bounds = array<i64: 2, 1>, scalar_prefetch = 0 : i64, scratch_operands = 3 : i64, tpu.core_type = #tpu.core_type<tc>, window_params = [{transform_indices = @transform_0, window_bounds = array<i64: 1, 8, 8>}, {transform_indices = @transform_1, window_bounds = array<i64: 1, 8, 32>}, {transform_indices = @transform_2, window_bounds = array<i64: 1, 8, 32>}, {pipeline_mode = #tpu.pipeline_mode<synchronous>, transform_indices = @transform_3, window_bounds = array<i64: 32, 32>}, {pipeline_mode = #tpu.pipeline_mode<synchronous>, transform_indices = @transform_4, window_bounds = array<i64: 1, 32>}, {pipeline_mode = #tpu.pipeline_mode<synchronous>, transform_indices = @transform_5, window_bounds = array<i64: 32, 64>}, {pipeline_mode = #tpu.pipeline_mode<synchronous>, transform_indices = @transform_6, window_bounds = array<i64: 1, 64>}, {pipeline_mode = #tpu.pipeline_mode<synchronous>, transform_indices = @transform_7, window_bounds = array<i64: 32, 32>}, {pipeline_mode = #tpu.pipeline_mode<synchronous>, transform_indices = @transform_8, window_bounds = array<i64: 1, 32>}, {pipeline_mode = #tpu.pipeline_mode<synchronous>, transform_indices = @transform_9, window_bounds = array<i64: 1, 32>}, {pipeline_mode = #tpu.pipeline_mode<synchronous>, transform_indices = @transform_10, window_bounds = array<i64: 1, 32>}, {transform_indices = @transform_11, window_bounds = array<i64: 1, 8, 32>}]} {
    %c0 = arith.constant 0 : index
    %c0_0 = arith.constant 0 : index
    %c0_1 = arith.constant 0 : index
    %0 = vector.load %arg3[%c0, %c0_0, %c0_1] : memref<1x8x32xbf16, #tpu.memory_space<vmem>>, vector<1x8x32xbf16>
    %1 = vector.shape_cast %0 : vector<1x8x32xbf16> to vector<8x32xbf16>
    %c0_2 = arith.constant 0 : index
    %c0_3 = arith.constant 0 : index
    %c0_4 = arith.constant 0 : index
    %2 = vector.load %arg4[%c0_2, %c0_3, %c0_4] : memref<1x8x32xbf16, #tpu.memory_space<vmem>>, vector<1x8x32xbf16>
    %3 = vector.shape_cast %2 : vector<1x8x32xbf16> to vector<8x32xbf16>
    %c0_5 = arith.constant 0 : index
    %c0_6 = arith.constant 0 : index
    %4 = vector.load %arg5[%c0_5, %c0_6] : memref<32x32xbf16, #tpu.memory_space<vmem>>, vector<32x32xbf16>
    %cst = arith.constant dense<0.000000e+00> : vector<8x32xf32>
    %5 = tpu.matmul %1, %4, %cst {dimension_numbers = #tpu.dot_dimension_numbers<[1], [0], [0], [1], [0, 0, 1, 1], [], []>} : vector<8x32xbf16>, vector<32x32xbf16>, vector<8x32xf32> -> vector<8x32xf32>
    %c0_7 = arith.constant 0 : index
    %c0_8 = arith.constant 0 : index
    %6 = vector.load %arg6[%c0_7, %c0_8] : memref<1x32xf32, #tpu.memory_space<vmem>>, vector<1x32xf32>
    %7 = vector.broadcast %6 : vector<1x32xf32> to vector<8x32xf32>
    %8 = arith.addf %5, %7 : vector<8x32xf32>
    %cst_9 = arith.constant 0.353553385 : f32
    %9 = vector.broadcast %cst_9 : f32 to vector<8x32xf32>
    %10 = arith.mulf %8, %9 : vector<8x32xf32>
    %11 = arith.truncf %10 : vector<8x32xf32> to vector<8x32xbf16>
    %c0_10 = arith.constant 0 : index
    %c0_11 = arith.constant 0 : index
    %12 = vector.load %arg14[%c0_10, %c0_11] : memref<8x32xbf16, #tpu.memory_space<vmem>>, vector<8x32xbf16>
    tpu.vector_store %arg14[%c0_10, %c0_11], %11 {strides = array<i32>} : memref<8x32xbf16, #tpu.memory_space<vmem>>, vector<8x32xbf16>,
    %c0_12 = arith.constant 0 : index
    %c0_13 = arith.constant 0 : index
    %13 = vector.load %arg7[%c0_12, %c0_13] : memref<32x64xbf16, #tpu.memory_space<vmem>>, vector<32x64xbf16>
    %cst_14 = arith.constant dense<0.000000e+00> : vector<8x64xf32>
    %14 = tpu.matmul %3, %13, %cst_14 {dimension_numbers = #tpu.dot_dimension_numbers<[1], [0], [0], [1], [0, 0, 1, 1], [], []>} : vector<8x32xbf16>, vector<32x64xbf16>, vector<8x64xf32> -> vector<8x64xf32>
    %c0_15 = arith.constant 0 : index
    %c0_16 = arith.constant 0 : index
    %15 = vector.load %arg8[%c0_15, %c0_16] : memref<1x64xf32, #tpu.memory_space<vmem>>, vector<1x64xf32>
    %16 = vector.broadcast %15 : vector<1x64xf32> to vector<8x64xf32>
    %17 = arith.addf %14, %16 : vector<8x64xf32>
    %18 = arith.truncf %17 : vector<8x64xf32> to vector<8x64xbf16>
    %c0_17 = arith.constant 0 : index
    %c0_18 = arith.constant 0 : index
    %19 = vector.load %arg15[%c0_17, %c0_18] : memref<8x64xbf16, #tpu.memory_space<vmem>>, vector<8x64xbf16>
    tpu.vector_store %arg15[%c0_17, %c0_18], %18 {strides = array<i32>} : memref<8x64xbf16, #tpu.memory_space<vmem>>, vector<8x64xbf16>,
    %c0_19 = arith.constant 0 : index
    %c0_20 = arith.constant 0 : index
    %c0_21 = arith.constant 0 : index
    %20 = vector.load %arg2[%c0_19, %c0_20, %c0_21] : memref<1x8x8xi8, #tpu.memory_space<vmem>>, vector<1x8x8xi8>
    %21 = vector.shape_cast %20 : vector<1x8x8xi8> to vector<8x8xi8>
    %22 = arith.sitofp %21 : vector<8x8xi8> to vector<8x8xf32>
    %cst_22 = arith.constant 0.000000e+00 : f32
    %23 = vector.broadcast %cst_22 : f32 to vector<8x8xf32>
    %24 = arith.cmpf oeq, %22, %23 : vector<8x8xf32>
    %cst_23 = arith.constant -1.000000e+09 : f32
    %cst_24 = arith.constant 0.000000e+00 : f32
    %25 = vector.broadcast %cst_23 : f32 to vector<8x8xf32>
    %26 = vector.broadcast %cst_24 : f32 to vector<8x8xf32>
    %27 = arith.select %24, %25, %26 : vector<8x8xi1>, vector<8x8xf32>
    %c0_25 = arith.constant 0 : index
    %c0_26 = arith.constant 0 : index
    %28 = vector.load %arg14[%c0_25, %c0_26] : memref<8x32xbf16, #tpu.memory_space<vmem>>, vector<8x8xbf16>
    %c0_27 = arith.constant 0 : index
    %c0_28 = arith.constant 0 : index
    %29 = vector.load %arg15[%c0_27, %c0_28] : memref<8x64xbf16, #tpu.memory_space<vmem>>, vector<8x8xbf16>
    %c0_29 = arith.constant 0 : index
    %c32 = arith.constant 32 : index
    %30 = vector.load %arg15[%c0_29, %c32] : memref<8x64xbf16, #tpu.memory_space<vmem>>, vector<8x8xbf16>
    %cst_30 = arith.constant dense<0.000000e+00> : vector<8x8xf32>
    %31 = tpu.matmul %28, %29, %cst_30 {dimension_numbers = #tpu.dot_dimension_numbers<[1], [1], [0], [0], [0, 0, 1, 0], [], []>} : vector<8x8xbf16>, vector<8x8xbf16>, vector<8x8xf32> -> vector<8x8xf32>
    %32 = arith.addf %31, %27 : vector<8x8xf32>
    %cst_31 = arith.constant dense<0xFF800000> : vector<8xf32>
    %33 = vector.multi_reduction <maximumf>, %32, %cst_31 [1] : vector<8x8xf32> to vector<8xf32>
    %34 = vector.shape_cast %33 : vector<8xf32> to vector<8x1xf32>
    %35 = vector.broadcast %34 : vector<8x1xf32> to vector<8x8xf32>
    %36 = arith.subf %32, %35 : vector<8x8xf32>
    %37 = math.exp %36 : vector<8x8xf32>
    %cst_32 = arith.constant dense<0.000000e+00> : vector<8xf32>
    %38 = vector.multi_reduction <add>, %37, %cst_32 [1] : vector<8x8xf32> to vector<8xf32>
    %39 = vector.shape_cast %38 : vector<8xf32> to vector<8x1xf32>
    %40 = tpu.reciprocal %39 {approx = true} : vector<8x1xf32> -> vector<8x1xf32>
    %41 = vector.broadcast %40 : vector<8x1xf32> to vector<8x8xf32>
    %42 = arith.mulf %37, %41 : vector<8x8xf32>
    %43 = arith.truncf %42 : vector<8x8xf32> to vector<8x8xbf16>
    %cst_33 = arith.constant dense<0.000000e+00> : vector<8x8xf32>
    %44 = tpu.matmul %43, %30, %cst_33 {dimension_numbers = #tpu.dot_dimension_numbers<[1], [0], [0], [1], [0, 0, 1, 1], [], []>} : vector<8x8xbf16>, vector<8x8xbf16>, vector<8x8xf32> -> vector<8x8xf32>
    %45 = arith.truncf %44 : vector<8x8xf32> to vector<8x8xbf16>
    %c0_34 = arith.constant 0 : index
    %c0_35 = arith.constant 0 : index
    %46 = vector.load %arg16[%c0_34, %c0_35] : memref<8x32xbf16, #tpu.memory_space<vmem>>, vector<8x8xbf16>
    tpu.vector_store %arg16[%c0_34, %c0_35], %45 {strides = array<i32>} : memref<8x32xbf16, #tpu.memory_space<vmem>>, vector<8x8xbf16>,
    %c0_36 = arith.constant 0 : index
    %c8 = arith.constant 8 : index
    %47 = vector.load %arg14[%c0_36, %c8] : memref<8x32xbf16, #tpu.memory_space<vmem>>, vector<8x8xbf16>
    %c0_37 = arith.constant 0 : index
    %c8_38 = arith.constant 8 : index
    %48 = vector.load %arg15[%c0_37, %c8_38] : memref<8x64xbf16, #tpu.memory_space<vmem>>, vector<8x8xbf16>
    %c0_39 = arith.constant 0 : index
    %c40 = arith.constant 40 : index
    %49 = vector.load %arg15[%c0_39, %c40] : memref<8x64xbf16, #tpu.memory_space<vmem>>, vector<8x8xbf16>
    %cst_40 = arith.constant dense<0.000000e+00> : vector<8x8xf32>
    %50 = tpu.matmul %47, %48, %cst_40 {dimension_numbers = #tpu.dot_dimension_numbers<[1], [1], [0], [0], [0, 0, 1, 0], [], []>} : vector<8x8xbf16>, vector<8x8xbf16>, vector<8x8xf32> -> vector<8x8xf32>
    %51 = arith.addf %50, %27 : vector<8x8xf32>
    %cst_41 = arith.constant dense<0xFF800000> : vector<8xf32>
    %52 = vector.multi_reduction <maximumf>, %51, %cst_41 [1] : vector<8x8xf32> to vector<8xf32>
    %53 = vector.shape_cast %52 : vector<8xf32> to vector<8x1xf32>
    %54 = vector.broadcast %53 : vector<8x1xf32> to vector<8x8xf32>
    %55 = arith.subf %51, %54 : vector<8x8xf32>
    %56 = math.exp %55 : vector<8x8xf32>
    %cst_42 = arith.constant dense<0.000000e+00> : vector<8xf32>
    %57 = vector.multi_reduction <add>, %56, %cst_42 [1] : vector<8x8xf32> to vector<8xf32>
    %58 = vector.shape_cast %57 : vector<8xf32> to vector<8x1xf32>
    %59 = tpu.reciprocal %58 {approx = true} : vector<8x1xf32> -> vector<8x1xf32>
    %60 = vector.broadcast %59 : vector<8x1xf32> to vector<8x8xf32>
    %61 = arith.mulf %56, %60 : vector<8x8xf32>
    %62 = arith.truncf %61 : vector<8x8xf32> to vector<8x8xbf16>
    %cst_43 = arith.constant dense<0.000000e+00> : vector<8x8xf32>
    %63 = tpu.matmul %62, %49, %cst_43 {dimension_numbers = #tpu.dot_dimension_numbers<[1], [0], [0], [1], [0, 0, 1, 1], [], []>} : vector<8x8xbf16>, vector<8x8xbf16>, vector<8x8xf32> -> vector<8x8xf32>
    %64 = arith.truncf %63 : vector<8x8xf32> to vector<8x8xbf16>
    %c0_44 = arith.constant 0 : index
    %c8_45 = arith.constant 8 : index
    %65 = vector.load %arg16[%c0_44, %c8_45] : memref<8x32xbf16, #tpu.memory_space<vmem>>, vector<8x8xbf16>
    tpu.vector_store %arg16[%c0_44, %c8_45], %64 {strides = array<i32>} : memref<8x32xbf16, #tpu.memory_space<vmem>>, vector<8x8xbf16>,
    %c0_46 = arith.constant 0 : index
    %c16 = arith.constant 16 : index
    %66 = vector.load %arg14[%c0_46, %c16] : memref<8x32xbf16, #tpu.memory_space<vmem>>, vector<8x8xbf16>
    %c0_47 = arith.constant 0 : index
    %c16_48 = arith.constant 16 : index
    %67 = vector.load %arg15[%c0_47, %c16_48] : memref<8x64xbf16, #tpu.memory_space<vmem>>, vector<8x8xbf16>
    %c0_49 = arith.constant 0 : index
    %c48 = arith.constant 48 : index
    %68 = vector.load %arg15[%c0_49, %c48] : memref<8x64xbf16, #tpu.memory_space<vmem>>, vector<8x8xbf16>
    %cst_50 = arith.constant dense<0.000000e+00> : vector<8x8xf32>
    %69 = tpu.matmul %66, %67, %cst_50 {dimension_numbers = #tpu.dot_dimension_numbers<[1], [1], [0], [0], [0, 0, 1, 0], [], []>} : vector<8x8xbf16>, vector<8x8xbf16>, vector<8x8xf32> -> vector<8x8xf32>
    %70 = arith.addf %69, %27 : vector<8x8xf32>
    %cst_51 = arith.constant dense<0xFF800000> : vector<8xf32>
    %71 = vector.multi_reduction <maximumf>, %70, %cst_51 [1] : vector<8x8xf32> to vector<8xf32>
    %72 = vector.shape_cast %71 : vector<8xf32> to vector<8x1xf32>
    %73 = vector.broadcast %72 : vector<8x1xf32> to vector<8x8xf32>
    %74 = arith.subf %70, %73 : vector<8x8xf32>
    %75 = math.exp %74 : vector<8x8xf32>
    %cst_52 = arith.constant dense<0.000000e+00> : vector<8xf32>
    %76 = vector.multi_reduction <add>, %75, %cst_52 [1] : vector<8x8xf32> to vector<8xf32>
    %77 = vector.shape_cast %76 : vector<8xf32> to vector<8x1xf32>
    %78 = tpu.reciprocal %77 {approx = true} : vector<8x1xf32> -> vector<8x1xf32>
    %79 = vector.broadcast %78 : vector<8x1xf32> to vector<8x8xf32>
    %80 = arith.mulf %75, %79 : vector<8x8xf32>
    %81 = arith.truncf %80 : vector<8x8xf32> to vector<8x8xbf16>
    %cst_53 = arith.constant dense<0.000000e+00> : vector<8x8xf32>
    %82 = tpu.matmul %81, %68, %cst_53 {dimension_numbers = #tpu.dot_dimension_numbers<[1], [0], [0], [1], [0, 0, 1, 1], [], []>} : vector<8x8xbf16>, vector<8x8xbf16>, vector<8x8xf32> -> vector<8x8xf32>
    %83 = arith.truncf %82 : vector<8x8xf32> to vector<8x8xbf16>
    %c0_54 = arith.constant 0 : index
    %c16_55 = arith.constant 16 : index
    %84 = vector.load %arg16[%c0_54, %c16_55] : memref<8x32xbf16, #tpu.memory_space<vmem>>, vector<8x8xbf16>
    tpu.vector_store %arg16[%c0_54, %c16_55], %83 {strides = array<i32>} : memref<8x32xbf16, #tpu.memory_space<vmem>>, vector<8x8xbf16>,
    %c0_56 = arith.constant 0 : index
    %c24 = arith.constant 24 : index
    %85 = vector.load %arg14[%c0_56, %c24] : memref<8x32xbf16, #tpu.memory_space<vmem>>, vector<8x8xbf16>
    %c0_57 = arith.constant 0 : index
    %c24_58 = arith.constant 24 : index
    %86 = vector.load %arg15[%c0_57, %c24_58] : memref<8x64xbf16, #tpu.memory_space<vmem>>, vector<8x8xbf16>
    %c0_59 = arith.constant 0 : index
    %c56 = arith.constant 56 : index
    %87 = vector.load %arg15[%c0_59, %c56] : memref<8x64xbf16, #tpu.memory_space<vmem>>, vector<8x8xbf16>
    %cst_60 = arith.constant dense<0.000000e+00> : vector<8x8xf32>
    %88 = tpu.matmul %85, %86, %cst_60 {dimension_numbers = #tpu.dot_dimension_numbers<[1], [1], [0], [0], [0, 0, 1, 0], [], []>} : vector<8x8xbf16>, vector<8x8xbf16>, vector<8x8xf32> -> vector<8x8xf32>
    %89 = arith.addf %88, %27 : vector<8x8xf32>
    %cst_61 = arith.constant dense<0xFF800000> : vector<8xf32>
    %90 = vector.multi_reduction <maximumf>, %89, %cst_61 [1] : vector<8x8xf32> to vector<8xf32>
    %91 = vector.shape_cast %90 : vector<8xf32> to vector<8x1xf32>
    %92 = vector.broadcast %91 : vector<8x1xf32> to vector<8x8xf32>
    %93 = arith.subf %89, %92 : vector<8x8xf32>
    %94 = math.exp %93 : vector<8x8xf32>
    %cst_62 = arith.constant dense<0.000000e+00> : vector<8xf32>
    %95 = vector.multi_reduction <add>, %94, %cst_62 [1] : vector<8x8xf32> to vector<8xf32>
    %96 = vector.shape_cast %95 : vector<8xf32> to vector<8x1xf32>
    %97 = tpu.reciprocal %96 {approx = true} : vector<8x1xf32> -> vector<8x1xf32>
    %98 = vector.broadcast %97 : vector<8x1xf32> to vector<8x8xf32>
    %99 = arith.mulf %94, %98 : vector<8x8xf32>
    %100 = arith.truncf %99 : vector<8x8xf32> to vector<8x8xbf16>
    %cst_63 = arith.constant dense<0.000000e+00> : vector<8x8xf32>
    %101 = tpu.matmul %100, %87, %cst_63 {dimension_numbers = #tpu.dot_dimension_numbers<[1], [0], [0], [1], [0, 0, 1, 1], [], []>} : vector<8x8xbf16>, vector<8x8xbf16>, vector<8x8xf32> -> vector<8x8xf32>
    %102 = arith.truncf %101 : vector<8x8xf32> to vector<8x8xbf16>
    %c0_64 = arith.constant 0 : index
    %c24_65 = arith.constant 24 : index
    %103 = vector.load %arg16[%c0_64, %c24_65] : memref<8x32xbf16, #tpu.memory_space<vmem>>, vector<8x8xbf16>
    tpu.vector_store %arg16[%c0_64, %c24_65], %102 {strides = array<i32>} : memref<8x32xbf16, #tpu.memory_space<vmem>>, vector<8x8xbf16>,
    %c0_66 = arith.constant 0 : index
    %c0_67 = arith.constant 0 : index
    %104 = vector.load %arg16[%c0_66, %c0_67] : memref<8x32xbf16, #tpu.memory_space<vmem>>, vector<8x32xbf16>
    %c0_68 = arith.constant 0 : index
    %c0_69 = arith.constant 0 : index
    %105 = vector.load %arg9[%c0_68, %c0_69] : memref<32x32xbf16, #tpu.memory_space<vmem>>, vector<32x32xbf16>
    %cst_70 = arith.constant dense<0.000000e+00> : vector<8x32xf32>
    %106 = tpu.matmul %104, %105, %cst_70 {dimension_numbers = #tpu.dot_dimension_numbers<[1], [0], [0], [1], [0, 0, 1, 1], [], []>} : vector<8x32xbf16>, vector<32x32xbf16>, vector<8x32xf32> -> vector<8x32xf32>
    %c0_71 = arith.constant 0 : index
    %c0_72 = arith.constant 0 : index
    %107 = vector.load %arg10[%c0_71, %c0_72] : memref<1x32xf32, #tpu.memory_space<vmem>>, vector<1x32xf32>
    %108 = vector.broadcast %107 : vector<1x32xf32> to vector<8x32xf32>
    %109 = arith.addf %106, %108 : vector<8x32xf32>
    %110 = arith.extf %1 : vector<8x32xbf16> to vector<8x32xf32>
    %111 = arith.addf %110, %109 : vector<8x32xf32>
    %cst_73 = arith.constant dense<0.000000e+00> : vector<8xf32>
    %112 = vector.multi_reduction <add>, %111, %cst_73 [1] : vector<8x32xf32> to vector<8xf32>
    %113 = vector.shape_cast %112 : vector<8xf32> to vector<8x1xf32>
    %cst_74 = arith.constant 3.200000e+01 : f32
    %114 = vector.broadcast %cst_74 : f32 to vector<8x1xf32>
    %115 = arith.divf %113, %114 : vector<8x1xf32>
    %116 = vector.broadcast %115 : vector<8x1xf32> to vector<8x32xf32>
    %117 = arith.subf %111, %116 : vector<8x32xf32>
    %118 = arith.mulf %117, %117 : vector<8x32xf32>
    %cst_75 = arith.constant dense<0.000000e+00> : vector<8xf32>
    %119 = vector.multi_reduction <add>, %118, %cst_75 [1] : vector<8x32xf32> to vector<8xf32>
    %120 = vector.shape_cast %119 : vector<8xf32> to vector<8x1xf32>
    %cst_76 = arith.constant 3.200000e+01 : f32
    %121 = vector.broadcast %cst_76 : f32 to vector<8x1xf32>
    %122 = arith.divf %120, %121 : vector<8x1xf32>
    %123 = vector.broadcast %115 : vector<8x1xf32> to vector<8x32xf32>
    %124 = arith.subf %111, %123 : vector<8x32xf32>
    %cst_77 = arith.constant 9.99999974E-6 : f32
    %125 = vector.broadcast %cst_77 : f32 to vector<8x1xf32>
    %126 = arith.addf %122, %125 : vector<8x1xf32>
    %127 = math.rsqrt %126 : vector<8x1xf32>
    %128 = vector.broadcast %127 : vector<8x1xf32> to vector<8x32xf32>
    %129 = arith.mulf %124, %128 : vector<8x32xf32>
    %c0_78 = arith.constant 0 : index
    %c0_79 = arith.constant 0 : index
    %130 = vector.load %arg11[%c0_78, %c0_79] : memref<1x32xf32, #tpu.memory_space<vmem>>, vector<1x32xf32>
    %131 = vector.broadcast %130 : vector<1x32xf32> to vector<8x32xf32>
    %132 = arith.mulf %129, %131 : vector<8x32xf32>
    %c0_80 = arith.constant 0 : index
    %c0_81 = arith.constant 0 : index
    %133 = vector.load %arg12[%c0_80, %c0_81] : memref<1x32xf32, #tpu.memory_space<vmem>>, vector<1x32xf32>
    %134 = vector.broadcast %133 : vector<1x32xf32> to vector<8x32xf32>
    %135 = arith.addf %132, %134 : vector<8x32xf32>
    %136 = arith.truncf %135 : vector<8x32xf32> to vector<8x32xbf16>
    %c0_82 = arith.constant 0 : index
    %c0_83 = arith.constant 0 : index
    %c0_84 = arith.constant 0 : index
    %137 = vector.load %arg13[%c0_82, %c0_83, %c0_84] : memref<1x8x32xbf16, #tpu.memory_space<vmem>>, vector<1x8x32xbf16>
    %138 = vector.shape_cast %137 : vector<1x8x32xbf16> to vector<8x32xbf16>
    %139 = vector.shape_cast %136 : vector<8x32xbf16> to vector<1x8x32xbf16>
    tpu.vector_store %arg13[%c0_82, %c0_83, %c0_84], %139 {strides = array<i32>} : memref<1x8x32xbf16, #tpu.memory_space<vmem>>, vector<1x8x32xbf16>,
    return
  }
  func.func @transform_0(%arg0: i32, %arg1: i32) -> (i32, i32, i32) {
    %c0_i32 = arith.constant 0 : i32
    %c0_i32_0 = arith.constant 0 : i32
    return %arg0, %arg1, %c0_i32 : i32, i32, i32
  }
  func.func @transform_1(%arg0: i32, %arg1: i32) -> (i32, i32, i32) {
    %c0_i32 = arith.constant 0 : i32
    %c0_i32_0 = arith.constant 0 : i32
    return %arg0, %arg1, %c0_i32 : i32, i32, i32
  }
  func.func @transform_2(%arg0: i32, %arg1: i32) -> (i32, i32, i32) {
    %c0_i32 = arith.constant 0 : i32
    %c0_i32_0 = arith.constant 0 : i32
    %c0_i32_1 = arith.constant 0 : i32
    return %arg0, %c0_i32, %c0_i32_0 : i32, i32, i32
  }
  func.func @transform_3(%arg0: i32, %arg1: i32) -> (i32, i32) {
    %c0_i32 = arith.constant 0 : i32
    %c0_i32_0 = arith.constant 0 : i32
    %c0_i32_1 = arith.constant 0 : i32
    return %c0_i32, %c0_i32_0 : i32, i32
  }
  func.func @transform_4(%arg0: i32, %arg1: i32) -> (i32, i32) {
    %c0_i32 = arith.constant 0 : i32
    %c0_i32_0 = arith.constant 0 : i32
    %c0_i32_1 = arith.constant 0 : i32
    return %c0_i32, %c0_i32_0 : i32, i32
  }
  func.func @transform_5(%arg0: i32, %arg1: i32) -> (i32, i32) {
    %c0_i32 = arith.constant 0 : i32
    %c0_i32_0 = arith.constant 0 : i32
    %c0_i32_1 = arith.constant 0 : i32
    return %c0_i32, %c0_i32_0 : i32, i32
  }
  func.func @transform_6(%arg0: i32, %arg1: i32) -> (i32, i32) {
    %c0_i32 = arith.constant 0 : i32
    %c0_i32_0 = arith.constant 0 : i32
    %c0_i32_1 = arith.constant 0 : i32
    return %c0_i32, %c0_i32_0 : i32, i32
  }
  func.func @transform_7(%arg0: i32, %arg1: i32) -> (i32, i32) {
    %c0_i32 = arith.constant 0 : i32
    %c0_i32_0 = arith.constant 0 : i32
    %c0_i32_1 = arith.constant 0 : i32
    return %c0_i32, %c0_i32_0 : i32, i32
  }
  func.func @transform_8(%arg0: i32, %arg1: i32) -> (i32, i32) {
    %c0_i32 = arith.constant 0 : i32
    %c0_i32_0 = arith.constant 0 : i32
    %c0_i32_1 = arith.constant 0 : i32
    return %c0_i32, %c0_i32_0 : i32, i32
  }
  func.func @transform_9(%arg0: i32, %arg1: i32) -> (i32, i32) {
    %c0_i32 = arith.constant 0 : i32
    %c0_i32_0 = arith.constant 0 : i32
    %c0_i32_1 = arith.constant 0 : i32
    return %c0_i32, %c0_i32_0 : i32, i32
  }
  func.func @transform_10(%arg0: i32, %arg1: i32) -> (i32, i32) {
    %c0_i32 = arith.constant 0 : i32
    %c0_i32_0 = arith.constant 0 : i32
    %c0_i32_1 = arith.constant 0 : i32
    return %c0_i32, %c0_i32_0 : i32, i32
  }
  func.func @transform_11(%arg0: i32, %arg1: i32) -> (i32, i32, i32) {
    %c0_i32 = arith.constant 0 : i32
    %c0_i32_0 = arith.constant 0 : i32
    return %arg0, %arg1, %c0_i32 : i32, i32, i32
  }
}

</mosaic_0001>

<llo_original>
// kernel: tpu_custom_call.1
$region0: #{tpu_custom_call.1}
  #allocation0 [shape = 'u32[]', space=smem, size = 0x4, offset = 0x4, fixed_abs, tag = 'smem constant byte address 0x4 - core index']
  #allocation1 [shape = 'u32[144,128]{1,0:T(1,128)}', space=vmem, size = 0x12000, scoped, tag = 'internal scratch']
  %s0 = inlined_call_operand.hbm [shape: f32[8,128], index: 0, kind: input, shape index: {}]
  %s1 = inlined_call_operand.hbm [shape: f32[8,128], index: 1, kind: output, shape index: {}]
  %s2 = sld [smem:[#allocation0]]
  $region41: #{tpu_custom_call.1} parent=0
    _
  %s4 = ssub.s32 1, %s2
  %s5 = scalar_select 0, %s4, %s2
  $region1: #{tpu_custom_call.1} parent=0
    #allocation2 [shape = 'u8[4096]{0}', space=vmem, size = 0x1000, scoped, tag = 'input window, operand 0, single buffered']
    #allocation3 [shape = 's32[2]{0}', space=sflag, size = 0x8, scoped, tag = 'scoped memory for tpu_custom_call.1']
    #allocation4 [shape = 's32[2]{0}', space=sflag, size = 0x8, scoped, tag = 'scoped memory for tpu_custom_call.1']
    #allocation5 [shape = 'u8[4096]{0}', space=vmem, size = 0x1000, scoped, tag = 'output window, operand 0, single buffered']
    %6 = vsyncpa [#allocation3], 0
    %7 = vsyncpa [#allocation4], 0
    loop: start=0, step=1, limit=4
    $region2: #{tpu_custom_call.1} parent=1 // loop_pre_header
      _
    $region3: #{tpu_custom_call.1} parent=1 // loop_header
      %s9 = sphi 0, %s13
      %p10 = scmp.ge.s32.totalorder %s9, 4
      %s17 = sphi 0, %s17
      %s19 = sphi 0, %s17
      %s20 = sphi 0, %s19
      %s34 = sphi 0, %s20
      %s38 = sphi 0, %s38
      %s40 = sphi 0, %s38
      %s41 = sphi 0, %s40
      %s55 = sphi 0, %s41
    $region4: #{tpu_custom_call.1} parent=1 // loop_header_branch
      %12 = sbr.rel (%p10) target = $region8
    $region5: #{tpu_custom_call.1} parent=1 // loop_body
      %s14 = ssub.s32 %s9, 1
      %s15 = ssub.s32 %s9, 2
      %s16 = sadd.s32 %s9, 1
      %s18 = sadd.s32 %s17, 1
      %p21 = scmp.eq.s32.totalorder %s9, 1
      %p22 = scmp.ne.s32.totalorder %s17, %s19
      %p23 = scmp.eq.s32.totalorder %s9, 0
      %p24 = por %p22, %p23
      %p25 = scmp.ne.s32.totalorder %s17, %s19
      %p26 = scmp.eq.s32.totalorder %s14, 1
      %p27 = por %p25, %p26
      %p28 = scmp.ne.s32.totalorder %s19, %s20
      %p29 = scmp.eq.s32.totalorder %s14, 0
      %p30 = por %p28, %p29
      %p31 = scmp.ne.s32.totalorder %s19, %s20
      %p32 = scmp.eq.s32.totalorder %s15, 1
      %p33 = por %p31, %p32
      %p35 = scmp.ne.s32.totalorder %s20, %s34
      %p36 = scmp.eq.s32.totalorder %s15, 0
      %p37 = por %p35, %p36
      %s39 = sadd.s32 %s38, 1
      %p42 = scmp.eq.s32.totalorder %s9, 1
      %p43 = scmp.ne.s32.totalorder %s38, %s40
      %p44 = scmp.eq.s32.totalorder %s9, 0
      %p45 = por %p43, %p44
      %p46 = scmp.ne.s32.totalorder %s38, %s40
      %p47 = scmp.eq.s32.totalorder %s14, 1
      %p48 = por %p46, %p47
      %p49 = scmp.ne.s32.totalorder %s40, %s41
      %p50 = scmp.eq.s32.totalorder %s14, 0
      %p51 = por %p49, %p50
      %p52 = scmp.ne.s32.totalorder %s40, %s41
      %p53 = scmp.eq.s32.totalorder %s15, 1
      %p54 = por %p52, %p53
      %p56 = scmp.ne.s32.totalorder %s41, %s55
      %p57 = scmp.eq.s32.totalorder %s15, 0
      %p58 = por %p56, %p57
      %p59 = scmp.le.s32.totalorder 1, %s9
      %p60 = scmp.lt.s32.totalorder %s9, 3
      %p61 = pnand %p59, %p60
      %p62 = pneg %p61
      // Predicated region
      $region9: #{tpu_custom_call.1} parent=5 // pred_check
        _
      $region10: #{tpu_custom_call.1} parent=5 // pred_check_branch
        %64 = sbr.rel (%p61) target = $region12
      $region11: #{tpu_custom_call.1} parent=5 // pred_region
        %s65 = ssub.s32 %s9, 1
        // Predicated region
        $region13: #{tpu_custom_call.1} parent=11 // pred_check
          %p66 = pneg %p30
        $region14: #{tpu_custom_call.1} parent=11 // pred_check_branch
          %68 = sbr.rel (%p66) target = $region16
        $region15: #{tpu_custom_call.1} parent=11 // pred_region
          %s70 = ssub.s32 128, 128
          %71 = vsyncadd [#allocation3], %s70
          %s73 = sshll.u32 [#allocation2], 4
          %s74 = int_to_ptr.vmem [resolvable:$true] %s73
          %76 = dma.hbm_to_vmem [thread:$0]  %s0, 128, %s74, [#allocation3]
        $region16: #{tpu_custom_call.1} parent=11 // pred_fallthru
          _
      $region12: #{tpu_custom_call.1} parent=5 // pred_fallthru
        _
      %p77 = scmp.lt.s32.totalorder %s9, 2
      // Predicated region
      $region17: #{tpu_custom_call.1} parent=5 // pred_check
        %p78 = pneg %p77
      $region18: #{tpu_custom_call.1} parent=5 // pred_check_branch
        %80 = sbr.rel (%p78) target = $region20
      $region19: #{tpu_custom_call.1} parent=5 // pred_region
        _
      $region20: #{tpu_custom_call.1} parent=5 // pred_fallthru
        _
      %p81 = scmp.le.s32.totalorder 1, %s9
      %p82 = scmp.lt.s32.totalorder %s9, 3
      %p83 = pnand %p81, %p82
      %p84 = pneg %p83
      // Predicated region
      $region21: #{tpu_custom_call.1} parent=5 // pred_check
        _
      $region22: #{tpu_custom_call.1} parent=5 // pred_check_branch
        %86 = sbr.rel (%p83) target = $region24
      $region23: #{tpu_custom_call.1} parent=5 // pred_region
        %s87 = ssub.s32 %s9, 1
        // Predicated region
        $region25: #{tpu_custom_call.1} parent=23 // pred_check
          %p88 = pneg %p30
        $region26: #{tpu_custom_call.1} parent=23 // pred_check_branch
          %90 = sbr.rel (%p88) target = $region28
        $region27: #{tpu_custom_call.1} parent=23 // pred_region
          %91 = dma.done [#allocation3], 128
        $region28: #{tpu_custom_call.1} parent=23 // pred_fallthru
          _
        %p92 = pneg %p30
        %p93 = pneg %p27
        %p94 = pneg %p51
        %p95 = pneg %p48
        %v96 = vld [vmem:[#allocation2] sm:$0xff]
        %97 = vst [vmem:[#allocation5] sm:$0xff] %v96
        // Predicated region
        $region29: #{tpu_custom_call.1} parent=23 // pred_check
          %p98 = pneg %p48
        $region30: #{tpu_custom_call.1} parent=23 // pred_check_branch
          %100 = sbr.rel (%p98) target = $region32
        $region31: #{tpu_custom_call.1} parent=23 // pred_region
          %s102 = ssub.s32 128, 128
          %103 = vsyncadd [#allocation4], %s102
          %s105 = sshll.u32 [#allocation5], 4
          %s106 = int_to_ptr.vmem [resolvable:$true] %s105
          %108 = dma.vmem_to_hbm [thread:$0]  %s106, 128, %s1, [#allocation4]
        $region32: #{tpu_custom_call.1} parent=23 // pred_fallthru
          _
        // Predicated region
        $region33: #{tpu_custom_call.1} parent=23 // pred_check
          %p109 = pneg %p48
        $region34: #{tpu_custom_call.1} parent=23 // pred_check_branch
          %111 = sbr.rel (%p109) target = $region36
        $region35: #{tpu_custom_call.1} parent=23 // pred_region
          %112 = dma.done [#allocation4], 128
        $region36: #{tpu_custom_call.1} parent=23 // pred_fallthru
          _
      $region24: #{tpu_custom_call.1} parent=5 // pred_fallthru
        _
      %p113 = scmp.le.s32.totalorder 2, %s9
      // Predicated region
      $region37: #{tpu_custom_call.1} parent=5 // pred_check
        %p114 = pneg %p113
      $region38: #{tpu_custom_call.1} parent=5 // pred_check_branch
        %116 = sbr.rel (%p114) target = $region40
      $region39: #{tpu_custom_call.1} parent=5 // pred_region
        %s117 = ssub.s32 %s9, 2
      $region40: #{tpu_custom_call.1} parent=5 // pred_fallthru
        _
    $region6: #{tpu_custom_call.1} parent=1 // loop_footer
      %s13 = sadd.s32 1, %s9
    $region7: #{tpu_custom_call.1} parent=1 // loop_footer_branch
      %8 = sbr.rel target = $region3
    $region8: #{tpu_custom_call.1} parent=1 // loop_exit
      _
    %118 = vsyncpa [#allocation3], 1
    %s119 = scalar_lea.sflag [#allocation3], 1
    %120 = vsyncpa %s119, 1
    %121 = vsyncpa [#allocation4], 1
    %s122 = scalar_lea.sflag [#allocation4], 1
    %123 = vsyncpa %s122, 1

// kernel: decoder_layer_forward.5
$region0: #{decoder_layer_forward.5}
  #allocation0 [shape = 'u32[]', space=smem, size = 0x4, offset = 0x4, fixed_abs, tag = 'smem constant byte address 0x4 - core index']
  #allocation1 [shape = 'u32[144,128]{1,0:T(1,128)}', space=vmem, size = 0x12000, scoped, tag = 'internal scratch']
  %s0 = inlined_call_operand.vmem [shape: bf16[16,32], index: 0, kind: input, shape index: {}]
  %s1 = inlined_call_operand.vmem [shape: bf16[32,64], index: 1, kind: input, shape index: {}]
  %s2 = inlined_call_operand.vmem [shape: f32[1,64], index: 2, kind: input, shape index: {}]
  %s3 = inlined_call_operand.vmem [shape: bf16[64,32], index: 3, kind: input, shape index: {}]
  %s4 = inlined_call_operand.vmem [shape: f32[1,32], index: 4, kind: input, shape index: {}]
  %s5 = inlined_call_operand.vmem [shape: f32[1,32], index: 5, kind: input, shape index: {}]
  %s6 = inlined_call_operand.vmem [shape: f32[1,32], index: 6, kind: input, shape index: {}]
  %s7 = inlined_call_operand.hbm [shape: bf16[16,32], index: 7, kind: output, shape index: {}]
  %s8 = sld [smem:[#allocation0]]
  $region61: #{decoder_layer_forward.5} parent=0
    _
  %s10 = ssub.s32 1, %s8
  %s11 = scalar_select 0, %s10, %s8
  $region1: #{decoder_layer_forward.5} parent=0
    #allocation2 [shape = 'u8[4096]{0}', space=vmem, size = 0x1000, scoped, tag = 'output window, operand 0']
    #allocation3 [shape = 's32[2]{0}', space=sflag, size = 0x8, scoped, tag = 'scoped memory for decoder_layer_forward.5']
    %12 = vsyncpa [#allocation3], 0
    %s13 = scalar_lea.sflag [#allocation3], 1
    %14 = vsyncpa %s13, 0
    loop: start=0, step=1, limit=4
    $region2: #{decoder_layer_forward.5} parent=1 // loop_pre_header
      _
    $region3: #{decoder_layer_forward.5} parent=1 // loop_header
      %s16 = sphi 0, %s20
      %p17 = scmp.ge.s32.totalorder %s16, 4
      %s26 = sphi 0, %s28
      %s29 = sphi 0, %s26
      %s30 = sphi 0, %s29
      %s46 = sphi 0, %s30
      %s50 = sphi 0, %s50
      %s52 = sphi 0, %s50
      %s53 = sphi 0, %s52
      %s67 = sphi 0, %s53
      %s71 = sphi 0, %s71
      %s73 = sphi 0, %s71
      %s74 = sphi 0, %s73
      %s88 = sphi 0, %s74
      %s92 = sphi 0, %s92
      %s94 = sphi 0, %s92
      %s95 = sphi 0, %s94
      %s109 = sphi 0, %s95
      %s113 = sphi 0, %s113
      %s115 = sphi 0, %s113
      %s116 = sphi 0, %s115
      %s130 = sphi 0, %s116
      %s134 = sphi 0, %s134
      %s136 = sphi 0, %s134
      %s137 = sphi 0, %s136
      %s151 = sphi 0, %s137
      %s155 = sphi 0, %s155
      %s157 = sphi 0, %s155
      %s158 = sphi 0, %s157
      %s172 = sphi 0, %s158
      %s178 = sphi 0, %s180
      %s181 = sphi 0, %s178
      %s182 = sphi 0, %s181
      %s198 = sphi 0, %s182
    $region4: #{decoder_layer_forward.5} parent=1 // loop_header_branch
      %19 = sbr.rel (%p17) target = $region8
    $region5: #{decoder_layer_forward.5} parent=1 // loop_body
      %s21 = ssub.s32 %s16, 1
      %s22 = ssub.s32 %s16, 2
      %s23 = sadd.s32 %s16, 1
      %s24 = ssub.s32 %s16, %s23
      %p25 = scmp.eq.s32.totalorder %s24, 0
      %s27 = sadd.s32 %s26, 1
      %s28 = scalar_select %p25, %s26, %s27
      %p31 = pneg %p25
      %p32 = scmp.eq.s32.totalorder %s16, 1
      %p33 = por %p31, %p32
      %p34 = scmp.ne.s32.totalorder %s26, %s29
      %p35 = scmp.eq.s32.totalorder %s16, 0
      %p36 = por %p34, %p35
      %p37 = scmp.ne.s32.totalorder %s26, %s29
      %p38 = scmp.eq.s32.totalorder %s21, 1
      %p39 = por %p37, %p38
      %p40 = scmp.ne.s32.totalorder %s29, %s30
      %p41 = scmp.eq.s32.totalorder %s21, 0
      %p42 = por %p40, %p41
      %p43 = scmp.ne.s32.totalorder %s29, %s30
      %p44 = scmp.eq.s32.totalorder %s22, 1
      %p45 = por %p43, %p44
      %p47 = scmp.ne.s32.totalorder %s30, %s46
      %p48 = scmp.eq.s32.totalorder %s22, 0
      %p49 = por %p47, %p48
      %s51 = sadd.s32 %s50, 1
      %p54 = scmp.eq.s32.totalorder %s16, 1
      %p55 = scmp.ne.s32.totalorder %s50, %s52
      %p56 = scmp.eq.s32.totalorder %s16, 0
      %p57 = por %p55, %p56
      %p58 = scmp.ne.s32.totalorder %s50, %s52
      %p59 = scmp.eq.s32.totalorder %s21, 1
      %p60 = por %p58, %p59
      %p61 = scmp.ne.s32.totalorder %s52, %s53
      %p62 = scmp.eq.s32.totalorder %s21, 0
      %p63 = por %p61, %p62
      %p64 = scmp.ne.s32.totalorder %s52, %s53
      %p65 = scmp.eq.s32.totalorder %s22, 1
      %p66 = por %p64, %p65
      %p68 = scmp.ne.s32.totalorder %s53, %s67
      %p69 = scmp.eq.s32.totalorder %s22, 0
      %p70 = por %p68, %p69
      %s72 = sadd.s32 %s71, 1
      %p75 = scmp.eq.s32.totalorder %s16, 1
      %p76 = scmp.ne.s32.totalorder %s71, %s73
      %p77 = scmp.eq.s32.totalorder %s16, 0
      %p78 = por %p76, %p77
      %p79 = scmp.ne.s32.totalorder %s71, %s73
      %p80 = scmp.eq.s32.totalorder %s21, 1
      %p81 = por %p79, %p80
      %p82 = scmp.ne.s32.totalorder %s73, %s74
      %p83 = scmp.eq.s32.totalorder %s21, 0
      %p84 = por %p82, %p83
      %p85 = scmp.ne.s32.totalorder %s73, %s74
      %p86 = scmp.eq.s32.totalorder %s22, 1
      %p87 = por %p85, %p86
      %p89 = scmp.ne.s32.totalorder %s74, %s88
      %p90 = scmp.eq.s32.totalorder %s22, 0
      %p91 = por %p89, %p90
      %s93 = sadd.s32 %s92, 1
      %p96 = scmp.eq.s32.totalorder %s16, 1
      %p97 = scmp.ne.s32.totalorder %s92, %s94
      %p98 = scmp.eq.s32.totalorder %s16, 0
      %p99 = por %p97, %p98
      %p100 = scmp.ne.s32.totalorder %s92, %s94
      %p101 = scmp.eq.s32.totalorder %s21, 1
      %p102 = por %p100, %p101
      %p103 = scmp.ne.s32.totalorder %s94, %s95
      %p104 = scmp.eq.s32.totalorder %s21, 0
      %p105 = por %p103, %p104
      %p106 = scmp.ne.s32.totalorder %s94, %s95
      %p107 = scmp.eq.s32.totalorder %s22, 1
      %p108 = por %p106, %p107
      %p110 = scmp.ne.s32.totalorder %s95, %s109
      %p111 = scmp.eq.s32.totalorder %s22, 0
      %p112 = por %p110, %p111
      %s114 = sadd.s32 %s113, 1
      %p117 = scmp.eq.s32.totalorder %s16, 1
      %p118 = scmp.ne.s32.totalorder %s113, %s115
      %p119 = scmp.eq.s32.totalorder %s16, 0
      %p120 = por %p118, %p119
      %p121 = scmp.ne.s32.totalorder %s113, %s115
      %p122 = scmp.eq.s32.totalorder %s21, 1
      %p123 = por %p121, %p122
      %p124 = scmp.ne.s32.totalorder %s115, %s116
      %p125 = scmp.eq.s32.totalorder %s21, 0
      %p126 = por %p124, %p125
      %p127 = scmp.ne.s32.totalorder %s115, %s116
      %p128 = scmp.eq.s32.totalorder %s22, 1
      %p129 = por %p127, %p128
      %p131 = scmp.ne.s32.totalorder %s116, %s130
      %p132 = scmp.eq.s32.totalorder %s22, 0
      %p133 = por %p131, %p132
      %s135 = sadd.s32 %s134, 1
      %p138 = scmp.eq.s32.totalorder %s16, 1
      %p139 = scmp.ne.s32.totalorder %s134, %s136
      %p140 = scmp.eq.s32.totalorder %s16, 0
      %p141 = por %p139, %p140
      %p142 = scmp.ne.s32.totalorder %s134, %s136
      %p143 = scmp.eq.s32.totalorder %s21, 1
      %p144 = por %p142, %p143
      %p145 = scmp.ne.s32.totalorder %s136, %s137
      %p146 = scmp.eq.s32.totalorder %s21, 0
      %p147 = por %p145, %p146
      %p148 = scmp.ne.s32.totalorder %s136, %s137
      %p149 = scmp.eq.s32.totalorder %s22, 1
      %p150 = por %p148, %p149
      %p152 = scmp.ne.s32.totalorder %s137, %s151
      %p153 = scmp.eq.s32.totalorder %s22, 0
      %p154 = por %p152, %p153
      %s156 = sadd.s32 %s155, 1
      %p159 = scmp.eq.s32.totalorder %s16, 1
      %p160 = scmp.ne.s32.totalorder %s155, %s157
      %p161 = scmp.eq.s32.totalorder %s16, 0
      %p162 = por %p160, %p161
      %p163 = scmp.ne.s32.totalorder %s155, %s157
      %p164 = scmp.eq.s32.totalorder %s21, 1
      %p165 = por %p163, %p164
      %p166 = scmp.ne.s32.totalorder %s157, %s158
      %p167 = scmp.eq.s32.totalorder %s21, 0
      %p168 = por %p166, %p167
      %p169 = scmp.ne.s32.totalorder %s157, %s158
      %p170 = scmp.eq.s32.totalorder %s22, 1
      %p171 = por %p169, %p170
      %p173 = scmp.ne.s32.totalorder %s158, %s172
      %p174 = scmp.eq.s32.totalorder %s22, 0
      %p175 = por %p173, %p174
      %s176 = ssub.s32 %s16, %s23
      %p177 = scmp.eq.s32.totalorder %s176, 0
      %s179 = sadd.s32 %s178, 1
      %s180 = scalar_select %p177, %s178, %s179
      %p183 = pneg %p177
      %p184 = scmp.eq.s32.totalorder %s16, 1
      %p185 = por %p183, %p184
      %p186 = scmp.ne.s32.totalorder %s178, %s181
      %p187 = scmp.eq.s32.totalorder %s16, 0
      %p188 = por %p186, %p187
      %p189 = scmp.ne.s32.totalorder %s178, %s181
      %p190 = scmp.eq.s32.totalorder %s21, 1
      %p191 = por %p189, %p190
      %p192 = scmp.ne.s32.totalorder %s181, %s182
      %p193 = scmp.eq.s32.totalorder %s21, 0
      %p194 = por %p192, %p193
      %p195 = scmp.ne.s32.totalorder %s181, %s182
      %p196 = scmp.eq.s32.totalorder %s22, 1
      %p197 = por %p195, %p196
      %p199 = scmp.ne.s32.totalorder %s182, %s198
      %p200 = scmp.eq.s32.totalorder %s22, 0
      %p201 = por %p199, %p200
      %p202 = scmp.le.s32.totalorder 1, %s16
      %p203 = scmp.lt.s32.totalorder %s16, 3
      %p204 = pnand %p202, %p203
      %p205 = pneg %p204
      // Predicated region
      $region9: #{decoder_layer_forward.5} parent=5 // pred_check
        _
      $region10: #{decoder_layer_forward.5} parent=5 // pred_check_branch
        %207 = sbr.rel (%p204) target = $region12
      $region11: #{decoder_layer_forward.5} parent=5 // pred_region
        %s208 = ssub.s32 %s16, 1
        // Predicated region
        $region13: #{decoder_layer_forward.5} parent=11 // pred_check
          %p209 = pneg %p63
        $region14: #{decoder_layer_forward.5} parent=11 // pred_check_branch
          %211 = sbr.rel (%p209) target = $region16
        $region15: #{decoder_layer_forward.5} parent=11 // pred_region
          _
        $region16: #{decoder_layer_forward.5} parent=11 // pred_fallthru
          _
        // Predicated region
        $region17: #{decoder_layer_forward.5} parent=11 // pred_check
          %p212 = pneg %p84
        $region18: #{decoder_layer_forward.5} parent=11 // pred_check_branch
          %214 = sbr.rel (%p212) target = $region20
        $region19: #{decoder_layer_forward.5} parent=11 // pred_region
          _
        $region20: #{decoder_layer_forward.5} parent=11 // pred_fallthru
          _
        // Predicated region
        $region21: #{decoder_layer_forward.5} parent=11 // pred_check
          %p215 = pneg %p105
        $region22: #{decoder_layer_forward.5} parent=11 // pred_check_branch
          %217 = sbr.rel (%p215) target = $region24
        $region23: #{decoder_layer_forward.5} parent=11 // pred_region
          _
        $region24: #{decoder_layer_forward.5} parent=11 // pred_fallthru
          _
        // Predicated region
        $region25: #{decoder_layer_forward.5} parent=11 // pred_check
          %p218 = pneg %p126
        $region26: #{decoder_layer_forward.5} parent=11 // pred_check_branch
          %220 = sbr.rel (%p218) target = $region28
        $region27: #{decoder_layer_forward.5} parent=11 // pred_region
          _
        $region28: #{decoder_layer_forward.5} parent=11 // pred_fallthru
          _
        // Predicated region
        $region29: #{decoder_layer_forward.5} parent=11 // pred_check
          %p221 = pneg %p147
        $region30: #{decoder_layer_forward.5} parent=11 // pred_check_branch
          %223 = sbr.rel (%p221) target = $region32
        $region31: #{decoder_layer_forward.5} parent=11 // pred_region
          _
        $region32: #{decoder_layer_forward.5} parent=11 // pred_fallthru
          _
        // Predicated region
        $region33: #{decoder_layer_forward.5} parent=11 // pred_check
          %p224 = pneg %p168
        $region34: #{decoder_layer_forward.5} parent=11 // pred_check_branch
          %226 = sbr.rel (%p224) target = $region36
        $region35: #{decoder_layer_forward.5} parent=11 // pred_region
          _
        $region36: #{decoder_layer_forward.5} parent=11 // pred_fallthru
          _
      $region12: #{decoder_layer_forward.5} parent=5 // pred_fallthru
        _
      %p227 = scmp.lt.s32.totalorder %s16, 2
      // Predicated region
      $region37: #{decoder_layer_forward.5} parent=5 // pred_check
        %p228 = pneg %p227
      $region38: #{decoder_layer_forward.5} parent=5 // pred_check_branch
        %230 = sbr.rel (%p228) target = $region40
      $region39: #{decoder_layer_forward.5} parent=5 // pred_region
        // Predicated region
        $region41: #{decoder_layer_forward.5} parent=39 // pred_check
          %p231 = pneg %p36
        $region42: #{decoder_layer_forward.5} parent=39 // pred_check_branch
          %233 = sbr.rel (%p231) target = $region44
        $region43: #{decoder_layer_forward.5} parent=39 // pred_region
          %p234 = scmp.lt.s32.totalorder %s16, 1
          %s235 = scalar_select %p234, %s16, 1
          %s236 = smul.addr %s235, 4
          %s237 = scalar_lea.vmem %s0, %s236
        $region44: #{decoder_layer_forward.5} parent=39 // pred_fallthru
          _
      $region40: #{decoder_layer_forward.5} parent=5 // pred_fallthru
        _
      %p238 = scmp.le.s32.totalorder 1, %s16
      %p239 = scmp.lt.s32.totalorder %s16, 3
      %p240 = pnand %p238, %p239
      %p241 = pneg %p240
      // Predicated region
      $region45: #{decoder_layer_forward.5} parent=5 // pred_check
        _
      $region46: #{decoder_layer_forward.5} parent=5 // pred_check_branch
        %243 = sbr.rel (%p240) target = $region48
      $region47: #{decoder_layer_forward.5} parent=5 // pred_region
        %s244 = ssub.s32 %s16, 1
        %p245 = scmp.lt.s32.totalorder %s21, 1
        %s246 = scalar_select %p245, %s21, 1
        %s247 = smul.addr %s246, 4
        %s248 = scalar_lea.vmem %s0, %s247
        %p249 = pneg %p42
        %p250 = pneg %p39
        %p251 = pneg %p63
        %p252 = pneg %p60
        %p253 = pneg %p84
        %p254 = pneg %p81
        %p255 = pneg %p105
        %p256 = pneg %p102
        %p257 = pneg %p126
        %p258 = pneg %p123
        %p259 = pneg %p147
        %p260 = pneg %p144
        %p261 = pneg %p168
        %p262 = pneg %p165
        %p263 = pneg %p194
        %p264 = pneg %p191
        %s265 = sand.u32 %s181, 1
        %s266 = scalar_lea.sflag [#allocation3], %s265
        %s267 = sand.u32 %s181, 1
        %s268 = smul.addr %s267, 4
        %s269 = scalar_lea.vmem [#allocation2], %s268
        %p270 = scmp.lt.s32.totalorder %s21, 1
        %s271 = scalar_select %p270, %s21, 1
        %s272 = smul.addr %s271, 4
        %s273 = scalar_lea.vmem %s0, %s272
        %v275 = vld [vmem:[%s273] sm:$0xf]
        %v276 = vld [vmem:[%s1] sm:$0xf]
        %v277 = vld [vmem:[%s1 + $0x4] sm:$0xf]
        %v278 = vld [vmem:[%s1 + $0x8] sm:$0xf]
        %v279 = vld [vmem:[%s1 + $0xc] sm:$0xf]
        %v280 = vld [vmem:[%s2] sm:$0x1]
        %v282 = vlaneseq
        %v283 = vshrl.u32 %v282, 7
        %v284 = vsub.s32 0, %v283
        %v285 = vrot.slane %v280, %v284
        %v291 = vunpack.c.l.b16 %v276
        %v292 = vunpack.c.l.b16 %v277
        %v293 = vunpack.c.l.b16 %v278
        %v294 = vunpack.c.l.b16 %v279
        %v295 = vpack.c.b16 %v292, %v291
        %v296 = vpack.c.b16 %v294, %v293
        %vm299 = vcmask 261120
        %v301 = vsel %vm299, %v275, 0
        %303 = vmatprep.subr.bf16.mxu0 0
        %304 = vmatpush1.bf16.msra.mxu0 0
        %305 = vmatprep.subr.bf16.mxu0 0
        %306 = vmatpush1.bf16.msra.mxu0 0
        %307 = vmatprep.subr.bf16.mxu0 0
        %308 = vmatpush1.bf16.msra.mxu0 0
        %309 = vmatprep.subr.bf16.mxu0 0
        %310 = vmatpush1.bf16.msra.mxu0 0
        %311 = vmatprep.subr.bf16.mxu0 0
        %312 = vmatpush1.bf16.msra.mxu0 0
        %313 = vmatprep.subr.bf16.mxu0 0
        %314 = vmatpush1.bf16.msra.mxu0 0
        %315 = vmatprep.subr.bf16.mxu0 0
        %316 = vmatpush1.bf16.msra.mxu0 %v296
        %317 = vmatprep.subr.bf16.mxu0 0
        %318 = vmatpush1.bf16.msra.mxu0 %v295
        %319 = vmatprep.subr.bf16.mxu0 0
        %320 = vmatpush2.bf16.msra.mxu0 0
        %321 = vmatprep.subr.bf16.mxu0 0
        %322 = vmatpush2.bf16.msra.mxu0 0
        %323 = vmatprep.subr.bf16.mxu0 0
        %324 = vmatpush2.bf16.msra.mxu0 0
        %325 = vmatprep.subr.bf16.mxu0 0
        %326 = vmatpush2.bf16.msra.mxu0 0
        %327 = vmatprep.subr.bf16.mxu0 0
        %328 = vmatpush2.bf16.msra.mxu0 0
        %329 = vmatprep.subr.bf16.mxu0 0
        %330 = vmatpush2.bf16.msra.mxu0 0
        %331 = vmatprep.subr.bf16.mxu0 0
        %332 = vmatpush2.bf16.msra.mxu0 0
        %333 = vmatprep.subr.bf16.mxu0 0
        %334 = vmatpush2.bf16.msra.mxu0 0
        %335 = vmatprep.mubr.bf16.mxu0 0
        %336 = vmatmul.mubr.bf16.gmra.mxu0 %v301
        %v337 = vpop.f32.mrf.mxu0
        %v338 = vadd.f32 %v285, %v337
        %v339 = vpop.f32.mrf.mxu0
        %v340 = vpop.f32.mrf.mxu0
        %v341 = vpop.f32.mrf.mxu0
        %342 = vdwg.mxu0
        %v343 = vmax.f32 %v338, 0.0
        %v344 = vpack.c.bf16 %v343, %v343
        %v345 = vld [vmem:[%s3] sm:$0xf]
        %v346 = vld [vmem:[%s3 + $0x4] sm:$0xf]
        %v347 = vld [vmem:[%s3 + $0x8] sm:$0xf]
        %v348 = vld [vmem:[%s3 + $0xc] sm:$0xf]
        %v349 = vld [vmem:[%s3 + $0x10] sm:$0xf]
        %v350 = vld [vmem:[%s3 + $0x14] sm:$0xf]
        %v351 = vld [vmem:[%s3 + $0x18] sm:$0xf]
        %v352 = vld [vmem:[%s3 + $0x1c] sm:$0xf]
        %v353 = vld [vmem:[%s4] sm:$0x1]
        %v355 = vlaneseq
        %v356 = vshrl.u32 %v355, 7
        %v357 = vsub.s32 0, %v356
        %v358 = vrot.slane %v353, %v357
        %v368 = vunpack.c.l.b16 %v345
        %v369 = vunpack.c.l.b16 %v346
        %v370 = vunpack.c.l.b16 %v347
        %v371 = vunpack.c.l.b16 %v348
        %v372 = vunpack.c.l.b16 %v349
        %v373 = vunpack.c.l.b16 %v350
        %v374 = vunpack.c.l.b16 %v351
        %v375 = vunpack.c.l.b16 %v352
        %v376 = vpack.c.b16 %v369, %v368
        %v377 = vpack.c.b16 %v371, %v370
        %v378 = vpack.c.b16 %v373, %v372
        %v379 = vpack.c.b16 %v375, %v374
        %vm384 = vcmask 523264
        %v386 = vsel %vm384, %v344, 0
        %388 = vmatprep.subr.bf16.mxu0 0
        %389 = vmatpush1.bf16.msra.mxu0 0
        %390 = vmatprep.subr.bf16.mxu0 0
        %391 = vmatpush1.bf16.msra.mxu0 0
        %392 = vmatprep.subr.bf16.mxu0 0
        %393 = vmatpush1.bf16.msra.mxu0 0
        %394 = vmatprep.subr.bf16.mxu0 0
        %395 = vmatpush1.bf16.msra.mxu0 0
        %396 = vmatprep.subr.bf16.mxu0 0
        %397 = vmatpush1.bf16.msra.mxu0 %v379
        %398 = vmatprep.subr.bf16.mxu0 0
        %399 = vmatpush1.bf16.msra.mxu0 %v378
        %400 = vmatprep.subr.bf16.mxu0 0
        %401 = vmatpush1.bf16.msra.mxu0 %v377
        %402 = vmatprep.subr.bf16.mxu0 0
        %403 = vmatpush1.bf16.msra.mxu0 %v376
        %404 = vmatprep.subr.bf16.mxu0 0
        %405 = vmatpush2.bf16.msra.mxu0 0
        %406 = vmatprep.subr.bf16.mxu0 0
        %407 = vmatpush2.bf16.msra.mxu0 0
        %408 = vmatprep.subr.bf16.mxu0 0
        %409 = vmatpush2.bf16.msra.mxu0 0
        %410 = vmatprep.subr.bf16.mxu0 0
        %411 = vmatpush2.bf16.msra.mxu0 0
        %412 = vmatprep.subr.bf16.mxu0 0
        %413 = vmatpush2.bf16.msra.mxu0 0
        %414 = vmatprep.subr.bf16.mxu0 0
        %415 = vmatpush2.bf16.msra.mxu0 0
        %416 = vmatprep.subr.bf16.mxu0 0
        %417 = vmatpush2.bf16.msra.mxu0 0
        %418 = vmatprep.subr.bf16.mxu0 0
        %419 = vmatpush2.bf16.msra.mxu0 0
        %420 = vmatprep.mubr.bf16.mxu0 0
        %421 = vmatmul.mubr.bf16.gmra.mxu0 %v386
        %v422 = vpop.f32.mrf.mxu0
        %v423 = vadd.f32 %v358, %v422
        %v424 = vpop.f32.mrf.mxu0
        %v425 = vpop.f32.mrf.mxu0
        %v426 = vpop.f32.mrf.mxu0
        %427 = vdwg.mxu0
        %v428 = vunpack.c.l.bf16 %v275
        %v429 = vadd.f32 %v428, %v423
        %v430 = vsel %vm299, %v429, 0.0
        %431 = vadd.xlane.f32.xlu0 %v430
        %v432 = vpop.xlane.xlu0 %431
        %v433 = vrcp.pop 32.0
        %v434 = vmul.f32 %v432, %v433
        %v435 = vsub.f32 %v429, %v434
        %v436 = vmul.f32 %v435, %v435
        %v437 = vsel %vm299, %v436, 0.0
        %438 = vadd.xlane.f32.xlu0 %v437
        %v439 = vpop.xlane.xlu0 %438
        %v440 = vmul.f32 %v439, %v433
        %v441 = vadd.f32 %v440, 1e-05
        %v442 = vrsqrt.pop %v441
        %v443 = vmul.f32 %v435, %v442
        %v444 = vld [vmem:[%s5] sm:$0x1]
        %v446 = vlaneseq
        %v447 = vshrl.u32 %v446, 7
        %v448 = vsub.s32 0, %v447
        %v449 = vrot.slane %v444, %v448
        %v451 = vmul.f32 %v443, %v449
        %v452 = vld [vmem:[%s6] sm:$0x1]
        %v454 = vlaneseq
        %v455 = vshrl.u32 %v454, 7
        %v456 = vsub.s32 0, %v455
        %v457 = vrot.slane %v452, %v456
        %v459 = vadd.f32 %v451, %v457
        %v460 = vpack.c.bf16 %v459, %v459
        %vm461 = vcmask 257024
        %462 = vst.msk [vmem:[%s269] sm:$0xf] %vm461, %v460
        %s463 = sand.u32 %s181, 1
        %s464 = scalar_lea.sflag [#allocation3], %s463
        %s465 = sand.u32 %s181, 1
        %s466 = smul.addr %s465, 4
        %s467 = scalar_lea.vmem [#allocation2], %s466
        // Predicated region
        $region49: #{decoder_layer_forward.5} parent=47 // pred_check
          %p468 = pneg %p191
        $region50: #{decoder_layer_forward.5} parent=47 // pred_check_branch
          %470 = sbr.rel (%p468) target = $region52
        $region51: #{decoder_layer_forward.5} parent=47 // pred_region
          %s472 = ssub.s32 64, 64
          %473 = vsyncadd %s464, %s472
          %s474 = smul.addr %s21, 64
          %s475 = scalar_lea.hbm %s7, %s474
          %s477 = sshll.u32 %s467, 4
          %s478 = int_to_ptr.vmem [resolvable:$true] %s477
          %480 = dma.vmem_to_hbm [thread:$0]  %s478, 64, %s475, %s464
        $region52: #{decoder_layer_forward.5} parent=47 // pred_fallthru
          _
      $region48: #{decoder_layer_forward.5} parent=5 // pred_fallthru
        _
      %p481 = scmp.le.s32.totalorder 2, %s16
      // Predicated region
      $region53: #{decoder_layer_forward.5} parent=5 // pred_check
        %p482 = pneg %p481
      $region54: #{decoder_layer_forward.5} parent=5 // pred_check_branch
        %484 = sbr.rel (%p482) target = $region56
      $region55: #{decoder_layer_forward.5} parent=5 // pred_region
        %s485 = ssub.s32 %s16, 2
        // Predicated region
        $region57: #{decoder_layer_forward.5} parent=55 // pred_check
          %p486 = pneg %p197
        $region58: #{decoder_layer_forward.5} parent=55 // pred_check_branch
          %488 = sbr.rel (%p486) target = $region60
        $region59: #{decoder_layer_forward.5} parent=55 // pred_region
          %s489 = sand.u32 %s182, 1
          %s490 = scalar_lea.sflag [#allocation3], %s489
          %s491 = sand.u32 %s182, 1
          %s492 = smul.addr %s491, 4
          %s493 = scalar_lea.vmem [#allocation2], %s492
          %494 = dma.done %s490, 64
        $region60: #{decoder_layer_forward.5} parent=55 // pred_fallthru
          _
      $region56: #{decoder_layer_forward.5} parent=5 // pred_fallthru
        _
    $region6: #{decoder_layer_forward.5} parent=1 // loop_footer
      %s20 = sadd.s32 1, %s16
    $region7: #{decoder_layer_forward.5} parent=1 // loop_footer_branch
      %15 = sbr.rel target = $region3
    $region8: #{decoder_layer_forward.5} parent=1 // loop_exit
      _
    %495 = vsyncpa [#allocation3], 1
    %s496 = scalar_lea.sflag [#allocation3], 1
    %497 = vsyncpa %s496, 1

// kernel: decoder_layer_forward.3
$region0: #{decoder_layer_forward.3}
  #allocation0 [shape = 'u32[]', space=smem, size = 0x4, offset = 0x4, fixed_abs, tag = 'smem constant byte address 0x4 - core index']
  #allocation1 [shape = 'u32[144,128]{1,0:T(1,128)}', space=vmem, size = 0x12000, scoped, tag = 'internal scratch']
  #allocation2 [shape = 'bf16[8,32]{1,0:T(8,128)(2,1)}', space=vmem, size = 0x800, scoped, tag = 'scratch operand']
  #allocation3 [shape = 'bf16[8,64]{1,0:T(8,128)(2,1)}', space=vmem, size = 0x800, scoped, tag = 'scratch operand']
  #allocation4 [shape = 'bf16[8,32]{1,0:T(8,128)(2,1)}', space=vmem, size = 0x800, scoped, tag = 'scratch operand']
  %s0 = inlined_call_operand.vmem [shape: bf16[2,8,32], index: 0, kind: input, shape index: {}, may-alias: {0,1}]
  %s1 = inlined_call_operand.vmem [shape: bf16[2,8,32], index: 1, kind: input, shape index: {}, may-alias: {0,1}]
  %s2 = inlined_call_operand.vmem [shape: bf16[32,32], index: 2, kind: input, shape index: {}]
  %s3 = inlined_call_operand.vmem [shape: f32[1,32], index: 3, kind: input, shape index: {}]
  %s4 = inlined_call_operand.vmem [shape: bf16[32,64], index: 4, kind: input, shape index: {}]
  %s5 = inlined_call_operand.vmem [shape: f32[1,64], index: 5, kind: input, shape index: {}]
  %s6 = inlined_call_operand.vmem [shape: bf16[32,32], index: 6, kind: input, shape index: {}]
  %s7 = inlined_call_operand.vmem [shape: f32[1,32], index: 7, kind: input, shape index: {}]
  %s8 = inlined_call_operand.vmem [shape: f32[1,32], index: 8, kind: input, shape index: {}]
  %s9 = inlined_call_operand.vmem [shape: f32[1,32], index: 9, kind: input, shape index: {}]
  %s10 = inlined_call_operand.vmem [shape: bf16[2,8,32], index: 10, kind: output, shape index: {}]
  %s11 = sld [smem:[#allocation0]]
  $region73: #{decoder_layer_forward.3} parent=0
    _
  %s13 = ssub.s32 1, %s11
  %s14 = scalar_select 0, %s13, %s11
  loop: start=0, step=1, limit=4
  $region2: #{decoder_layer_forward.3} parent=0 // loop_pre_header
    _
  $region3: #{decoder_layer_forward.3} parent=0 // loop_header
    %s16 = sphi 0, %s20
    %p17 = scmp.ge.s32.totalorder %s16, 4
    %s23 = sphi 0, %s35
    %s24 = sphi 0, %s31
    %s25 = sphi 0, %s23
    %s26 = sphi 0, %s24
    %s27 = sphi 0, %s25
    %s28 = sphi 0, %s26
    %s40 = sphi 0, %s42
    %s43 = sphi 0, %s40
    %s44 = sphi 0, %s43
    %s60 = sphi 0, %s44
    %s66 = sphi 0, %s68
    %s69 = sphi 0, %s66
    %s70 = sphi 0, %s69
    %s86 = sphi 0, %s70
    %s90 = sphi 0, %s90
    %s92 = sphi 0, %s90
    %s93 = sphi 0, %s92
    %s107 = sphi 0, %s93
    %s111 = sphi 0, %s111
    %s113 = sphi 0, %s111
    %s114 = sphi 0, %s113
    %s128 = sphi 0, %s114
    %s132 = sphi 0, %s132
    %s134 = sphi 0, %s132
    %s135 = sphi 0, %s134
    %s149 = sphi 0, %s135
    %s153 = sphi 0, %s153
    %s155 = sphi 0, %s153
    %s156 = sphi 0, %s155
    %s170 = sphi 0, %s156
    %s174 = sphi 0, %s174
    %s176 = sphi 0, %s174
    %s177 = sphi 0, %s176
    %s191 = sphi 0, %s177
    %s195 = sphi 0, %s195
    %s197 = sphi 0, %s195
    %s198 = sphi 0, %s197
    %s212 = sphi 0, %s198
    %s216 = sphi 0, %s216
    %s218 = sphi 0, %s216
    %s219 = sphi 0, %s218
    %s233 = sphi 0, %s219
    %s237 = sphi 0, %s237
    %s239 = sphi 0, %s237
    %s240 = sphi 0, %s239
    %s254 = sphi 0, %s240
    %s262 = sphi 0, %s264
    %s265 = sphi 0, %s262
    %s266 = sphi 0, %s265
    %s282 = sphi 0, %s266
  $region4: #{decoder_layer_forward.3} parent=0 // loop_header_branch
    %19 = sbr.rel (%p17) target = $region8
  $region5: #{decoder_layer_forward.3} parent=0 // loop_body
    %s21 = ssub.s32 %s16, 1
    %s22 = ssub.s32 %s16, 2
    %s29 = sadd.s32 1, %s24
    %p30 = scmp.ge.s32.totalorder %s29, 1
    %s31 = scalar_select %p30, 0, %s29
    %s32 = sadd.s32 1, %s23
    %s33 = scalar_select %p30, %s32, %s23
    %p34 = scmp.ge.s32.totalorder %s33, 2
    %s35 = scalar_select %p34, 0, %s33
    %s36 = ssub.s32 %s23, %s35
    %s37 = ssub.s32 %s24, %s31
    %s38 = sor.u32 %s36, %s37
    %p39 = scmp.eq.s32.totalorder %s38, 0
    %s41 = sadd.s32 %s40, 1
    %s42 = scalar_select %p39, %s40, %s41
    %p45 = pneg %p39
    %p46 = scmp.eq.s32.totalorder %s16, 1
    %p47 = por %p45, %p46
    %p48 = scmp.ne.s32.totalorder %s40, %s43
    %p49 = scmp.eq.s32.totalorder %s16, 0
    %p50 = por %p48, %p49
    %p51 = scmp.ne.s32.totalorder %s40, %s43
    %p52 = scmp.eq.s32.totalorder %s21, 1
    %p53 = por %p51, %p52
    %p54 = scmp.ne.s32.totalorder %s43, %s44
    %p55 = scmp.eq.s32.totalorder %s21, 0
    %p56 = por %p54, %p55
    %p57 = scmp.ne.s32.totalorder %s43, %s44
    %p58 = scmp.eq.s32.totalorder %s22, 1
    %p59 = por %p57, %p58
    %p61 = scmp.ne.s32.totalorder %s44, %s60
    %p62 = scmp.eq.s32.totalorder %s22, 0
    %p63 = por %p61, %p62
    %s64 = ssub.s32 %s23, %s35
    %p65 = scmp.eq.s32.totalorder %s64, 0
    %s67 = sadd.s32 %s66, 1
    %s68 = scalar_select %p65, %s66, %s67
    %p71 = pneg %p65
    %p72 = scmp.eq.s32.totalorder %s16, 1
    %p73 = por %p71, %p72
    %p74 = scmp.ne.s32.totalorder %s66, %s69
    %p75 = scmp.eq.s32.totalorder %s16, 0
    %p76 = por %p74, %p75
    %p77 = scmp.ne.s32.totalorder %s66, %s69
    %p78 = scmp.eq.s32.totalorder %s21, 1
    %p79 = por %p77, %p78
    %p80 = scmp.ne.s32.totalorder %s69, %s70
    %p81 = scmp.eq.s32.totalorder %s21, 0
    %p82 = por %p80, %p81
    %p83 = scmp.ne.s32.totalorder %s69, %s70
    %p84 = scmp.eq.s32.totalorder %s22, 1
    %p85 = por %p83, %p84
    %p87 = scmp.ne.s32.totalorder %s70, %s86
    %p88 = scmp.eq.s32.totalorder %s22, 0
    %p89 = por %p87, %p88
    %s91 = sadd.s32 %s90, 1
    %p94 = scmp.eq.s32.totalorder %s16, 1
    %p95 = scmp.ne.s32.totalorder %s90, %s92
    %p96 = scmp.eq.s32.totalorder %s16, 0
    %p97 = por %p95, %p96
    %p98 = scmp.ne.s32.totalorder %s90, %s92
    %p99 = scmp.eq.s32.totalorder %s21, 1
    %p100 = por %p98, %p99
    %p101 = scmp.ne.s32.totalorder %s92, %s93
    %p102 = scmp.eq.s32.totalorder %s21, 0
    %p103 = por %p101, %p102
    %p104 = scmp.ne.s32.totalorder %s92, %s93
    %p105 = scmp.eq.s32.totalorder %s22, 1
    %p106 = por %p104, %p105
    %p108 = scmp.ne.s32.totalorder %s93, %s107
    %p109 = scmp.eq.s32.totalorder %s22, 0
    %p110 = por %p108, %p109
    %s112 = sadd.s32 %s111, 1
    %p115 = scmp.eq.s32.totalorder %s16, 1
    %p116 = scmp.ne.s32.totalorder %s111, %s113
    %p117 = scmp.eq.s32.totalorder %s16, 0
    %p118 = por %p116, %p117
    %p119 = scmp.ne.s32.totalorder %s111, %s113
    %p120 = scmp.eq.s32.totalorder %s21, 1
    %p121 = por %p119, %p120
    %p122 = scmp.ne.s32.totalorder %s113, %s114
    %p123 = scmp.eq.s32.totalorder %s21, 0
    %p124 = por %p122, %p123
    %p125 = scmp.ne.s32.totalorder %s113, %s114
    %p126 = scmp.eq.s32.totalorder %s22, 1
    %p127 = por %p125, %p126
    %p129 = scmp.ne.s32.totalorder %s114, %s128
    %p130 = scmp.eq.s32.totalorder %s22, 0
    %p131 = por %p129, %p130
    %s133 = sadd.s32 %s132, 1
    %p136 = scmp.eq.s32.totalorder %s16, 1
    %p137 = scmp.ne.s32.totalorder %s132, %s134
    %p138 = scmp.eq.s32.totalorder %s16, 0
    %p139 = por %p137, %p138
    %p140 = scmp.ne.s32.totalorder %s132, %s134
    %p141 = scmp.eq.s32.totalorder %s21, 1
    %p142 = por %p140, %p141
    %p143 = scmp.ne.s32.totalorder %s134, %s135
    %p144 = scmp.eq.s32.totalorder %s21, 0
    %p145 = por %p143, %p144
    %p146 = scmp.ne.s32.totalorder %s134, %s135
    %p147 = scmp.eq.s32.totalorder %s22, 1
    %p148 = por %p146, %p147
    %p150 = scmp.ne.s32.totalorder %s135, %s149
    %p151 = scmp.eq.s32.totalorder %s22, 0
    %p152 = por %p150, %p151
    %s154 = sadd.s32 %s153, 1
    %p157 = scmp.eq.s32.totalorder %s16, 1
    %p158 = scmp.ne.s32.totalorder %s153, %s155
    %p159 = scmp.eq.s32.totalorder %s16, 0
    %p160 = por %p158, %p159
    %p161 = scmp.ne.s32.totalorder %s153, %s155
    %p162 = scmp.eq.s32.totalorder %s21, 1
    %p163 = por %p161, %p162
    %p164 = scmp.ne.s32.totalorder %s155, %s156
    %p165 = scmp.eq.s32.totalorder %s21, 0
    %p166 = por %p164, %p165
    %p167 = scmp.ne.s32.totalorder %s155, %s156
    %p168 = scmp.eq.s32.totalorder %s22, 1
    %p169 = por %p167, %p168
    %p171 = scmp.ne.s32.totalorder %s156, %s170
    %p172 = scmp.eq.s32.totalorder %s22, 0
    %p173 = por %p171, %p172
    %s175 = sadd.s32 %s174, 1
    %p178 = scmp.eq.s32.totalorder %s16, 1
    %p179 = scmp.ne.s32.totalorder %s174, %s176
    %p180 = scmp.eq.s32.totalorder %s16, 0
    %p181 = por %p179, %p180
    %p182 = scmp.ne.s32.totalorder %s174, %s176
    %p183 = scmp.eq.s32.totalorder %s21, 1
    %p184 = por %p182, %p183
    %p185 = scmp.ne.s32.totalorder %s176, %s177
    %p186 = scmp.eq.s32.totalorder %s21, 0
    %p187 = por %p185, %p186
    %p188 = scmp.ne.s32.totalorder %s176, %s177
    %p189 = scmp.eq.s32.totalorder %s22, 1
    %p190 = por %p188, %p189
    %p192 = scmp.ne.s32.totalorder %s177, %s191
    %p193 = scmp.eq.s32.totalorder %s22, 0
    %p194 = por %p192, %p193
    %s196 = sadd.s32 %s195, 1
    %p199 = scmp.eq.s32.totalorder %s16, 1
    %p200 = scmp.ne.s32.totalorder %s195, %s197
    %p201 = scmp.eq.s32.totalorder %s16, 0
    %p202 = por %p200, %p201
    %p203 = scmp.ne.s32.totalorder %s195, %s197
    %p204 = scmp.eq.s32.totalorder %s21, 1
    %p205 = por %p203, %p204
    %p206 = scmp.ne.s32.totalorder %s197, %s198
    %p207 = scmp.eq.s32.totalorder %s21, 0
    %p208 = por %p206, %p207
    %p209 = scmp.ne.s32.totalorder %s197, %s198
    %p210 = scmp.eq.s32.totalorder %s22, 1
    %p211 = por %p209, %p210
    %p213 = scmp.ne.s32.totalorder %s198, %s212
    %p214 = scmp.eq.s32.totalorder %s22, 0
    %p215 = por %p213, %p214
    %s217 = sadd.s32 %s216, 1
    %p220 = scmp.eq.s32.totalorder %s16, 1
    %p221 = scmp.ne.s32.totalorder %s216, %s218
    %p222 = scmp.eq.s32.totalorder %s16, 0
    %p223 = por %p221, %p222
    %p224 = scmp.ne.s32.totalorder %s216, %s218
    %p225 = scmp.eq.s32.totalorder %s21, 1
    %p226 = por %p224, %p225
    %p227 = scmp.ne.s32.totalorder %s218, %s219
    %p228 = scmp.eq.s32.totalorder %s21, 0
    %p229 = por %p227, %p228
    %p230 = scmp.ne.s32.totalorder %s218, %s219
    %p231 = scmp.eq.s32.totalorder %s22, 1
    %p232 = por %p230, %p231
    %p234 = scmp.ne.s32.totalorder %s219, %s233
    %p235 = scmp.eq.s32.totalorder %s22, 0
    %p236 = por %p234, %p235
    %s238 = sadd.s32 %s237, 1
    %p241 = scmp.eq.s32.totalorder %s16, 1
    %p242 = scmp.ne.s32.totalorder %s237, %s239
    %p243 = scmp.eq.s32.totalorder %s16, 0
    %p244 = por %p242, %p243
    %p245 = scmp.ne.s32.totalorder %s237, %s239
    %p246 = scmp.eq.s32.totalorder %s21, 1
    %p247 = por %p245, %p246
    %p248 = scmp.ne.s32.totalorder %s239, %s240
    %p249 = scmp.eq.s32.totalorder %s21, 0
    %p250 = por %p248, %p249
    %p251 = scmp.ne.s32.totalorder %s239, %s240
    %p252 = scmp.eq.s32.totalorder %s22, 1
    %p253 = por %p251, %p252
    %p255 = scmp.ne.s32.totalorder %s240, %s254
    %p256 = scmp.eq.s32.totalorder %s22, 0
    %p257 = por %p255, %p256
    %s258 = ssub.s32 %s23, %s35
    %s259 = ssub.s32 %s24, %s31
    %s260 = sor.u32 %s258, %s259
    %p261 = scmp.eq.s32.totalorder %s260, 0
    %s263 = sadd.s32 %s262, 1
    %s264 = scalar_select %p261, %s262, %s263
    %p267 = pneg %p261
    %p268 = scmp.eq.s32.totalorder %s16, 1
    %p269 = por %p267, %p268
    %p270 = scmp.ne.s32.totalorder %s262, %s265
    %p271 = scmp.eq.s32.totalorder %s16, 0
    %p272 = por %p270, %p271
    %p273 = scmp.ne.s32.totalorder %s262, %s265
    %p274 = scmp.eq.s32.totalorder %s21, 1
    %p275 = por %p273, %p274
    %p276 = scmp.ne.s32.totalorder %s265, %s266
    %p277 = scmp.eq.s32.totalorder %s21, 0
    %p278 = por %p276, %p277
    %p279 = scmp.ne.s32.totalorder %s265, %s266
    %p280 = scmp.eq.s32.totalorder %s22, 1
    %p281 = por %p279, %p280
    %p283 = scmp.ne.s32.totalorder %s266, %s282
    %p284 = scmp.eq.s32.totalorder %s22, 0
    %p285 = por %p283, %p284
    %p286 = scmp.le.s32.totalorder 1, %s16
    %p287 = scmp.lt.s32.totalorder %s16, 3
    %p288 = pnand %p286, %p287
    %p289 = pneg %p288
    // Predicated region
    $region9: #{decoder_layer_forward.3} parent=5 // pred_check
      _
    $region10: #{decoder_layer_forward.3} parent=5 // pred_check_branch
      %291 = sbr.rel (%p288) target = $region12
    $region11: #{decoder_layer_forward.3} parent=5 // pred_region
      %s292 = ssub.s32 %s16, 1
      // Predicated region
      $region13: #{decoder_layer_forward.3} parent=11 // pred_check
        %p293 = pneg %p103
      $region14: #{decoder_layer_forward.3} parent=11 // pred_check_branch
        %295 = sbr.rel (%p293) target = $region16
      $region15: #{decoder_layer_forward.3} parent=11 // pred_region
        _
      $region16: #{decoder_layer_forward.3} parent=11 // pred_fallthru
        _
      // Predicated region
      $region17: #{decoder_layer_forward.3} parent=11 // pred_check
        %p296 = pneg %p124
      $region18: #{decoder_layer_forward.3} parent=11 // pred_check_branch
        %298 = sbr.rel (%p296) target = $region20
      $region19: #{decoder_layer_forward.3} parent=11 // pred_region
        _
      $region20: #{decoder_layer_forward.3} parent=11 // pred_fallthru
        _
      // Predicated region
      $region21: #{decoder_layer_forward.3} parent=11 // pred_check
        %p299 = pneg %p145
      $region22: #{decoder_layer_forward.3} parent=11 // pred_check_branch
        %301 = sbr.rel (%p299) target = $region24
      $region23: #{decoder_layer_forward.3} parent=11 // pred_region
        _
      $region24: #{decoder_layer_forward.3} parent=11 // pred_fallthru
        _
      // Predicated region
      $region25: #{decoder_layer_forward.3} parent=11 // pred_check
        %p302 = pneg %p166
      $region26: #{decoder_layer_forward.3} parent=11 // pred_check_branch
        %304 = sbr.rel (%p302) target = $region28
      $region27: #{decoder_layer_forward.3} parent=11 // pred_region
        _
      $region28: #{decoder_layer_forward.3} parent=11 // pred_fallthru
        _
      // Predicated region
      $region29: #{decoder_layer_forward.3} parent=11 // pred_check
        %p305 = pneg %p187
      $region30: #{decoder_layer_forward.3} parent=11 // pred_check_branch
        %307 = sbr.rel (%p305) target = $region32
      $region31: #{decoder_layer_forward.3} parent=11 // pred_region
        _
      $region32: #{decoder_layer_forward.3} parent=11 // pred_fallthru
        _
      // Predicated region
      $region33: #{decoder_layer_forward.3} parent=11 // pred_check
        %p308 = pneg %p208
      $region34: #{decoder_layer_forward.3} parent=11 // pred_check_branch
        %310 = sbr.rel (%p308) target = $region36
      $region35: #{decoder_layer_forward.3} parent=11 // pred_region
        _
      $region36: #{decoder_layer_forward.3} parent=11 // pred_fallthru
        _
      // Predicated region
      $region37: #{decoder_layer_forward.3} parent=11 // pred_check
        %p311 = pneg %p229
      $region38: #{decoder_layer_forward.3} parent=11 // pred_check_branch
        %313 = sbr.rel (%p311) target = $region40
      $region39: #{decoder_layer_forward.3} parent=11 // pred_region
        _
      $region40: #{decoder_layer_forward.3} parent=11 // pred_fallthru
        _
      // Predicated region
      $region41: #{decoder_layer_forward.3} parent=11 // pred_check
        %p314 = pneg %p250
      $region42: #{decoder_layer_forward.3} parent=11 // pred_check_branch
        %316 = sbr.rel (%p314) target = $region44
      $region43: #{decoder_layer_forward.3} parent=11 // pred_region
        _
      $region44: #{decoder_layer_forward.3} parent=11 // pred_fallthru
        _
    $region12: #{decoder_layer_forward.3} parent=5 // pred_fallthru
      _
    %p317 = scmp.lt.s32.totalorder %s16, 2
    // Predicated region
    $region45: #{decoder_layer_forward.3} parent=5 // pred_check
      %p318 = pneg %p317
    $region46: #{decoder_layer_forward.3} parent=5 // pred_check_branch
      %320 = sbr.rel (%p318) target = $region48
    $region47: #{decoder_layer_forward.3} parent=5 // pred_region
      // Predicated region
      $region49: #{decoder_layer_forward.3} parent=47 // pred_check
        %p321 = pneg %p50
      $region50: #{decoder_layer_forward.3} parent=47 // pred_check_branch
        %323 = sbr.rel (%p321) target = $region52
      $region51: #{decoder_layer_forward.3} parent=47 // pred_region
        %p324 = scmp.lt.s32.totalorder %s23, 1
        %s325 = scalar_select %p324, %s23, 1
        %p326 = scmp.lt.s32.totalorder %s24, 0
        %s327 = scalar_select %p326, %s24, 0
        %s328 = sadd.s32 %s327, %s325
        %s329 = smul.addr %s328, 4
        %s330 = scalar_lea.vmem %s0, %s329
      $region52: #{decoder_layer_forward.3} parent=47 // pred_fallthru
        _
      // Predicated region
      $region53: #{decoder_layer_forward.3} parent=47 // pred_check
        %p331 = pneg %p76
      $region54: #{decoder_layer_forward.3} parent=47 // pred_check_branch
        %333 = sbr.rel (%p331) target = $region56
      $region55: #{decoder_layer_forward.3} parent=47 // pred_region
        %p334 = scmp.lt.s32.totalorder %s23, 1
        %s335 = scalar_select %p334, %s23, 1
        %s336 = smul.addr %s335, 4
        %s337 = scalar_lea.vmem %s1, %s336
      $region56: #{decoder_layer_forward.3} parent=47 // pred_fallthru
        _
    $region48: #{decoder_layer_forward.3} parent=5 // pred_fallthru
      _
    %p338 = scmp.le.s32.totalorder 1, %s16
    %p339 = scmp.lt.s32.totalorder %s16, 3
    %p340 = pnand %p338, %p339
    %p341 = pneg %p340
    // Predicated region
    $region57: #{decoder_layer_forward.3} parent=5 // pred_check
      _
    $region58: #{decoder_layer_forward.3} parent=5 // pred_check_branch
      %343 = sbr.rel (%p340) target = $region60
    $region59: #{decoder_layer_forward.3} parent=5 // pred_region
      %s344 = ssub.s32 %s16, 1
      %p345 = scmp.lt.s32.totalorder %s25, 1
      %s346 = scalar_select %p345, %s25, 1
      %p347 = scmp.lt.s32.totalorder %s26, 0
      %s348 = scalar_select %p347, %s26, 0
      %s349 = sadd.s32 %s348, %s346
      %s350 = smul.addr %s349, 4
      %s351 = scalar_lea.vmem %s0, %s350
      %p352 = pneg %p56
      %p353 = pneg %p53
      %p354 = scmp.lt.s32.totalorder %s25, 1
      %s355 = scalar_select %p354, %s25, 1
      %s356 = smul.addr %s355, 4
      %s357 = scalar_lea.vmem %s1, %s356
      %p358 = pneg %p82
      %p359 = pneg %p79
      %p360 = pneg %p103
      %p361 = pneg %p100
      %p362 = pneg %p124
      %p363 = pneg %p121
      %p364 = pneg %p145
      %p365 = pneg %p142
      %p366 = pneg %p166
      %p367 = pneg %p163
      %p368 = pneg %p187
      %p369 = pneg %p184
      %p370 = pneg %p208
      %p371 = pneg %p205
      %p372 = pneg %p229
      %p373 = pneg %p226
      %p374 = pneg %p250
      %p375 = pneg %p247
      %p376 = pneg %p278
      %p377 = pneg %p275
      %p378 = scmp.lt.s32.totalorder %s25, 1
      %s379 = scalar_select %p378, %s25, 1
      %p380 = scmp.lt.s32.totalorder %s26, 0
      %s381 = scalar_select %p380, %s26, 0
      %s382 = sadd.s32 %s381, %s379
      %s383 = smul.addr %s382, 4
      %s384 = scalar_lea.vmem %s10, %s383
      %p385 = scmp.lt.s32.totalorder %s25, 1
      %s386 = scalar_select %p385, %s25, 1
      %p387 = scmp.lt.s32.totalorder %s26, 0
      %s388 = scalar_select %p387, %s26, 0
      %s389 = sadd.s32 %s388, %s386
      %s390 = smul.addr %s389, 4
      %s391 = scalar_lea.vmem %s0, %s390
      %p392 = scmp.lt.s32.totalorder %s25, 1
      %s393 = scalar_select %p392, %s25, 1
      %s394 = smul.addr %s393, 4
      %s395 = scalar_lea.vmem %s1, %s394
      %p396 = scmp.lt.s32.totalorder %s25, 1
      %s397 = scalar_select %p396, %s25, 1
      %p398 = scmp.lt.s32.totalorder %s26, 0
      %s399 = scalar_select %p398, %s26, 0
      %s400 = sadd.s32 %s399, %s397
      %s401 = smul.addr %s400, 4
      %s402 = scalar_lea.vmem %s10, %s401
      %v404 = vld [vmem:[%s391] sm:$0xf]
      %v405 = vld [vmem:[%s395] sm:$0xf]
      %v406 = vld [vmem:[%s2] sm:$0xf]
      %v407 = vld [vmem:[%s2 + $0x4] sm:$0xf]
      %v408 = vld [vmem:[%s2 + $0x8] sm:$0xf]
      %v409 = vld [vmem:[%s2 + $0xc] sm:$0xf]
      %v410 = vld [vmem:[%s3] sm:$0x1]
      %v412 = vlaneseq
      %v413 = vshrl.u32 %v412, 7
      %v414 = vsub.s32 0, %v413
      %v415 = vrot.slane %v410, %v414
      %v421 = vunpack.c.l.b16 %v406
      %v422 = vunpack.c.l.b16 %v407
      %v423 = vunpack.c.l.b16 %v408
      %v424 = vunpack.c.l.b16 %v409
      %v425 = vpack.c.b16 %v422, %v421
      %v426 = vpack.c.b16 %v424, %v423
      %vm429 = vcmask 261120
      %v431 = vsel %vm429, %v404, 0
      %433 = vmatprep.subr.bf16.mxu0 0
      %434 = vmatpush1.bf16.msra.mxu0 0
      %435 = vmatprep.subr.bf16.mxu0 0
      %436 = vmatpush1.bf16.msra.mxu0 0
      %437 = vmatprep.subr.bf16.mxu0 0
      %438 = vmatpush1.bf16.msra.mxu0 0
      %439 = vmatprep.subr.bf16.mxu0 0
      %440 = vmatpush1.bf16.msra.mxu0 0
      %441 = vmatprep.subr.bf16.mxu0 0
      %442 = vmatpush1.bf16.msra.mxu0 0
      %443 = vmatprep.subr.bf16.mxu0 0
      %444 = vmatpush1.bf16.msra.mxu0 0
      %445 = vmatprep.subr.bf16.mxu0 0
      %446 = vmatpush1.bf16.msra.mxu0 %v426
      %447 = vmatprep.subr.bf16.mxu0 0
      %448 = vmatpush1.bf16.msra.mxu0 %v425
      %449 = vmatprep.subr.bf16.mxu0 0
      %450 = vmatpush2.bf16.msra.mxu0 0
      %451 = vmatprep.subr.bf16.mxu0 0
      %452 = vmatpush2.bf16.msra.mxu0 0
      %453 = vmatprep.subr.bf16.mxu0 0
      %454 = vmatpush2.bf16.msra.mxu0 0
      %455 = vmatprep.subr.bf16.mxu0 0
      %456 = vmatpush2.bf16.msra.mxu0 0
      %457 = vmatprep.subr.bf16.mxu0 0
      %458 = vmatpush2.bf16.msra.mxu0 0
      %459 = vmatprep.subr.bf16.mxu0 0
      %460 = vmatpush2.bf16.msra.mxu0 0
      %461 = vmatprep.subr.bf16.mxu0 0
      %462 = vmatpush2.bf16.msra.mxu0 0
      %463 = vmatprep.subr.bf16.mxu0 0
      %464 = vmatpush2.bf16.msra.mxu0 0
      %465 = vmatprep.mubr.bf16.mxu0 0
      %466 = vmatmul.mubr.bf16.gmra.mxu0 %v431
      %v467 = vpop.f32.mrf.mxu0
      %v468 = vadd.f32 %v415, %v467
      %v469 = vpop.f32.mrf.mxu0
      %v470 = vpop.f32.mrf.mxu0
      %v471 = vpop.f32.mrf.mxu0
      %472 = vdwg.mxu0
      %v473 = vmul.f32 %v468, 0.35355338
      %v474 = vpack.c.bf16 %v473, %v473
      %vm475 = vcmask 257024
      %476 = vst.msk [vmem:[#allocation2] sm:$0xf] %vm475, %v474
      %v477 = vld [vmem:[%s4] sm:$0xf]
      %v478 = vld [vmem:[%s4 + $0x4] sm:$0xf]
      %v479 = vld [vmem:[%s4 + $0x8] sm:$0xf]
      %v480 = vld [vmem:[%s4 + $0xc] sm:$0xf]
      %v481 = vld [vmem:[%s5] sm:$0x1]
      %v483 = vlaneseq
      %v484 = vshrl.u32 %v483, 7
      %v485 = vsub.s32 0, %v484
      %v486 = vrot.slane %v481, %v485
      %v492 = vunpack.c.l.b16 %v477
      %v493 = vunpack.c.l.b16 %v478
      %v494 = vunpack.c.l.b16 %v479
      %v495 = vunpack.c.l.b16 %v480
      %v496 = vpack.c.b16 %v493, %v492
      %v497 = vpack.c.b16 %v495, %v494
      %v501 = vsel %vm429, %v405, 0
      %503 = vmatprep.subr.bf16.mxu0 0
      %504 = vmatpush1.bf16.msra.mxu0 0
      %505 = vmatprep.subr.bf16.mxu0 0
      %506 = vmatpush1.bf16.msra.mxu0 0
      %507 = vmatprep.subr.bf16.mxu0 0
      %508 = vmatpush1.bf16.msra.mxu0 0
      %509 = vmatprep.subr.bf16.mxu0 0
      %510 = vmatpush1.bf16.msra.mxu0 0
      %511 = vmatprep.subr.bf16.mxu0 0
      %512 = vmatpush1.bf16.msra.mxu0 0
      %513 = vmatprep.subr.bf16.mxu0 0
      %514 = vmatpush1.bf16.msra.mxu0 0
      %515 = vmatprep.subr.bf16.mxu0 0
      %516 = vmatpush1.bf16.msra.mxu0 %v497
      %517 = vmatprep.subr.bf16.mxu0 0
      %518 = vmatpush1.bf16.msra.mxu0 %v496
      %519 = vmatprep.subr.bf16.mxu0 0
      %520 = vmatpush2.bf16.msra.mxu0 0
      %521 = vmatprep.subr.bf16.mxu0 0
      %522 = vmatpush2.bf16.msra.mxu0 0
      %523 = vmatprep.subr.bf16.mxu0 0
      %524 = vmatpush2.bf16.msra.mxu0 0
      %525 = vmatprep.subr.bf16.mxu0 0
      %526 = vmatpush2.bf16.msra.mxu0 0
      %527 = vmatprep.subr.bf16.mxu0 0
      %528 = vmatpush2.bf16.msra.mxu0 0
      %529 = vmatprep.subr.bf16.mxu0 0
      %530 = vmatpush2.bf16.msra.mxu0 0
      %531 = vmatprep.subr.bf16.mxu0 0
      %532 = vmatpush2.bf16.msra.mxu0 0
      %533 = vmatprep.subr.bf16.mxu0 0
      %534 = vmatpush2.bf16.msra.mxu0 0
      %535 = vmatprep.mubr.bf16.mxu0 0
      %536 = vmatmul.mubr.bf16.gmra.mxu0 %v501
      %v537 = vpop.f32.mrf.mxu0
      %v538 = vadd.f32 %v486, %v537
      %v539 = vpop.f32.mrf.mxu0
      %v540 = vpop.f32.mrf.mxu0
      %v541 = vpop.f32.mrf.mxu0
      %542 = vdwg.mxu0
      %v543 = vpack.c.bf16 %v538, %v538
      %vm544 = vcmask 519168
      %545 = vst.msk [vmem:[#allocation3] sm:$0xf] %vm544, %v543
      %s546 = smul.u32 %s26, 8
      %v547 = vlaneseq
      %v548 = vshrl.u32 %v547, 7
      %v549 = vstv %s546
      %v550 = vadd.s32 %v548, %v549
      %v551 = vlaneseq
      %v552 = vand.u32 %v551, 127
      %vm553 = vcmp.ge.s32.totalorder %v550, %v552
      %v554 = vsel %vm553, 0.0, -1e+09
      %v555 = vld [vmem:[#allocation2] sm:$0xf]
      %v556 = vld [vmem:[#allocation3] sm:$0xf]
      %vm557 = vcmask 64512
      %v559 = vsel %vm557, %v555, 0
      %v562 = vsel %vm557, %v556, 0
      %564 = vmatprep.subr.bf16.mxu0 0
      %565 = vmatpush1.bf16.xpose.msra.mxu0 0
      %566 = vmatprep.subr.bf16.mxu0 0
      %567 = vmatpush1.bf16.xpose.msra.mxu0 0
      %568 = vmatprep.subr.bf16.mxu0 0
      %569 = vmatpush1.bf16.xpose.msra.mxu0 0
      %570 = vmatprep.subr.bf16.mxu0 0
      %571 = vmatpush1.bf16.xpose.msra.mxu0 0
      %572 = vmatprep.subr.bf16.mxu0 0
      %573 = vmatpush1.bf16.xpose.msra.mxu0 0
      %574 = vmatprep.subr.bf16.mxu0 0
      %575 = vmatpush1.bf16.xpose.msra.mxu0 0
      %576 = vmatprep.subr.bf16.mxu0 0
      %577 = vmatpush1.bf16.xpose.msra.mxu0 0
      %578 = vmatprep.subr.bf16.mxu0 0
      %579 = vmatpush1.bf16.xpose.msra.mxu0 %v562
      %580 = vmatprep.subr.bf16.mxu0 0
      %581 = vmatpush2.bf16.xpose.msra.mxu0 0
      %582 = vmatprep.subr.bf16.mxu0 0
      %583 = vmatpush2.bf16.xpose.msra.mxu0 0
      %584 = vmatprep.subr.bf16.mxu0 0
      %585 = vmatpush2.bf16.xpose.msra.mxu0 0
      %586 = vmatprep.subr.bf16.mxu0 0
      %587 = vmatpush2.bf16.xpose.msra.mxu0 0
      %588 = vmatprep.subr.bf16.mxu0 0
      %589 = vmatpush2.bf16.xpose.msra.mxu0 0
      %590 = vmatprep.subr.bf16.mxu0 0
      %591 = vmatpush2.bf16.xpose.msra.mxu0 0
      %592 = vmatprep.subr.bf16.mxu0 0
      %593 = vmatpush2.bf16.xpose.msra.mxu0 0
      %594 = vmatprep.subr.bf16.mxu0 0
      %595 = vmatpush2.bf16.xpose.msra.mxu0 0
      %596 = vmatprep.mubr.bf16.mxu0 0
      %597 = vmatmul.mubr.bf16.gmra.mxu0 %v559
      %v598 = vpop.f32.mrf.mxu0
      %v599 = vadd.f32 %v554, %v598
      %v600 = vpop.f32.mrf.mxu0
      %v601 = vpop.f32.mrf.mxu0
      %v602 = vpop.f32.mrf.mxu0
      %603 = vdwg.mxu0
      %v604 = vsel %vm557, %v599, -inf
      %605 = vmax.xlane.f32.xlu0 %v604
      %v606 = vpop.xlane.xlu0 %605
      %v607 = vsub.f32 %v599, %v606
      %v608 = vmul.f32 %v607, 1.442695
      %v609 = vpow.pop %v608
      %v610 = vsel %vm557, %v609, 0.0
      %611 = vadd.xlane.f32.xlu0 %v610
      %v612 = vpop.xlane.xlu0 %611
      %v613 = vrcp.pop %v612
      %v614 = vmul.f32 %v609, %v613
      %v615 = vpack.c.bf16 %v614, %v614
      %v617 = vunpack.c.l.b16 %v556
      %v618 = vpack.c.b16 %v617, %v617
      %619 = vrot.lane.b32.xlu0 %v618, 96
      %v620 = vpop.permute.xlu0 %619
      %v622 = vsel %vm557, %v615, 0
      %vm624 = vcmask 1043456
      %v626 = vsel %vm624, %v620, 0
      %628 = vmatprep.subr.bf16.mxu0 0
      %629 = vmatpush1.bf16.msra.mxu0 0
      %630 = vmatprep.subr.bf16.mxu0 0
      %631 = vmatpush1.bf16.msra.mxu0 0
      %632 = vmatprep.subr.bf16.mxu0 0
      %633 = vmatpush1.bf16.msra.mxu0 0
      %634 = vmatprep.subr.bf16.mxu0 0
      %635 = vmatpush1.bf16.msra.mxu0 0
      %636 = vmatprep.subr.bf16.mxu0 0
      %637 = vmatpush1.bf16.msra.mxu0 0
      %638 = vmatprep.subr.bf16.mxu0 0
      %639 = vmatpush1.bf16.msra.mxu0 0
      %640 = vmatprep.subr.bf16.mxu0 0
      %641 = vmatpush1.bf16.msra.mxu0 0
      %642 = vmatprep.subr.bf16.mxu0 0
      %643 = vmatpush1.bf16.msra.mxu0 %v626
      %644 = vmatprep.subr.bf16.mxu0 0
      %645 = vmatpush2.bf16.msra.mxu0 0
      %646 = vmatprep.subr.bf16.mxu0 0
      %647 = vmatpush2.bf16.msra.mxu0 0
      %648 = vmatprep.subr.bf16.mxu0 0
      %649 = vmatpush2.bf16.msra.mxu0 0
      %650 = vmatprep.subr.bf16.mxu0 0
      %651 = vmatpush2.bf16.msra.mxu0 0
      %652 = vmatprep.subr.bf16.mxu0 0
      %653 = vmatpush2.bf16.msra.mxu0 0
      %654 = vmatprep.subr.bf16.mxu0 0
      %655 = vmatpush2.bf16.msra.mxu0 0
      %656 = vmatprep.subr.bf16.mxu0 0
      %657 = vmatpush2.bf16.msra.mxu0 0
      %658 = vmatprep.subr.bf16.mxu0 0
      %659 = vmatpush2.bf16.msra.mxu0 0
      %660 = vmatprep.mubr.bf16.mxu0 0
      %661 = vmatmul.mubr.bf16.gmra.mxu0 %v622
      %v662 = vpop.f32.mrf.mxu0
      %v663 = vadd.f32 0.0, %v662
      %v664 = vpop.f32.mrf.mxu0
      %v665 = vpop.f32.mrf.mxu0
      %v666 = vpop.f32.mrf.mxu0
      %667 = vdwg.mxu0
      %v668 = vpack.c.bf16 %v663, %v663
      %vm669 = vcmask 60416
      %670 = vst.msk [vmem:[#allocation4] sm:$0xf] %vm669, %v668
      %v671 = vld [vmem:[#allocation2] sm:$0xf]
      %v672 = vld [vmem:[#allocation3] sm:$0xf]
      %v674 = vunpack.c.l.b16 %v671
      %v675 = vpack.c.b16 %v674, %v674
      %676 = vrot.lane.b32.xlu0 %v675, 120
      %v677 = vpop.permute.xlu0 %676
      %v679 = vunpack.c.l.b16 %v672
      %v680 = vpack.c.b16 %v679, %v679
      %681 = vrot.lane.b32.xlu0 %v680, 120
      %v682 = vpop.permute.xlu0 %681
      %v684 = vsel %vm557, %v677, 0
      %v687 = vsel %vm557, %v682, 0
      %689 = vmatprep.subr.bf16.mxu0 0
      %690 = vmatpush1.bf16.xpose.msra.mxu0 0
      %691 = vmatprep.subr.bf16.mxu0 0
      %692 = vmatpush1.bf16.xpose.msra.mxu0 0
      %693 = vmatprep.subr.bf16.mxu0 0
      %694 = vmatpush1.bf16.xpose.msra.mxu0 0
      %695 = vmatprep.subr.bf16.mxu0 0
      %696 = vmatpush1.bf16.xpose.msra.mxu0 0
      %697 = vmatprep.subr.bf16.mxu0 0
      %698 = vmatpush1.bf16.xpose.msra.mxu0 0
      %699 = vmatprep.subr.bf16.mxu0 0
      %700 = vmatpush1.bf16.xpose.msra.mxu0 0
      %701 = vmatprep.subr.bf16.mxu0 0
      %702 = vmatpush1.bf16.xpose.msra.mxu0 0
      %703 = vmatprep.subr.bf16.mxu0 0
      %704 = vmatpush1.bf16.xpose.msra.mxu0 %v687
      %705 = vmatprep.subr.bf16.mxu0 0
      %706 = vmatpush2.bf16.xpose.msra.mxu0 0
      %707 = vmatprep.subr.bf16.mxu0 0
      %708 = vmatpush2.bf16.xpose.msra.mxu0 0
      %709 = vmatprep.subr.bf16.mxu0 0
      %710 = vmatpush2.bf16.xpose.msra.mxu0 0
      %711 = vmatprep.subr.bf16.mxu0 0
      %712 = vmatpush2.bf16.xpose.msra.mxu0 0
      %713 = vmatprep.subr.bf16.mxu0 0
      %714 = vmatpush2.bf16.xpose.msra.mxu0 0
      %715 = vmatprep.subr.bf16.mxu0 0
      %716 = vmatpush2.bf16.xpose.msra.mxu0 0
      %717 = vmatprep.subr.bf16.mxu0 0
      %718 = vmatpush2.bf16.xpose.msra.mxu0 0
      %719 = vmatprep.subr.bf16.mxu0 0
      %720 = vmatpush2.bf16.xpose.msra.mxu0 0
      %721 = vmatprep.mubr.bf16.mxu0 0
      %722 = vmatmul.mubr.bf16.gmra.mxu0 %v684
      %v723 = vpop.f32.mrf.mxu0
      %v724 = vadd.f32 %v554, %v723
      %v725 = vpop.f32.mrf.mxu0
      %v726 = vpop.f32.mrf.mxu0
      %v727 = vpop.f32.mrf.mxu0
      %728 = vdwg.mxu0
      %v729 = vsel %vm557, %v724, -inf
      %730 = vmax.xlane.f32.xlu0 %v729
      %v731 = vpop.xlane.xlu0 %730
      %v732 = vsub.f32 %v724, %v731
      %v733 = vmul.f32 %v732, 1.442695
      %v734 = vpow.pop %v733
      %v735 = vsel %vm557, %v734, 0.0
      %736 = vadd.xlane.f32.xlu0 %v735
      %v737 = vpop.xlane.xlu0 %736
      %v738 = vrcp.pop %v737
      %v739 = vmul.f32 %v734, %v738
      %v740 = vpack.c.bf16 %v739, %v739
      %741 = vrot.lane.b32.xlu0 %v680, 88
      %v742 = vpop.permute.xlu0 %741
      %v744 = vsel %vm557, %v740, 0
      %v747 = vsel %vm624, %v742, 0
      %749 = vmatprep.subr.bf16.mxu0 0
      %750 = vmatpush1.bf16.msra.mxu0 0
      %751 = vmatprep.subr.bf16.mxu0 0
      %752 = vmatpush1.bf16.msra.mxu0 0
      %753 = vmatprep.subr.bf16.mxu0 0
      %754 = vmatpush1.bf16.msra.mxu0 0
      %755 = vmatprep.subr.bf16.mxu0 0
      %756 = vmatpush1.bf16.msra.mxu0 0
      %757 = vmatprep.subr.bf16.mxu0 0
      %758 = vmatpush1.bf16.msra.mxu0 0
      %759 = vmatprep.subr.bf16.mxu0 0
      %760 = vmatpush1.bf16.msra.mxu0 0
      %761 = vmatprep.subr.bf16.mxu0 0
      %762 = vmatpush1.bf16.msra.mxu0 0
      %763 = vmatprep.subr.bf16.mxu0 0
      %764 = vmatpush1.bf16.msra.mxu0 %v747
      %765 = vmatprep.subr.bf16.mxu0 0
      %766 = vmatpush2.bf16.msra.mxu0 0
      %767 = vmatprep.subr.bf16.mxu0 0
      %768 = vmatpush2.bf16.msra.mxu0 0
      %769 = vmatprep.subr.bf16.mxu0 0
      %770 = vmatpush2.bf16.msra.mxu0 0
      %771 = vmatprep.subr.bf16.mxu0 0
      %772 = vmatpush2.bf16.msra.mxu0 0
      %773 = vmatprep.subr.bf16.mxu0 0
      %774 = vmatpush2.bf16.msra.mxu0 0
      %775 = vmatprep.subr.bf16.mxu0 0
      %776 = vmatpush2.bf16.msra.mxu0 0
      %777 = vmatprep.subr.bf16.mxu0 0
      %778 = vmatpush2.bf16.msra.mxu0 0
      %779 = vmatprep.subr.bf16.mxu0 0
      %780 = vmatpush2.bf16.msra.mxu0 0
      %781 = vmatprep.mubr.bf16.mxu0 0
      %782 = vmatmul.mubr.bf16.gmra.mxu0 %v744
      %v783 = vpop.f32.mrf.mxu0
      %v784 = vadd.f32 0.0, %v783
      %v785 = vpop.f32.mrf.mxu0
      %v786 = vpop.f32.mrf.mxu0
      %v787 = vpop.f32.mrf.mxu0
      %788 = vdwg.mxu0
      %v789 = vpack.c.bf16 %v784, %v784
      %v791 = vunpack.c.l.b16 %v789
      %v792 = vpack.c.b16 %v791, %v791
      %793 = vrot.lane.b32.xlu0 %v792, 8
      %v794 = vpop.permute.xlu0 %793
      %vm796 = vcmask 126016
      %797 = vst.msk [vmem:[#allocation4] sm:$0xf] %vm796, %v794
      %v798 = vld [vmem:[#allocation2] sm:$0xf]
      %v799 = vld [vmem:[#allocation3] sm:$0xf]
      %v801 = vunpack.c.l.b16 %v798
      %v802 = vpack.c.b16 %v801, %v801
      %803 = vrot.lane.b32.xlu0 %v802, 112
      %v804 = vpop.permute.xlu0 %803
      %v806 = vunpack.c.l.b16 %v799
      %v807 = vpack.c.b16 %v806, %v806
      %808 = vrot.lane.b32.xlu0 %v807, 112
      %v809 = vpop.permute.xlu0 %808
      %v811 = vsel %vm557, %v804, 0
      %v814 = vsel %vm557, %v809, 0
      %816 = vmatprep.subr.bf16.mxu0 0
      %817 = vmatpush1.bf16.xpose.msra.mxu0 0
      %818 = vmatprep.subr.bf16.mxu0 0
      %819 = vmatpush1.bf16.xpose.msra.mxu0 0
      %820 = vmatprep.subr.bf16.mxu0 0
      %821 = vmatpush1.bf16.xpose.msra.mxu0 0
      %822 = vmatprep.subr.bf16.mxu0 0
      %823 = vmatpush1.bf16.xpose.msra.mxu0 0
      %824 = vmatprep.subr.bf16.mxu0 0
      %825 = vmatpush1.bf16.xpose.msra.mxu0 0
      %826 = vmatprep.subr.bf16.mxu0 0
      %827 = vmatpush1.bf16.xpose.msra.mxu0 0
      %828 = vmatprep.subr.bf16.mxu0 0
      %829 = vmatpush1.bf16.xpose.msra.mxu0 0
      %830 = vmatprep.subr.bf16.mxu0 0
      %831 = vmatpush1.bf16.xpose.msra.mxu0 %v814
      %832 = vmatprep.subr.bf16.mxu0 0
      %833 = vmatpush2.bf16.xpose.msra.mxu0 0
      %834 = vmatprep.subr.bf16.mxu0 0
      %835 = vmatpush2.bf16.xpose.msra.mxu0 0
      %836 = vmatprep.subr.bf16.mxu0 0
      %837 = vmatpush2.bf16.xpose.msra.mxu0 0
      %838 = vmatprep.subr.bf16.mxu0 0
      %839 = vmatpush2.bf16.xpose.msra.mxu0 0
      %840 = vmatprep.subr.bf16.mxu0 0
      %841 = vmatpush2.bf16.xpose.msra.mxu0 0
      %842 = vmatprep.subr.bf16.mxu0 0
      %843 = vmatpush2.bf16.xpose.msra.mxu0 0
      %844 = vmatprep.subr.bf16.mxu0 0
      %845 = vmatpush2.bf16.xpose.msra.mxu0 0
      %846 = vmatprep.subr.bf16.mxu0 0
      %847 = vmatpush2.bf16.xpose.msra.mxu0 0
      %848 = vmatprep.mubr.bf16.mxu0 0
      %849 = vmatmul.mubr.bf16.gmra.mxu0 %v811
      %v850 = vpop.f32.mrf.mxu0
      %v851 = vadd.f32 %v554, %v850
      %v852 = vpop.f32.mrf.mxu0
      %v853 = vpop.f32.mrf.mxu0
      %v854 = vpop.f32.mrf.mxu0
      %855 = vdwg.mxu0
      %v856 = vsel %vm557, %v851, -inf
      %857 = vmax.xlane.f32.xlu0 %v856
      %v858 = vpop.xlane.xlu0 %857
      %v859 = vsub.f32 %v851, %v858
      %v860 = vmul.f32 %v859, 1.442695
      %v861 = vpow.pop %v860
      %v862 = vsel %vm557, %v861, 0.0
      %863 = vadd.xlane.f32.xlu0 %v862
      %v864 = vpop.xlane.xlu0 %863
      %v865 = vrcp.pop %v864
      %v866 = vmul.f32 %v861, %v865
      %v867 = vpack.c.bf16 %v866, %v866
      %868 = vrot.lane.b32.xlu0 %v807, 80
      %v869 = vpop.permute.xlu0 %868
      %v871 = vsel %vm557, %v867, 0
      %v874 = vsel %vm624, %v869, 0
      %876 = vmatprep.subr.bf16.mxu0 0
      %877 = vmatpush1.bf16.msra.mxu0 0
      %878 = vmatprep.subr.bf16.mxu0 0
      %879 = vmatpush1.bf16.msra.mxu0 0
      %880 = vmatprep.subr.bf16.mxu0 0
      %881 = vmatpush1.bf16.msra.mxu0 0
      %882 = vmatprep.subr.bf16.mxu0 0
      %883 = vmatpush1.bf16.msra.mxu0 0
      %884 = vmatprep.subr.bf16.mxu0 0
      %885 = vmatpush1.bf16.msra.mxu0 0
      %886 = vmatprep.subr.bf16.mxu0 0
      %887 = vmatpush1.bf16.msra.mxu0 0
      %888 = vmatprep.subr.bf16.mxu0 0
      %889 = vmatpush1.bf16.msra.mxu0 0
      %890 = vmatprep.subr.bf16.mxu0 0
      %891 = vmatpush1.bf16.msra.mxu0 %v874
      %892 = vmatprep.subr.bf16.mxu0 0
      %893 = vmatpush2.bf16.msra.mxu0 0
      %894 = vmatprep.subr.bf16.mxu0 0
      %895 = vmatpush2.bf16.msra.mxu0 0
      %896 = vmatprep.subr.bf16.mxu0 0
      %897 = vmatpush2.bf16.msra.mxu0 0
      %898 = vmatprep.subr.bf16.mxu0 0
      %899 = vmatpush2.bf16.msra.mxu0 0
      %900 = vmatprep.subr.bf16.mxu0 0
      %901 = vmatpush2.bf16.msra.mxu0 0
      %902 = vmatprep.subr.bf16.mxu0 0
      %903 = vmatpush2.bf16.msra.mxu0 0
      %904 = vmatprep.subr.bf16.mxu0 0
      %905 = vmatpush2.bf16.msra.mxu0 0
      %906 = vmatprep.subr.bf16.mxu0 0
      %907 = vmatpush2.bf16.msra.mxu0 0
      %908 = vmatprep.mubr.bf16.mxu0 0
      %909 = vmatmul.mubr.bf16.gmra.mxu0 %v871
      %v910 = vpop.f32.mrf.mxu0
      %v911 = vadd.f32 0.0, %v910
      %v912 = vpop.f32.mrf.mxu0
      %v913 = vpop.f32.mrf.mxu0
      %v914 = vpop.f32.mrf.mxu0
      %915 = vdwg.mxu0
      %v916 = vpack.c.bf16 %v911, %v911
      %v918 = vunpack.c.l.b16 %v916
      %v919 = vpack.c.b16 %v918, %v918
      %920 = vrot.lane.b32.xlu0 %v919, 16
      %v921 = vpop.permute.xlu0 %920
      %vm923 = vcmask 191616
      %924 = vst.msk [vmem:[#allocation4] sm:$0xf] %vm923, %v921
      %v925 = vld [vmem:[#allocation2] sm:$0xf]
      %v926 = vld [vmem:[#allocation3] sm:$0xf]
      %v928 = vunpack.c.l.b16 %v925
      %v929 = vpack.c.b16 %v928, %v928
      %930 = vrot.lane.b32.xlu0 %v929, 104
      %v931 = vpop.permute.xlu0 %930
      %v933 = vunpack.c.l.b16 %v926
      %v934 = vpack.c.b16 %v933, %v933
      %935 = vrot.lane.b32.xlu0 %v934, 104
      %v936 = vpop.permute.xlu0 %935
      %v938 = vsel %vm557, %v931, 0
      %v941 = vsel %vm557, %v936, 0
      %943 = vmatprep.subr.bf16.mxu0 0
      %944 = vmatpush1.bf16.xpose.msra.mxu0 0
      %945 = vmatprep.subr.bf16.mxu0 0
      %946 = vmatpush1.bf16.xpose.msra.mxu0 0
      %947 = vmatprep.subr.bf16.mxu0 0
      %948 = vmatpush1.bf16.xpose.msra.mxu0 0
      %949 = vmatprep.subr.bf16.mxu0 0
      %950 = vmatpush1.bf16.xpose.msra.mxu0 0
      %951 = vmatprep.subr.bf16.mxu0 0
      %952 = vmatpush1.bf16.xpose.msra.mxu0 0
      %953 = vmatprep.subr.bf16.mxu0 0
      %954 = vmatpush1.bf16.xpose.msra.mxu0 0
      %955 = vmatprep.subr.bf16.mxu0 0
      %956 = vmatpush1.bf16.xpose.msra.mxu0 0
      %957 = vmatprep.subr.bf16.mxu0 0
      %958 = vmatpush1.bf16.xpose.msra.mxu0 %v941
      %959 = vmatprep.subr.bf16.mxu0 0
      %960 = vmatpush2.bf16.xpose.msra.mxu0 0
      %961 = vmatprep.subr.bf16.mxu0 0
      %962 = vmatpush2.bf16.xpose.msra.mxu0 0
      %963 = vmatprep.subr.bf16.mxu0 0
      %964 = vmatpush2.bf16.xpose.msra.mxu0 0
      %965 = vmatprep.subr.bf16.mxu0 0
      %966 = vmatpush2.bf16.xpose.msra.mxu0 0
      %967 = vmatprep.subr.bf16.mxu0 0
      %968 = vmatpush2.bf16.xpose.msra.mxu0 0
      %969 = vmatprep.subr.bf16.mxu0 0
      %970 = vmatpush2.bf16.xpose.msra.mxu0 0
      %971 = vmatprep.subr.bf16.mxu0 0
      %972 = vmatpush2.bf16.xpose.msra.mxu0 0
      %973 = vmatprep.subr.bf16.mxu0 0
      %974 = vmatpush2.bf16.xpose.msra.mxu0 0
      %975 = vmatprep.mubr.bf16.mxu0 0
      %976 = vmatmul.mubr.bf16.gmra.mxu0 %v938
      %v977 = vpop.f32.mrf.mxu0
      %v978 = vadd.f32 %v554, %v977
      %v979 = vpop.f32.mrf.mxu0
      %v980 = vpop.f32.mrf.mxu0
      %v981 = vpop.f32.mrf.mxu0
      %982 = vdwg.mxu0
      %v983 = vsel %vm557, %v978, -inf
      %984 = vmax.xlane.f32.xlu0 %v983
      %v985 = vpop.xlane.xlu0 %984
      %v986 = vsub.f32 %v978, %v985
      %v987 = vmul.f32 %v986, 1.442695
      %v988 = vpow.pop %v987
      %v989 = vsel %vm557, %v988, 0.0
      %990 = vadd.xlane.f32.xlu0 %v989
      %v991 = vpop.xlane.xlu0 %990
      %v992 = vrcp.pop %v991
      %v993 = vmul.f32 %v988, %v992
      %v994 = vpack.c.bf16 %v993, %v993
      %995 = vrot.lane.b32.xlu0 %v934, 72
      %v996 = vpop.permute.xlu0 %995
      %v998 = vsel %vm557, %v994, 0
      %v1001 = vsel %vm624, %v996, 0
      %1003 = vmatprep.subr.bf16.mxu0 0
      %1004 = vmatpush1.bf16.msra.mxu0 0
      %1005 = vmatprep.subr.bf16.mxu0 0
      %1006 = vmatpush1.bf16.msra.mxu0 0
      %1007 = vmatprep.subr.bf16.mxu0 0
      %1008 = vmatpush1.bf16.msra.mxu0 0
      %1009 = vmatprep.subr.bf16.mxu0 0
      %1010 = vmatpush1.bf16.msra.mxu0 0
      %1011 = vmatprep.subr.bf16.mxu0 0
      %1012 = vmatpush1.bf16.msra.mxu0 0
      %1013 = vmatprep.subr.bf16.mxu0 0
      %1014 = vmatpush1.bf16.msra.mxu0 0
      %1015 = vmatprep.subr.bf16.mxu0 0
      %1016 = vmatpush1.bf16.msra.mxu0 0
      %1017 = vmatprep.subr.bf16.mxu0 0
      %1018 = vmatpush1.bf16.msra.mxu0 %v1001
      %1019 = vmatprep.subr.bf16.mxu0 0
      %1020 = vmatpush2.bf16.msra.mxu0 0
      %1021 = vmatprep.subr.bf16.mxu0 0
      %1022 = vmatpush2.bf16.msra.mxu0 0
      %1023 = vmatprep.subr.bf16.mxu0 0
      %1024 = vmatpush2.bf16.msra.mxu0 0
      %1025 = vmatprep.subr.bf16.mxu0 0
      %1026 = vmatpush2.bf16.msra.mxu0 0
      %1027 = vmatprep.subr.bf16.mxu0 0
      %1028 = vmatpush2.bf16.msra.mxu0 0
      %1029 = vmatprep.subr.bf16.mxu0 0
      %1030 = vmatpush2.bf16.msra.mxu0 0
      %1031 = vmatprep.subr.bf16.mxu0 0
      %1032 = vmatpush2.bf16.msra.mxu0 0
      %1033 = vmatprep.subr.bf16.mxu0 0
      %1034 = vmatpush2.bf16.msra.mxu0 0
      %1035 = vmatprep.mubr.bf16.mxu0 0
      %1036 = vmatmul.mubr.bf16.gmra.mxu0 %v998
      %v1037 = vpop.f32.mrf.mxu0
      %v1038 = vadd.f32 0.0, %v1037
      %v1039 = vpop.f32.mrf.mxu0
      %v1040 = vpop.f32.mrf.mxu0
      %v1041 = vpop.f32.mrf.mxu0
      %1042 = vdwg.mxu0
      %v1043 = vpack.c.bf16 %v1038, %v1038
      %v1045 = vunpack.c.l.b16 %v1043
      %v1046 = vpack.c.b16 %v1045, %v1045
      %1047 = vrot.lane.b32.xlu0 %v1046, 24
      %v1048 = vpop.permute.xlu0 %1047
      %vm1050 = vcmask 257216
      %1051 = vst.msk [vmem:[#allocation4] sm:$0xf] %vm1050, %v1048
      %v1052 = vld [vmem:[#allocation4] sm:$0xf]
      %v1053 = vld [vmem:[%s6] sm:$0xf]
      %v1054 = vld [vmem:[%s6 + $0x4] sm:$0xf]
      %v1055 = vld [vmem:[%s6 + $0x8] sm:$0xf]
      %v1056 = vld [vmem:[%s6 + $0xc] sm:$0xf]
      %v1057 = vld [vmem:[%s7] sm:$0x1]
      %v1059 = vlaneseq
      %v1060 = vshrl.u32 %v1059, 7
      %v1061 = vsub.s32 0, %v1060
      %v1062 = vrot.slane %v1057, %v1061
      %v1068 = vunpack.c.l.b16 %v1053
      %v1069 = vunpack.c.l.b16 %v1054
      %v1070 = vunpack.c.l.b16 %v1055
      %v1071 = vunpack.c.l.b16 %v1056
      %v1072 = vpack.c.b16 %v1069, %v1068
      %v1073 = vpack.c.b16 %v1071, %v1070
      %v1077 = vsel %vm429, %v1052, 0
      %1079 = vmatprep.subr.bf16.mxu0 0
      %1080 = vmatpush1.bf16.msra.mxu0 0
      %1081 = vmatprep.subr.bf16.mxu0 0
      %1082 = vmatpush1.bf16.msra.mxu0 0
      %1083 = vmatprep.subr.bf16.mxu0 0
      %1084 = vmatpush1.bf16.msra.mxu0 0
      %1085 = vmatprep.subr.bf16.mxu0 0
      %1086 = vmatpush1.bf16.msra.mxu0 0
      %1087 = vmatprep.subr.bf16.mxu0 0
      %1088 = vmatpush1.bf16.msra.mxu0 0
      %1089 = vmatprep.subr.bf16.mxu0 0
      %1090 = vmatpush1.bf16.msra.mxu0 0
      %1091 = vmatprep.subr.bf16.mxu0 0
      %1092 = vmatpush1.bf16.msra.mxu0 %v1073
      %1093 = vmatprep.subr.bf16.mxu0 0
      %1094 = vmatpush1.bf16.msra.mxu0 %v1072
      %1095 = vmatprep.subr.bf16.mxu0 0
      %1096 = vmatpush2.bf16.msra.mxu0 0
      %1097 = vmatprep.subr.bf16.mxu0 0
      %1098 = vmatpush2.bf16.msra.mxu0 0
      %1099 = vmatprep.subr.bf16.mxu0 0
      %1100 = vmatpush2.bf16.msra.mxu0 0
      %1101 = vmatprep.subr.bf16.mxu0 0
      %1102 = vmatpush2.bf16.msra.mxu0 0
      %1103 = vmatprep.subr.bf16.mxu0 0
      %1104 = vmatpush2.bf16.msra.mxu0 0
      %1105 = vmatprep.subr.bf16.mxu0 0
      %1106 = vmatpush2.bf16.msra.mxu0 0
      %1107 = vmatprep.subr.bf16.mxu0 0
      %1108 = vmatpush2.bf16.msra.mxu0 0
      %1109 = vmatprep.subr.bf16.mxu0 0
      %1110 = vmatpush2.bf16.msra.mxu0 0
      %1111 = vmatprep.mubr.bf16.mxu0 0
      %1112 = vmatmul.mubr.bf16.gmra.mxu0 %v1077
      %v1113 = vpop.f32.mrf.mxu0
      %v1114 = vadd.f32 %v1062, %v1113
      %v1115 = vpop.f32.mrf.mxu0
      %v1116 = vpop.f32.mrf.mxu0
      %v1117 = vpop.f32.mrf.mxu0
      %1118 = vdwg.mxu0
      %v1119 = vunpack.c.l.bf16 %v404
      %v1120 = vadd.f32 %v1119, %v1114
      %v1121 = vsel %vm429, %v1120, 0.0
      %1122 = vadd.xlane.f32.xlu0 %v1121
      %v1123 = vpop.xlane.xlu0 %1122
      %v1124 = vrcp.pop 32.0
      %v1125 = vmul.f32 %v1123, %v1124
      %v1126 = vsub.f32 %v1120, %v1125
      %v1127 = vmul.f32 %v1126, %v1126
      %v1128 = vsel %vm429, %v1127, 0.0
      %1129 = vadd.xlane.f32.xlu0 %v1128
      %v1130 = vpop.xlane.xlu0 %1129
      %v1131 = vmul.f32 %v1130, %v1124
      %v1132 = vadd.f32 %v1131, 1e-05
      %v1133 = vrsqrt.pop %v1132
      %v1134 = vmul.f32 %v1126, %v1133
      %v1135 = vld [vmem:[%s8] sm:$0x1]
      %v1137 = vlaneseq
      %v1138 = vshrl.u32 %v1137, 7
      %v1139 = vsub.s32 0, %v1138
      %v1140 = vrot.slane %v1135, %v1139
      %v1142 = vmul.f32 %v1134, %v1140
      %v1143 = vld [vmem:[%s9] sm:$0x1]
      %v1145 = vlaneseq
      %v1146 = vshrl.u32 %v1145, 7
      %v1147 = vsub.s32 0, %v1146
      %v1148 = vrot.slane %v1143, %v1147
      %v1150 = vadd.f32 %v1142, %v1148
      %v1151 = vpack.c.bf16 %v1150, %v1150
      %1152 = vst.msk [vmem:[%s402] sm:$0xf] %vm475, %v1151
      %p1153 = scmp.lt.s32.totalorder %s25, 1
      %s1154 = scalar_select %p1153, %s25, 1
      %p1155 = scmp.lt.s32.totalorder %s26, 0
      %s1156 = scalar_select %p1155, %s26, 0
      %s1157 = sadd.s32 %s1156, %s1154
      %s1158 = smul.addr %s1157, 4
      %s1159 = scalar_lea.vmem %s10, %s1158
      // Predicated region
      $region61: #{decoder_layer_forward.3} parent=59 // pred_check
        %p1160 = pneg %p275
      $region62: #{decoder_layer_forward.3} parent=59 // pred_check_branch
        %1162 = sbr.rel (%p1160) target = $region64
      $region63: #{decoder_layer_forward.3} parent=59 // pred_region
        _
      $region64: #{decoder_layer_forward.3} parent=59 // pred_fallthru
        _
    $region60: #{decoder_layer_forward.3} parent=5 // pred_fallthru
      _
    %p1163 = scmp.le.s32.totalorder 2, %s16
    // Predicated region
    $region65: #{decoder_layer_forward.3} parent=5 // pred_check
      %p1164 = pneg %p1163
    $region66: #{decoder_layer_forward.3} parent=5 // pred_check_branch
      %1166 = sbr.rel (%p1164) target = $region68
    $region67: #{decoder_layer_forward.3} parent=5 // pred_region
      %s1167 = ssub.s32 %s16, 2
      // Predicated region
      $region69: #{decoder_layer_forward.3} parent=67 // pred_check
        %p1168 = pneg %p281
      $region70: #{decoder_layer_forward.3} parent=67 // pred_check_branch
        %1170 = sbr.rel (%p1168) target = $region72
      $region71: #{decoder_layer_forward.3} parent=67 // pred_region
        %p1171 = scmp.lt.s32.totalorder %s27, 1
        %s1172 = scalar_select %p1171, %s27, 1
        %p1173 = scmp.lt.s32.totalorder %s28, 0
        %s1174 = scalar_select %p1173, %s28, 0
        %s1175 = sadd.s32 %s1174, %s1172
        %s1176 = smul.addr %s1175, 4
        %s1177 = scalar_lea.vmem %s10, %s1176
      $region72: #{decoder_layer_forward.3} parent=67 // pred_fallthru
        _
    $region68: #{decoder_layer_forward.3} parent=5 // pred_fallthru
      _
  $region6: #{decoder_layer_forward.3} parent=0 // loop_footer
    %s20 = sadd.s32 1, %s16
  $region7: #{decoder_layer_forward.3} parent=0 // loop_footer_branch
    %15 = sbr.rel target = $region3
  $region8: #{decoder_layer_forward.3} parent=0 // loop_exit
    _

// kernel: decoder_layer_forward.4
$region0: #{decoder_layer_forward.4}
  #allocation0 [shape = 'u32[]', space=smem, size = 0x4, offset = 0x4, fixed_abs, tag = 'smem constant byte address 0x4 - core index']
  #allocation1 [shape = 'u32[144,128]{1,0:T(1,128)}', space=vmem, size = 0x12000, scoped, tag = 'internal scratch']
  #allocation2 [shape = 'bf16[8,32]{1,0:T(8,128)(2,1)}', space=vmem, size = 0x800, scoped, tag = 'scratch operand']
  #allocation3 [shape = 'bf16[8,64]{1,0:T(8,128)(2,1)}', space=vmem, size = 0x800, scoped, tag = 'scratch operand']
  #allocation4 [shape = 'bf16[8,32]{1,0:T(8,128)(2,1)}', space=vmem, size = 0x800, scoped, tag = 'scratch operand']
  %s0 = inlined_call_operand.vmem [shape: s8[2,8,8], index: 0, kind: input, shape index: {}]
  %s1 = inlined_call_operand.vmem [shape: bf16[2,8,32], index: 1, kind: input, shape index: {}]
  %s2 = inlined_call_operand.vmem [shape: bf16[2,8,32], index: 2, kind: input, shape index: {}]
  %s3 = inlined_call_operand.vmem [shape: bf16[32,32], index: 3, kind: input, shape index: {}]
  %s4 = inlined_call_operand.vmem [shape: f32[1,32], index: 4, kind: input, shape index: {}]
  %s5 = inlined_call_operand.vmem [shape: bf16[32,64], index: 5, kind: input, shape index: {}]
  %s6 = inlined_call_operand.vmem [shape: f32[1,64], index: 6, kind: input, shape index: {}]
  %s7 = inlined_call_operand.vmem [shape: bf16[32,32], index: 7, kind: input, shape index: {}]
  %s8 = inlined_call_operand.vmem [shape: f32[1,32], index: 8, kind: input, shape index: {}]
  %s9 = inlined_call_operand.vmem [shape: f32[1,32], index: 9, kind: input, shape index: {}]
  %s10 = inlined_call_operand.vmem [shape: f32[1,32], index: 10, kind: input, shape index: {}]
  %s11 = inlined_call_operand.vmem [shape: bf16[2,8,32], index: 11, kind: output, shape index: {}]
  %s12 = sld [smem:[#allocation0]]
  $region77: #{decoder_layer_forward.4} parent=0
    _
  %s14 = ssub.s32 1, %s12
  %s15 = scalar_select 0, %s14, %s12
  loop: start=0, step=1, limit=4
  $region2: #{decoder_layer_forward.4} parent=0 // loop_pre_header
    _
  $region3: #{decoder_layer_forward.4} parent=0 // loop_header
    %s17 = sphi 0, %s21
    %p18 = scmp.ge.s32.totalorder %s17, 4
    %s24 = sphi 0, %s36
    %s25 = sphi 0, %s32
    %s26 = sphi 0, %s24
    %s27 = sphi 0, %s25
    %s28 = sphi 0, %s26
    %s29 = sphi 0, %s27
    %s41 = sphi 0, %s43
    %s44 = sphi 0, %s41
    %s45 = sphi 0, %s44
    %s61 = sphi 0, %s45
    %s69 = sphi 0, %s71
    %s72 = sphi 0, %s69
    %s73 = sphi 0, %s72
    %s89 = sphi 0, %s73
    %s95 = sphi 0, %s97
    %s98 = sphi 0, %s95
    %s99 = sphi 0, %s98
    %s115 = sphi 0, %s99
    %s119 = sphi 0, %s119
    %s121 = sphi 0, %s119
    %s122 = sphi 0, %s121
    %s136 = sphi 0, %s122
    %s140 = sphi 0, %s140
    %s142 = sphi 0, %s140
    %s143 = sphi 0, %s142
    %s157 = sphi 0, %s143
    %s161 = sphi 0, %s161
    %s163 = sphi 0, %s161
    %s164 = sphi 0, %s163
    %s178 = sphi 0, %s164
    %s182 = sphi 0, %s182
    %s184 = sphi 0, %s182
    %s185 = sphi 0, %s184
    %s199 = sphi 0, %s185
    %s203 = sphi 0, %s203
    %s205 = sphi 0, %s203
    %s206 = sphi 0, %s205
    %s220 = sphi 0, %s206
    %s224 = sphi 0, %s224
    %s226 = sphi 0, %s224
    %s227 = sphi 0, %s226
    %s241 = sphi 0, %s227
    %s245 = sphi 0, %s245
    %s247 = sphi 0, %s245
    %s248 = sphi 0, %s247
    %s262 = sphi 0, %s248
    %s266 = sphi 0, %s266
    %s268 = sphi 0, %s266
    %s269 = sphi 0, %s268
    %s283 = sphi 0, %s269
    %s291 = sphi 0, %s293
    %s294 = sphi 0, %s291
    %s295 = sphi 0, %s294
    %s311 = sphi 0, %s295
  $region4: #{decoder_layer_forward.4} parent=0 // loop_header_branch
    %20 = sbr.rel (%p18) target = $region8
  $region5: #{decoder_layer_forward.4} parent=0 // loop_body
    %s22 = ssub.s32 %s17, 1
    %s23 = ssub.s32 %s17, 2
    %s30 = sadd.s32 1, %s25
    %p31 = scmp.ge.s32.totalorder %s30, 1
    %s32 = scalar_select %p31, 0, %s30
    %s33 = sadd.s32 1, %s24
    %s34 = scalar_select %p31, %s33, %s24
    %p35 = scmp.ge.s32.totalorder %s34, 2
    %s36 = scalar_select %p35, 0, %s34
    %s37 = ssub.s32 %s24, %s36
    %s38 = ssub.s32 %s25, %s32
    %s39 = sor.u32 %s37, %s38
    %p40 = scmp.eq.s32.totalorder %s39, 0
    %s42 = sadd.s32 %s41, 1
    %s43 = scalar_select %p40, %s41, %s42
    %p46 = pneg %p40
    %p47 = scmp.eq.s32.totalorder %s17, 1
    %p48 = por %p46, %p47
    %p49 = scmp.ne.s32.totalorder %s41, %s44
    %p50 = scmp.eq.s32.totalorder %s17, 0
    %p51 = por %p49, %p50
    %p52 = scmp.ne.s32.totalorder %s41, %s44
    %p53 = scmp.eq.s32.totalorder %s22, 1
    %p54 = por %p52, %p53
    %p55 = scmp.ne.s32.totalorder %s44, %s45
    %p56 = scmp.eq.s32.totalorder %s22, 0
    %p57 = por %p55, %p56
    %p58 = scmp.ne.s32.totalorder %s44, %s45
    %p59 = scmp.eq.s32.totalorder %s23, 1
    %p60 = por %p58, %p59
    %p62 = scmp.ne.s32.totalorder %s45, %s61
    %p63 = scmp.eq.s32.totalorder %s23, 0
    %p64 = por %p62, %p63
    %s65 = ssub.s32 %s24, %s36
    %s66 = ssub.s32 %s25, %s32
    %s67 = sor.u32 %s65, %s66
    %p68 = scmp.eq.s32.totalorder %s67, 0
    %s70 = sadd.s32 %s69, 1
    %s71 = scalar_select %p68, %s69, %s70
    %p74 = pneg %p68
    %p75 = scmp.eq.s32.totalorder %s17, 1
    %p76 = por %p74, %p75
    %p77 = scmp.ne.s32.totalorder %s69, %s72
    %p78 = scmp.eq.s32.totalorder %s17, 0
    %p79 = por %p77, %p78
    %p80 = scmp.ne.s32.totalorder %s69, %s72
    %p81 = scmp.eq.s32.totalorder %s22, 1
    %p82 = por %p80, %p81
    %p83 = scmp.ne.s32.totalorder %s72, %s73
    %p84 = scmp.eq.s32.totalorder %s22, 0
    %p85 = por %p83, %p84
    %p86 = scmp.ne.s32.totalorder %s72, %s73
    %p87 = scmp.eq.s32.totalorder %s23, 1
    %p88 = por %p86, %p87
    %p90 = scmp.ne.s32.totalorder %s73, %s89
    %p91 = scmp.eq.s32.totalorder %s23, 0
    %p92 = por %p90, %p91
    %s93 = ssub.s32 %s24, %s36
    %p94 = scmp.eq.s32.totalorder %s93, 0
    %s96 = sadd.s32 %s95, 1
    %s97 = scalar_select %p94, %s95, %s96
    %p100 = pneg %p94
    %p101 = scmp.eq.s32.totalorder %s17, 1
    %p102 = por %p100, %p101
    %p103 = scmp.ne.s32.totalorder %s95, %s98
    %p104 = scmp.eq.s32.totalorder %s17, 0
    %p105 = por %p103, %p104
    %p106 = scmp.ne.s32.totalorder %s95, %s98
    %p107 = scmp.eq.s32.totalorder %s22, 1
    %p108 = por %p106, %p107
    %p109 = scmp.ne.s32.totalorder %s98, %s99
    %p110 = scmp.eq.s32.totalorder %s22, 0
    %p111 = por %p109, %p110
    %p112 = scmp.ne.s32.totalorder %s98, %s99
    %p113 = scmp.eq.s32.totalorder %s23, 1
    %p114 = por %p112, %p113
    %p116 = scmp.ne.s32.totalorder %s99, %s115
    %p117 = scmp.eq.s32.totalorder %s23, 0
    %p118 = por %p116, %p117
    %s120 = sadd.s32 %s119, 1
    %p123 = scmp.eq.s32.totalorder %s17, 1
    %p124 = scmp.ne.s32.totalorder %s119, %s121
    %p125 = scmp.eq.s32.totalorder %s17, 0
    %p126 = por %p124, %p125
    %p127 = scmp.ne.s32.totalorder %s119, %s121
    %p128 = scmp.eq.s32.totalorder %s22, 1
    %p129 = por %p127, %p128
    %p130 = scmp.ne.s32.totalorder %s121, %s122
    %p131 = scmp.eq.s32.totalorder %s22, 0
    %p132 = por %p130, %p131
    %p133 = scmp.ne.s32.totalorder %s121, %s122
    %p134 = scmp.eq.s32.totalorder %s23, 1
    %p135 = por %p133, %p134
    %p137 = scmp.ne.s32.totalorder %s122, %s136
    %p138 = scmp.eq.s32.totalorder %s23, 0
    %p139 = por %p137, %p138
    %s141 = sadd.s32 %s140, 1
    %p144 = scmp.eq.s32.totalorder %s17, 1
    %p145 = scmp.ne.s32.totalorder %s140, %s142
    %p146 = scmp.eq.s32.totalorder %s17, 0
    %p147 = por %p145, %p146
    %p148 = scmp.ne.s32.totalorder %s140, %s142
    %p149 = scmp.eq.s32.totalorder %s22, 1
    %p150 = por %p148, %p149
    %p151 = scmp.ne.s32.totalorder %s142, %s143
    %p152 = scmp.eq.s32.totalorder %s22, 0
    %p153 = por %p151, %p152
    %p154 = scmp.ne.s32.totalorder %s142, %s143
    %p155 = scmp.eq.s32.totalorder %s23, 1
    %p156 = por %p154, %p155
    %p158 = scmp.ne.s32.totalorder %s143, %s157
    %p159 = scmp.eq.s32.totalorder %s23, 0
    %p160 = por %p158, %p159
    %s162 = sadd.s32 %s161, 1
    %p165 = scmp.eq.s32.totalorder %s17, 1
    %p166 = scmp.ne.s32.totalorder %s161, %s163
    %p167 = scmp.eq.s32.totalorder %s17, 0
    %p168 = por %p166, %p167
    %p169 = scmp.ne.s32.totalorder %s161, %s163
    %p170 = scmp.eq.s32.totalorder %s22, 1
    %p171 = por %p169, %p170
    %p172 = scmp.ne.s32.totalorder %s163, %s164
    %p173 = scmp.eq.s32.totalorder %s22, 0
    %p174 = por %p172, %p173
    %p175 = scmp.ne.s32.totalorder %s163, %s164
    %p176 = scmp.eq.s32.totalorder %s23, 1
    %p177 = por %p175, %p176
    %p179 = scmp.ne.s32.totalorder %s164, %s178
    %p180 = scmp.eq.s32.totalorder %s23, 0
    %p181 = por %p179, %p180
    %s183 = sadd.s32 %s182, 1
    %p186 = scmp.eq.s32.totalorder %s17, 1
    %p187 = scmp.ne.s32.totalorder %s182, %s184
    %p188 = scmp.eq.s32.totalorder %s17, 0
    %p189 = por %p187, %p188
    %p190 = scmp.ne.s32.totalorder %s182, %s184
    %p191 = scmp.eq.s32.totalorder %s22, 1
    %p192 = por %p190, %p191
    %p193 = scmp.ne.s32.totalorder %s184, %s185
    %p194 = scmp.eq.s32.totalorder %s22, 0
    %p195 = por %p193, %p194
    %p196 = scmp.ne.s32.totalorder %s184, %s185
    %p197 = scmp.eq.s32.totalorder %s23, 1
    %p198 = por %p196, %p197
    %p200 = scmp.ne.s32.totalorder %s185, %s199
    %p201 = scmp.eq.s32.totalorder %s23, 0
    %p202 = por %p200, %p201
    %s204 = sadd.s32 %s203, 1
    %p207 = scmp.eq.s32.totalorder %s17, 1
    %p208 = scmp.ne.s32.totalorder %s203, %s205
    %p209 = scmp.eq.s32.totalorder %s17, 0
    %p210 = por %p208, %p209
    %p211 = scmp.ne.s32.totalorder %s203, %s205
    %p212 = scmp.eq.s32.totalorder %s22, 1
    %p213 = por %p211, %p212
    %p214 = scmp.ne.s32.totalorder %s205, %s206
    %p215 = scmp.eq.s32.totalorder %s22, 0
    %p216 = por %p214, %p215
    %p217 = scmp.ne.s32.totalorder %s205, %s206
    %p218 = scmp.eq.s32.totalorder %s23, 1
    %p219 = por %p217, %p218
    %p221 = scmp.ne.s32.totalorder %s206, %s220
    %p222 = scmp.eq.s32.totalorder %s23, 0
    %p223 = por %p221, %p222
    %s225 = sadd.s32 %s224, 1
    %p228 = scmp.eq.s32.totalorder %s17, 1
    %p229 = scmp.ne.s32.totalorder %s224, %s226
    %p230 = scmp.eq.s32.totalorder %s17, 0
    %p231 = por %p229, %p230
    %p232 = scmp.ne.s32.totalorder %s224, %s226
    %p233 = scmp.eq.s32.totalorder %s22, 1
    %p234 = por %p232, %p233
    %p235 = scmp.ne.s32.totalorder %s226, %s227
    %p236 = scmp.eq.s32.totalorder %s22, 0
    %p237 = por %p235, %p236
    %p238 = scmp.ne.s32.totalorder %s226, %s227
    %p239 = scmp.eq.s32.totalorder %s23, 1
    %p240 = por %p238, %p239
    %p242 = scmp.ne.s32.totalorder %s227, %s241
    %p243 = scmp.eq.s32.totalorder %s23, 0
    %p244 = por %p242, %p243
    %s246 = sadd.s32 %s245, 1
    %p249 = scmp.eq.s32.totalorder %s17, 1
    %p250 = scmp.ne.s32.totalorder %s245, %s247
    %p251 = scmp.eq.s32.totalorder %s17, 0
    %p252 = por %p250, %p251
    %p253 = scmp.ne.s32.totalorder %s245, %s247
    %p254 = scmp.eq.s32.totalorder %s22, 1
    %p255 = por %p253, %p254
    %p256 = scmp.ne.s32.totalorder %s247, %s248
    %p257 = scmp.eq.s32.totalorder %s22, 0
    %p258 = por %p256, %p257
    %p259 = scmp.ne.s32.totalorder %s247, %s248
    %p260 = scmp.eq.s32.totalorder %s23, 1
    %p261 = por %p259, %p260
    %p263 = scmp.ne.s32.totalorder %s248, %s262
    %p264 = scmp.eq.s32.totalorder %s23, 0
    %p265 = por %p263, %p264
    %s267 = sadd.s32 %s266, 1
    %p270 = scmp.eq.s32.totalorder %s17, 1
    %p271 = scmp.ne.s32.totalorder %s266, %s268
    %p272 = scmp.eq.s32.totalorder %s17, 0
    %p273 = por %p271, %p272
    %p274 = scmp.ne.s32.totalorder %s266, %s268
    %p275 = scmp.eq.s32.totalorder %s22, 1
    %p276 = por %p274, %p275
    %p277 = scmp.ne.s32.totalorder %s268, %s269
    %p278 = scmp.eq.s32.totalorder %s22, 0
    %p279 = por %p277, %p278
    %p280 = scmp.ne.s32.totalorder %s268, %s269
    %p281 = scmp.eq.s32.totalorder %s23, 1
    %p282 = por %p280, %p281
    %p284 = scmp.ne.s32.totalorder %s269, %s283
    %p285 = scmp.eq.s32.totalorder %s23, 0
    %p286 = por %p284, %p285
    %s287 = ssub.s32 %s24, %s36
    %s288 = ssub.s32 %s25, %s32
    %s289 = sor.u32 %s287, %s288
    %p290 = scmp.eq.s32.totalorder %s289, 0
    %s292 = sadd.s32 %s291, 1
    %s293 = scalar_select %p290, %s291, %s292
    %p296 = pneg %p290
    %p297 = scmp.eq.s32.totalorder %s17, 1
    %p298 = por %p296, %p297
    %p299 = scmp.ne.s32.totalorder %s291, %s294
    %p300 = scmp.eq.s32.totalorder %s17, 0
    %p301 = por %p299, %p300
    %p302 = scmp.ne.s32.totalorder %s291, %s294
    %p303 = scmp.eq.s32.totalorder %s22, 1
    %p304 = por %p302, %p303
    %p305 = scmp.ne.s32.totalorder %s294, %s295
    %p306 = scmp.eq.s32.totalorder %s22, 0
    %p307 = por %p305, %p306
    %p308 = scmp.ne.s32.totalorder %s294, %s295
    %p309 = scmp.eq.s32.totalorder %s23, 1
    %p310 = por %p308, %p309
    %p312 = scmp.ne.s32.totalorder %s295, %s311
    %p313 = scmp.eq.s32.totalorder %s23, 0
    %p314 = por %p312, %p313
    %p315 = scmp.le.s32.totalorder 1, %s17
    %p316 = scmp.lt.s32.totalorder %s17, 3
    %p317 = pnand %p315, %p316
    %p318 = pneg %p317
    // Predicated region
    $region9: #{decoder_layer_forward.4} parent=5 // pred_check
      _
    $region10: #{decoder_layer_forward.4} parent=5 // pred_check_branch
      %320 = sbr.rel (%p317) target = $region12
    $region11: #{decoder_layer_forward.4} parent=5 // pred_region
      %s321 = ssub.s32 %s17, 1
      // Predicated region
      $region13: #{decoder_layer_forward.4} parent=11 // pred_check
        %p322 = pneg %p132
      $region14: #{decoder_layer_forward.4} parent=11 // pred_check_branch
        %324 = sbr.rel (%p322) target = $region16
      $region15: #{decoder_layer_forward.4} parent=11 // pred_region
        _
      $region16: #{decoder_layer_forward.4} parent=11 // pred_fallthru
        _
      // Predicated region
      $region17: #{decoder_layer_forward.4} parent=11 // pred_check
        %p325 = pneg %p153
      $region18: #{decoder_layer_forward.4} parent=11 // pred_check_branch
        %327 = sbr.rel (%p325) target = $region20
      $region19: #{decoder_layer_forward.4} parent=11 // pred_region
        _
      $region20: #{decoder_layer_forward.4} parent=11 // pred_fallthru
        _
      // Predicated region
      $region21: #{decoder_layer_forward.4} parent=11 // pred_check
        %p328 = pneg %p174
      $region22: #{decoder_layer_forward.4} parent=11 // pred_check_branch
        %330 = sbr.rel (%p328) target = $region24
      $region23: #{decoder_layer_forward.4} parent=11 // pred_region
        _
      $region24: #{decoder_layer_forward.4} parent=11 // pred_fallthru
        _
      // Predicated region
      $region25: #{decoder_layer_forward.4} parent=11 // pred_check
        %p331 = pneg %p195
      $region26: #{decoder_layer_forward.4} parent=11 // pred_check_branch
        %333 = sbr.rel (%p331) target = $region28
      $region27: #{decoder_layer_forward.4} parent=11 // pred_region
        _
      $region28: #{decoder_layer_forward.4} parent=11 // pred_fallthru
        _
      // Predicated region
      $region29: #{decoder_layer_forward.4} parent=11 // pred_check
        %p334 = pneg %p216
      $region30: #{decoder_layer_forward.4} parent=11 // pred_check_branch
        %336 = sbr.rel (%p334) target = $region32
      $region31: #{decoder_layer_forward.4} parent=11 // pred_region
        _
      $region32: #{decoder_layer_forward.4} parent=11 // pred_fallthru
        _
      // Predicated region
      $region33: #{decoder_layer_forward.4} parent=11 // pred_check
        %p337 = pneg %p237
      $region34: #{decoder_layer_forward.4} parent=11 // pred_check_branch
        %339 = sbr.rel (%p337) target = $region36
      $region35: #{decoder_layer_forward.4} parent=11 // pred_region
        _
      $region36: #{decoder_layer_forward.4} parent=11 // pred_fallthru
        _
      // Predicated region
      $region37: #{decoder_layer_forward.4} parent=11 // pred_check
        %p340 = pneg %p258
      $region38: #{decoder_layer_forward.4} parent=11 // pred_check_branch
        %342 = sbr.rel (%p340) target = $region40
      $region39: #{decoder_layer_forward.4} parent=11 // pred_region
        _
      $region40: #{decoder_layer_forward.4} parent=11 // pred_fallthru
        _
      // Predicated region
      $region41: #{decoder_layer_forward.4} parent=11 // pred_check
        %p343 = pneg %p279
      $region42: #{decoder_layer_forward.4} parent=11 // pred_check_branch
        %345 = sbr.rel (%p343) target = $region44
      $region43: #{decoder_layer_forward.4} parent=11 // pred_region
        _
      $region44: #{decoder_layer_forward.4} parent=11 // pred_fallthru
        _
    $region12: #{decoder_layer_forward.4} parent=5 // pred_fallthru
      _
    %p346 = scmp.lt.s32.totalorder %s17, 2
    // Predicated region
    $region45: #{decoder_layer_forward.4} parent=5 // pred_check
      %p347 = pneg %p346
    $region46: #{decoder_layer_forward.4} parent=5 // pred_check_branch
      %349 = sbr.rel (%p347) target = $region48
    $region47: #{decoder_layer_forward.4} parent=5 // pred_region
      // Predicated region
      $region49: #{decoder_layer_forward.4} parent=47 // pred_check
        %p350 = pneg %p51
      $region50: #{decoder_layer_forward.4} parent=47 // pred_check_branch
        %352 = sbr.rel (%p350) target = $region52
      $region51: #{decoder_layer_forward.4} parent=47 // pred_region
        %p353 = scmp.lt.s32.totalorder %s24, 1
        %s354 = scalar_select %p353, %s24, 1
        %p355 = scmp.lt.s32.totalorder %s25, 0
        %s356 = scalar_select %p355, %s25, 0
        %s357 = sadd.s32 %s356, %s354
        %s358 = smul.addr %s357, 2
        %s359 = scalar_lea.vmem %s0, %s358
      $region52: #{decoder_layer_forward.4} parent=47 // pred_fallthru
        _
      // Predicated region
      $region53: #{decoder_layer_forward.4} parent=47 // pred_check
        %p360 = pneg %p79
      $region54: #{decoder_layer_forward.4} parent=47 // pred_check_branch
        %362 = sbr.rel (%p360) target = $region56
      $region55: #{decoder_layer_forward.4} parent=47 // pred_region
        %p363 = scmp.lt.s32.totalorder %s24, 1
        %s364 = scalar_select %p363, %s24, 1
        %p365 = scmp.lt.s32.totalorder %s25, 0
        %s366 = scalar_select %p365, %s25, 0
        %s367 = sadd.s32 %s366, %s364
        %s368 = smul.addr %s367, 4
        %s369 = scalar_lea.vmem %s1, %s368
      $region56: #{decoder_layer_forward.4} parent=47 // pred_fallthru
        _
      // Predicated region
      $region57: #{decoder_layer_forward.4} parent=47 // pred_check
        %p370 = pneg %p105
      $region58: #{decoder_layer_forward.4} parent=47 // pred_check_branch
        %372 = sbr.rel (%p370) target = $region60
      $region59: #{decoder_layer_forward.4} parent=47 // pred_region
        %p373 = scmp.lt.s32.totalorder %s24, 1
        %s374 = scalar_select %p373, %s24, 1
        %s375 = smul.addr %s374, 4
        %s376 = scalar_lea.vmem %s2, %s375
      $region60: #{decoder_layer_forward.4} parent=47 // pred_fallthru
        _
    $region48: #{decoder_layer_forward.4} parent=5 // pred_fallthru
      _
    %p377 = scmp.le.s32.totalorder 1, %s17
    %p378 = scmp.lt.s32.totalorder %s17, 3
    %p379 = pnand %p377, %p378
    %p380 = pneg %p379
    // Predicated region
    $region61: #{decoder_layer_forward.4} parent=5 // pred_check
      _
    $region62: #{decoder_layer_forward.4} parent=5 // pred_check_branch
      %382 = sbr.rel (%p379) target = $region64
    $region63: #{decoder_layer_forward.4} parent=5 // pred_region
      %s383 = ssub.s32 %s17, 1
      %p384 = scmp.lt.s32.totalorder %s26, 1
      %s385 = scalar_select %p384, %s26, 1
      %p386 = scmp.lt.s32.totalorder %s27, 0
      %s387 = scalar_select %p386, %s27, 0
      %s388 = sadd.s32 %s387, %s385
      %s389 = smul.addr %s388, 2
      %s390 = scalar_lea.vmem %s0, %s389
      %p391 = pneg %p57
      %p392 = pneg %p54
      %p393 = scmp.lt.s32.totalorder %s26, 1
      %s394 = scalar_select %p393, %s26, 1
      %p395 = scmp.lt.s32.totalorder %s27, 0
      %s396 = scalar_select %p395, %s27, 0
      %s397 = sadd.s32 %s396, %s394
      %s398 = smul.addr %s397, 4
      %s399 = scalar_lea.vmem %s1, %s398
      %p400 = pneg %p85
      %p401 = pneg %p82
      %p402 = scmp.lt.s32.totalorder %s26, 1
      %s403 = scalar_select %p402, %s26, 1
      %s404 = smul.addr %s403, 4
      %s405 = scalar_lea.vmem %s2, %s404
      %p406 = pneg %p111
      %p407 = pneg %p108
      %p408 = pneg %p132
      %p409 = pneg %p129
      %p410 = pneg %p153
      %p411 = pneg %p150
      %p412 = pneg %p174
      %p413 = pneg %p171
      %p414 = pneg %p195
      %p415 = pneg %p192
      %p416 = pneg %p216
      %p417 = pneg %p213
      %p418 = pneg %p237
      %p419 = pneg %p234
      %p420 = pneg %p258
      %p421 = pneg %p255
      %p422 = pneg %p279
      %p423 = pneg %p276
      %p424 = pneg %p307
      %p425 = pneg %p304
      %p426 = scmp.lt.s32.totalorder %s26, 1
      %s427 = scalar_select %p426, %s26, 1
      %p428 = scmp.lt.s32.totalorder %s27, 0
      %s429 = scalar_select %p428, %s27, 0
      %s430 = sadd.s32 %s429, %s427
      %s431 = smul.addr %s430, 4
      %s432 = scalar_lea.vmem %s11, %s431
      %p433 = scmp.lt.s32.totalorder %s26, 1
      %s434 = scalar_select %p433, %s26, 1
      %p435 = scmp.lt.s32.totalorder %s27, 0
      %s436 = scalar_select %p435, %s27, 0
      %s437 = sadd.s32 %s436, %s434
      %s438 = smul.addr %s437, 2
      %s439 = scalar_lea.vmem %s0, %s438
      %p440 = scmp.lt.s32.totalorder %s26, 1
      %s441 = scalar_select %p440, %s26, 1
      %p442 = scmp.lt.s32.totalorder %s27, 0
      %s443 = scalar_select %p442, %s27, 0
      %s444 = sadd.s32 %s443, %s441
      %s445 = smul.addr %s444, 4
      %s446 = scalar_lea.vmem %s1, %s445
      %p447 = scmp.lt.s32.totalorder %s26, 1
      %s448 = scalar_select %p447, %s26, 1
      %s449 = smul.addr %s448, 4
      %s450 = scalar_lea.vmem %s2, %s449
      %p451 = scmp.lt.s32.totalorder %s26, 1
      %s452 = scalar_select %p451, %s26, 1
      %p453 = scmp.lt.s32.totalorder %s27, 0
      %s454 = scalar_select %p453, %s27, 0
      %s455 = sadd.s32 %s454, %s452
      %s456 = smul.addr %s455, 4
      %s457 = scalar_lea.vmem %s11, %s456
      %v459 = vld [vmem:[%s446] sm:$0xf]
      %v460 = vld [vmem:[%s450] sm:$0xf]
      %v461 = vld [vmem:[%s3] sm:$0xf]
      %v462 = vld [vmem:[%s3 + $0x4] sm:$0xf]
      %v463 = vld [vmem:[%s3 + $0x8] sm:$0xf]
      %v464 = vld [vmem:[%s3 + $0xc] sm:$0xf]
      %v465 = vld [vmem:[%s4] sm:$0x1]
      %v467 = vlaneseq
      %v468 = vshrl.u32 %v467, 7
      %v469 = vsub.s32 0, %v468
      %v470 = vrot.slane %v465, %v469
      %v476 = vunpack.c.l.b16 %v461
      %v477 = vunpack.c.l.b16 %v462
      %v478 = vunpack.c.l.b16 %v463
      %v479 = vunpack.c.l.b16 %v464
      %v480 = vpack.c.b16 %v477, %v476
      %v481 = vpack.c.b16 %v479, %v478
      %vm484 = vcmask 261120
      %v486 = vsel %vm484, %v459, 0
      %488 = vmatprep.subr.bf16.mxu0 0
      %489 = vmatpush1.bf16.msra.mxu0 0
      %490 = vmatprep.subr.bf16.mxu0 0
      %491 = vmatpush1.bf16.msra.mxu0 0
      %492 = vmatprep.subr.bf16.mxu0 0
      %493 = vmatpush1.bf16.msra.mxu0 0
      %494 = vmatprep.subr.bf16.mxu0 0
      %495 = vmatpush1.bf16.msra.mxu0 0
      %496 = vmatprep.subr.bf16.mxu0 0
      %497 = vmatpush1.bf16.msra.mxu0 0
      %498 = vmatprep.subr.bf16.mxu0 0
      %499 = vmatpush1.bf16.msra.mxu0 0
      %500 = vmatprep.subr.bf16.mxu0 0
      %501 = vmatpush1.bf16.msra.mxu0 %v481
      %502 = vmatprep.subr.bf16.mxu0 0
      %503 = vmatpush1.bf16.msra.mxu0 %v480
      %504 = vmatprep.subr.bf16.mxu0 0
      %505 = vmatpush2.bf16.msra.mxu0 0
      %506 = vmatprep.subr.bf16.mxu0 0
      %507 = vmatpush2.bf16.msra.mxu0 0
      %508 = vmatprep.subr.bf16.mxu0 0
      %509 = vmatpush2.bf16.msra.mxu0 0
      %510 = vmatprep.subr.bf16.mxu0 0
      %511 = vmatpush2.bf16.msra.mxu0 0
      %512 = vmatprep.subr.bf16.mxu0 0
      %513 = vmatpush2.bf16.msra.mxu0 0
      %514 = vmatprep.subr.bf16.mxu0 0
      %515 = vmatpush2.bf16.msra.mxu0 0
      %516 = vmatprep.subr.bf16.mxu0 0
      %517 = vmatpush2.bf16.msra.mxu0 0
      %518 = vmatprep.subr.bf16.mxu0 0
      %519 = vmatpush2.bf16.msra.mxu0 0
      %520 = vmatprep.mubr.bf16.mxu0 0
      %521 = vmatmul.mubr.bf16.gmra.mxu0 %v486
      %v522 = vpop.f32.mrf.mxu0
      %v523 = vadd.f32 %v470, %v522
      %v524 = vpop.f32.mrf.mxu0
      %v525 = vpop.f32.mrf.mxu0
      %v526 = vpop.f32.mrf.mxu0
      %527 = vdwg.mxu0
      %v528 = vmul.f32 %v523, 0.35355338
      %v529 = vpack.c.bf16 %v528, %v528
      %vm530 = vcmask 257024
      %531 = vst.msk [vmem:[#allocation2] sm:$0xf] %vm530, %v529
      %v532 = vld [vmem:[%s5] sm:$0xf]
      %v533 = vld [vmem:[%s5 + $0x4] sm:$0xf]
      %v534 = vld [vmem:[%s5 + $0x8] sm:$0xf]
      %v535 = vld [vmem:[%s5 + $0xc] sm:$0xf]
      %v536 = vld [vmem:[%s6] sm:$0x1]
      %v538 = vlaneseq
      %v539 = vshrl.u32 %v538, 7
      %v540 = vsub.s32 0, %v539
      %v541 = vrot.slane %v536, %v540
      %v547 = vunpack.c.l.b16 %v532
      %v548 = vunpack.c.l.b16 %v533
      %v549 = vunpack.c.l.b16 %v534
      %v550 = vunpack.c.l.b16 %v535
      %v551 = vpack.c.b16 %v548, %v547
      %v552 = vpack.c.b16 %v550, %v549
      %v556 = vsel %vm484, %v460, 0
      %558 = vmatprep.subr.bf16.mxu0 0
      %559 = vmatpush1.bf16.msra.mxu0 0
      %560 = vmatprep.subr.bf16.mxu0 0
      %561 = vmatpush1.bf16.msra.mxu0 0
      %562 = vmatprep.subr.bf16.mxu0 0
      %563 = vmatpush1.bf16.msra.mxu0 0
      %564 = vmatprep.subr.bf16.mxu0 0
      %565 = vmatpush1.bf16.msra.mxu0 0
      %566 = vmatprep.subr.bf16.mxu0 0
      %567 = vmatpush1.bf16.msra.mxu0 0
      %568 = vmatprep.subr.bf16.mxu0 0
      %569 = vmatpush1.bf16.msra.mxu0 0
      %570 = vmatprep.subr.bf16.mxu0 0
      %571 = vmatpush1.bf16.msra.mxu0 %v552
      %572 = vmatprep.subr.bf16.mxu0 0
      %573 = vmatpush1.bf16.msra.mxu0 %v551
      %574 = vmatprep.subr.bf16.mxu0 0
      %575 = vmatpush2.bf16.msra.mxu0 0
      %576 = vmatprep.subr.bf16.mxu0 0
      %577 = vmatpush2.bf16.msra.mxu0 0
      %578 = vmatprep.subr.bf16.mxu0 0
      %579 = vmatpush2.bf16.msra.mxu0 0
      %580 = vmatprep.subr.bf16.mxu0 0
      %581 = vmatpush2.bf16.msra.mxu0 0
      %582 = vmatprep.subr.bf16.mxu0 0
      %583 = vmatpush2.bf16.msra.mxu0 0
      %584 = vmatprep.subr.bf16.mxu0 0
      %585 = vmatpush2.bf16.msra.mxu0 0
      %586 = vmatprep.subr.bf16.mxu0 0
      %587 = vmatpush2.bf16.msra.mxu0 0
      %588 = vmatprep.subr.bf16.mxu0 0
      %589 = vmatpush2.bf16.msra.mxu0 0
      %590 = vmatprep.mubr.bf16.mxu0 0
      %591 = vmatmul.mubr.bf16.gmra.mxu0 %v556
      %v592 = vpop.f32.mrf.mxu0
      %v593 = vadd.f32 %v541, %v592
      %v594 = vpop.f32.mrf.mxu0
      %v595 = vpop.f32.mrf.mxu0
      %v596 = vpop.f32.mrf.mxu0
      %597 = vdwg.mxu0
      %v598 = vpack.c.bf16 %v593, %v593
      %vm599 = vcmask 519168
      %600 = vst.msk [vmem:[#allocation3] sm:$0xf] %vm599, %v598
      %v601 = vld [vmem:[%s439] sm:$0x3]
      %v602 = vunpack.c.0.s8 %v601
      %v603 = vcvt.s32.f32 %v602
      %vm604 = vcmp.eq.f32.partialorder %v603, 0.0
      %v605 = vsel %vm604, -1e+09, 0.0
      %v606 = vld [vmem:[#allocation2] sm:$0xf]
      %v607 = vld [vmem:[#allocation3] sm:$0xf]
      %vm608 = vcmask 64512
      %v610 = vsel %vm608, %v606, 0
      %v613 = vsel %vm608, %v607, 0
      %615 = vmatprep.subr.bf16.mxu0 0
      %616 = vmatpush1.bf16.xpose.msra.mxu0 0
      %617 = vmatprep.subr.bf16.mxu0 0
      %618 = vmatpush1.bf16.xpose.msra.mxu0 0
      %619 = vmatprep.subr.bf16.mxu0 0
      %620 = vmatpush1.bf16.xpose.msra.mxu0 0
      %621 = vmatprep.subr.bf16.mxu0 0
      %622 = vmatpush1.bf16.xpose.msra.mxu0 0
      %623 = vmatprep.subr.bf16.mxu0 0
      %624 = vmatpush1.bf16.xpose.msra.mxu0 0
      %625 = vmatprep.subr.bf16.mxu0 0
      %626 = vmatpush1.bf16.xpose.msra.mxu0 0
      %627 = vmatprep.subr.bf16.mxu0 0
      %628 = vmatpush1.bf16.xpose.msra.mxu0 0
      %629 = vmatprep.subr.bf16.mxu0 0
      %630 = vmatpush1.bf16.xpose.msra.mxu0 %v613
      %631 = vmatprep.subr.bf16.mxu0 0
      %632 = vmatpush2.bf16.xpose.msra.mxu0 0
      %633 = vmatprep.subr.bf16.mxu0 0
      %634 = vmatpush2.bf16.xpose.msra.mxu0 0
      %635 = vmatprep.subr.bf16.mxu0 0
      %636 = vmatpush2.bf16.xpose.msra.mxu0 0
      %637 = vmatprep.subr.bf16.mxu0 0
      %638 = vmatpush2.bf16.xpose.msra.mxu0 0
      %639 = vmatprep.subr.bf16.mxu0 0
      %640 = vmatpush2.bf16.xpose.msra.mxu0 0
      %641 = vmatprep.subr.bf16.mxu0 0
      %642 = vmatpush2.bf16.xpose.msra.mxu0 0
      %643 = vmatprep.subr.bf16.mxu0 0
      %644 = vmatpush2.bf16.xpose.msra.mxu0 0
      %645 = vmatprep.subr.bf16.mxu0 0
      %646 = vmatpush2.bf16.xpose.msra.mxu0 0
      %647 = vmatprep.mubr.bf16.mxu0 0
      %648 = vmatmul.mubr.bf16.gmra.mxu0 %v610
      %v649 = vpop.f32.mrf.mxu0
      %v650 = vadd.f32 %v605, %v649
      %v651 = vpop.f32.mrf.mxu0
      %v652 = vpop.f32.mrf.mxu0
      %v653 = vpop.f32.mrf.mxu0
      %654 = vdwg.mxu0
      %v655 = vsel %vm608, %v650, -inf
      %656 = vmax.xlane.f32.xlu0 %v655
      %v657 = vpop.xlane.xlu0 %656
      %v658 = vsub.f32 %v650, %v657
      %v659 = vmul.f32 %v658, 1.442695
      %v660 = vpow.pop %v659
      %v661 = vsel %vm608, %v660, 0.0
      %662 = vadd.xlane.f32.xlu0 %v661
      %v663 = vpop.xlane.xlu0 %662
      %v664 = vrcp.pop %v663
      %v665 = vmul.f32 %v660, %v664
      %v666 = vpack.c.bf16 %v665, %v665
      %v668 = vunpack.c.l.b16 %v607
      %v669 = vpack.c.b16 %v668, %v668
      %670 = vrot.lane.b32.xlu0 %v669, 96
      %v671 = vpop.permute.xlu0 %670
      %v673 = vsel %vm608, %v666, 0
      %vm675 = vcmask 1043456
      %v677 = vsel %vm675, %v671, 0
      %679 = vmatprep.subr.bf16.mxu0 0
      %680 = vmatpush1.bf16.msra.mxu0 0
      %681 = vmatprep.subr.bf16.mxu0 0
      %682 = vmatpush1.bf16.msra.mxu0 0
      %683 = vmatprep.subr.bf16.mxu0 0
      %684 = vmatpush1.bf16.msra.mxu0 0
      %685 = vmatprep.subr.bf16.mxu0 0
      %686 = vmatpush1.bf16.msra.mxu0 0
      %687 = vmatprep.subr.bf16.mxu0 0
      %688 = vmatpush1.bf16.msra.mxu0 0
      %689 = vmatprep.subr.bf16.mxu0 0
      %690 = vmatpush1.bf16.msra.mxu0 0
      %691 = vmatprep.subr.bf16.mxu0 0
      %692 = vmatpush1.bf16.msra.mxu0 0
      %693 = vmatprep.subr.bf16.mxu0 0
      %694 = vmatpush1.bf16.msra.mxu0 %v677
      %695 = vmatprep.subr.bf16.mxu0 0
      %696 = vmatpush2.bf16.msra.mxu0 0
      %697 = vmatprep.subr.bf16.mxu0 0
      %698 = vmatpush2.bf16.msra.mxu0 0
      %699 = vmatprep.subr.bf16.mxu0 0
      %700 = vmatpush2.bf16.msra.mxu0 0
      %701 = vmatprep.subr.bf16.mxu0 0
      %702 = vmatpush2.bf16.msra.mxu0 0
      %703 = vmatprep.subr.bf16.mxu0 0
      %704 = vmatpush2.bf16.msra.mxu0 0
      %705 = vmatprep.subr.bf16.mxu0 0
      %706 = vmatpush2.bf16.msra.mxu0 0
      %707 = vmatprep.subr.bf16.mxu0 0
      %708 = vmatpush2.bf16.msra.mxu0 0
      %709 = vmatprep.subr.bf16.mxu0 0
      %710 = vmatpush2.bf16.msra.mxu0 0
      %711 = vmatprep.mubr.bf16.mxu0 0
      %712 = vmatmul.mubr.bf16.gmra.mxu0 %v673
      %v713 = vpop.f32.mrf.mxu0
      %v714 = vadd.f32 0.0, %v713
      %v715 = vpop.f32.mrf.mxu0
      %v716 = vpop.f32.mrf.mxu0
      %v717 = vpop.f32.mrf.mxu0
      %718 = vdwg.mxu0
      %v719 = vpack.c.bf16 %v714, %v714
      %vm720 = vcmask 60416
      %721 = vst.msk [vmem:[#allocation4] sm:$0xf] %vm720, %v719
      %v722 = vld [vmem:[#allocation2] sm:$0xf]
      %v723 = vld [vmem:[#allocation3] sm:$0xf]
      %v725 = vunpack.c.l.b16 %v722
      %v726 = vpack.c.b16 %v725, %v725
      %727 = vrot.lane.b32.xlu0 %v726, 120
      %v728 = vpop.permute.xlu0 %727
      %v730 = vunpack.c.l.b16 %v723
      %v731 = vpack.c.b16 %v730, %v730
      %732 = vrot.lane.b32.xlu0 %v731, 120
      %v733 = vpop.permute.xlu0 %732
      %v735 = vsel %vm608, %v728, 0
      %v738 = vsel %vm608, %v733, 0
      %740 = vmatprep.subr.bf16.mxu0 0
      %741 = vmatpush1.bf16.xpose.msra.mxu0 0
      %742 = vmatprep.subr.bf16.mxu0 0
      %743 = vmatpush1.bf16.xpose.msra.mxu0 0
      %744 = vmatprep.subr.bf16.mxu0 0
      %745 = vmatpush1.bf16.xpose.msra.mxu0 0
      %746 = vmatprep.subr.bf16.mxu0 0
      %747 = vmatpush1.bf16.xpose.msra.mxu0 0
      %748 = vmatprep.subr.bf16.mxu0 0
      %749 = vmatpush1.bf16.xpose.msra.mxu0 0
      %750 = vmatprep.subr.bf16.mxu0 0
      %751 = vmatpush1.bf16.xpose.msra.mxu0 0
      %752 = vmatprep.subr.bf16.mxu0 0
      %753 = vmatpush1.bf16.xpose.msra.mxu0 0
      %754 = vmatprep.subr.bf16.mxu0 0
      %755 = vmatpush1.bf16.xpose.msra.mxu0 %v738
      %756 = vmatprep.subr.bf16.mxu0 0
      %757 = vmatpush2.bf16.xpose.msra.mxu0 0
      %758 = vmatprep.subr.bf16.mxu0 0
      %759 = vmatpush2.bf16.xpose.msra.mxu0 0
      %760 = vmatprep.subr.bf16.mxu0 0
      %761 = vmatpush2.bf16.xpose.msra.mxu0 0
      %762 = vmatprep.subr.bf16.mxu0 0
      %763 = vmatpush2.bf16.xpose.msra.mxu0 0
      %764 = vmatprep.subr.bf16.mxu0 0
      %765 = vmatpush2.bf16.xpose.msra.mxu0 0
      %766 = vmatprep.subr.bf16.mxu0 0
      %767 = vmatpush2.bf16.xpose.msra.mxu0 0
      %768 = vmatprep.subr.bf16.mxu0 0
      %769 = vmatpush2.bf16.xpose.msra.mxu0 0
      %770 = vmatprep.subr.bf16.mxu0 0
      %771 = vmatpush2.bf16.xpose.msra.mxu0 0
      %772 = vmatprep.mubr.bf16.mxu0 0
      %773 = vmatmul.mubr.bf16.gmra.mxu0 %v735
      %v774 = vpop.f32.mrf.mxu0
      %v775 = vadd.f32 %v605, %v774
      %v776 = vpop.f32.mrf.mxu0
      %v777 = vpop.f32.mrf.mxu0
      %v778 = vpop.f32.mrf.mxu0
      %779 = vdwg.mxu0
      %v780 = vsel %vm608, %v775, -inf
      %781 = vmax.xlane.f32.xlu0 %v780
      %v782 = vpop.xlane.xlu0 %781
      %v783 = vsub.f32 %v775, %v782
      %v784 = vmul.f32 %v783, 1.442695
      %v785 = vpow.pop %v784
      %v786 = vsel %vm608, %v785, 0.0
      %787 = vadd.xlane.f32.xlu0 %v786
      %v788 = vpop.xlane.xlu0 %787
      %v789 = vrcp.pop %v788
      %v790 = vmul.f32 %v785, %v789
      %v791 = vpack.c.bf16 %v790, %v790
      %792 = vrot.lane.b32.xlu0 %v731, 88
      %v793 = vpop.permute.xlu0 %792
      %v795 = vsel %vm608, %v791, 0
      %v798 = vsel %vm675, %v793, 0
      %800 = vmatprep.subr.bf16.mxu0 0
      %801 = vmatpush1.bf16.msra.mxu0 0
      %802 = vmatprep.subr.bf16.mxu0 0
      %803 = vmatpush1.bf16.msra.mxu0 0
      %804 = vmatprep.subr.bf16.mxu0 0
      %805 = vmatpush1.bf16.msra.mxu0 0
      %806 = vmatprep.subr.bf16.mxu0 0
      %807 = vmatpush1.bf16.msra.mxu0 0
      %808 = vmatprep.subr.bf16.mxu0 0
      %809 = vmatpush1.bf16.msra.mxu0 0
      %810 = vmatprep.subr.bf16.mxu0 0
      %811 = vmatpush1.bf16.msra.mxu0 0
      %812 = vmatprep.subr.bf16.mxu0 0
      %813 = vmatpush1.bf16.msra.mxu0 0
      %814 = vmatprep.subr.bf16.mxu0 0
      %815 = vmatpush1.bf16.msra.mxu0 %v798
      %816 = vmatprep.subr.bf16.mxu0 0
      %817 = vmatpush2.bf16.msra.mxu0 0
      %818 = vmatprep.subr.bf16.mxu0 0
      %819 = vmatpush2.bf16.msra.mxu0 0
      %820 = vmatprep.subr.bf16.mxu0 0
      %821 = vmatpush2.bf16.msra.mxu0 0
      %822 = vmatprep.subr.bf16.mxu0 0
      %823 = vmatpush2.bf16.msra.mxu0 0
      %824 = vmatprep.subr.bf16.mxu0 0
      %825 = vmatpush2.bf16.msra.mxu0 0
      %826 = vmatprep.subr.bf16.mxu0 0
      %827 = vmatpush2.bf16.msra.mxu0 0
      %828 = vmatprep.subr.bf16.mxu0 0
      %829 = vmatpush2.bf16.msra.mxu0 0
      %830 = vmatprep.subr.bf16.mxu0 0
      %831 = vmatpush2.bf16.msra.mxu0 0
      %832 = vmatprep.mubr.bf16.mxu0 0
      %833 = vmatmul.mubr.bf16.gmra.mxu0 %v795
      %v834 = vpop.f32.mrf.mxu0
      %v835 = vadd.f32 0.0, %v834
      %v836 = vpop.f32.mrf.mxu0
      %v837 = vpop.f32.mrf.mxu0
      %v838 = vpop.f32.mrf.mxu0
      %839 = vdwg.mxu0
      %v840 = vpack.c.bf16 %v835, %v835
      %v842 = vunpack.c.l.b16 %v840
      %v843 = vpack.c.b16 %v842, %v842
      %844 = vrot.lane.b32.xlu0 %v843, 8
      %v845 = vpop.permute.xlu0 %844
      %vm847 = vcmask 126016
      %848 = vst.msk [vmem:[#allocation4] sm:$0xf] %vm847, %v845
      %v849 = vld [vmem:[#allocation2] sm:$0xf]
      %v850 = vld [vmem:[#allocation3] sm:$0xf]
      %v852 = vunpack.c.l.b16 %v849
      %v853 = vpack.c.b16 %v852, %v852
      %854 = vrot.lane.b32.xlu0 %v853, 112
      %v855 = vpop.permute.xlu0 %854
      %v857 = vunpack.c.l.b16 %v850
      %v858 = vpack.c.b16 %v857, %v857
      %859 = vrot.lane.b32.xlu0 %v858, 112
      %v860 = vpop.permute.xlu0 %859
      %v862 = vsel %vm608, %v855, 0
      %v865 = vsel %vm608, %v860, 0
      %867 = vmatprep.subr.bf16.mxu0 0
      %868 = vmatpush1.bf16.xpose.msra.mxu0 0
      %869 = vmatprep.subr.bf16.mxu0 0
      %870 = vmatpush1.bf16.xpose.msra.mxu0 0
      %871 = vmatprep.subr.bf16.mxu0 0
      %872 = vmatpush1.bf16.xpose.msra.mxu0 0
      %873 = vmatprep.subr.bf16.mxu0 0
      %874 = vmatpush1.bf16.xpose.msra.mxu0 0
      %875 = vmatprep.subr.bf16.mxu0 0
      %876 = vmatpush1.bf16.xpose.msra.mxu0 0
      %877 = vmatprep.subr.bf16.mxu0 0
      %878 = vmatpush1.bf16.xpose.msra.mxu0 0
      %879 = vmatprep.subr.bf16.mxu0 0
      %880 = vmatpush1.bf16.xpose.msra.mxu0 0
      %881 = vmatprep.subr.bf16.mxu0 0
      %882 = vmatpush1.bf16.xpose.msra.mxu0 %v865
      %883 = vmatprep.subr.bf16.mxu0 0
      %884 = vmatpush2.bf16.xpose.msra.mxu0 0
      %885 = vmatprep.subr.bf16.mxu0 0
      %886 = vmatpush2.bf16.xpose.msra.mxu0 0
      %887 = vmatprep.subr.bf16.mxu0 0
      %888 = vmatpush2.bf16.xpose.msra.mxu0 0
      %889 = vmatprep.subr.bf16.mxu0 0
      %890 = vmatpush2.bf16.xpose.msra.mxu0 0
      %891 = vmatprep.subr.bf16.mxu0 0
      %892 = vmatpush2.bf16.xpose.msra.mxu0 0
      %893 = vmatprep.subr.bf16.mxu0 0
      %894 = vmatpush2.bf16.xpose.msra.mxu0 0
      %895 = vmatprep.subr.bf16.mxu0 0
      %896 = vmatpush2.bf16.xpose.msra.mxu0 0
      %897 = vmatprep.subr.bf16.mxu0 0
      %898 = vmatpush2.bf16.xpose.msra.mxu0 0
      %899 = vmatprep.mubr.bf16.mxu0 0
      %900 = vmatmul.mubr.bf16.gmra.mxu0 %v862
      %v901 = vpop.f32.mrf.mxu0
      %v902 = vadd.f32 %v605, %v901
      %v903 = vpop.f32.mrf.mxu0
      %v904 = vpop.f32.mrf.mxu0
      %v905 = vpop.f32.mrf.mxu0
      %906 = vdwg.mxu0
      %v907 = vsel %vm608, %v902, -inf
      %908 = vmax.xlane.f32.xlu0 %v907
      %v909 = vpop.xlane.xlu0 %908
      %v910 = vsub.f32 %v902, %v909
      %v911 = vmul.f32 %v910, 1.442695
      %v912 = vpow.pop %v911
      %v913 = vsel %vm608, %v912, 0.0
      %914 = vadd.xlane.f32.xlu0 %v913
      %v915 = vpop.xlane.xlu0 %914
      %v916 = vrcp.pop %v915
      %v917 = vmul.f32 %v912, %v916
      %v918 = vpack.c.bf16 %v917, %v917
      %919 = vrot.lane.b32.xlu0 %v858, 80
      %v920 = vpop.permute.xlu0 %919
      %v922 = vsel %vm608, %v918, 0
      %v925 = vsel %vm675, %v920, 0
      %927 = vmatprep.subr.bf16.mxu0 0
      %928 = vmatpush1.bf16.msra.mxu0 0
      %929 = vmatprep.subr.bf16.mxu0 0
      %930 = vmatpush1.bf16.msra.mxu0 0
      %931 = vmatprep.subr.bf16.mxu0 0
      %932 = vmatpush1.bf16.msra.mxu0 0
      %933 = vmatprep.subr.bf16.mxu0 0
      %934 = vmatpush1.bf16.msra.mxu0 0
      %935 = vmatprep.subr.bf16.mxu0 0
      %936 = vmatpush1.bf16.msra.mxu0 0
      %937 = vmatprep.subr.bf16.mxu0 0
      %938 = vmatpush1.bf16.msra.mxu0 0
      %939 = vmatprep.subr.bf16.mxu0 0
      %940 = vmatpush1.bf16.msra.mxu0 0
      %941 = vmatprep.subr.bf16.mxu0 0
      %942 = vmatpush1.bf16.msra.mxu0 %v925
      %943 = vmatprep.subr.bf16.mxu0 0
      %944 = vmatpush2.bf16.msra.mxu0 0
      %945 = vmatprep.subr.bf16.mxu0 0
      %946 = vmatpush2.bf16.msra.mxu0 0
      %947 = vmatprep.subr.bf16.mxu0 0
      %948 = vmatpush2.bf16.msra.mxu0 0
      %949 = vmatprep.subr.bf16.mxu0 0
      %950 = vmatpush2.bf16.msra.mxu0 0
      %951 = vmatprep.subr.bf16.mxu0 0
      %952 = vmatpush2.bf16.msra.mxu0 0
      %953 = vmatprep.subr.bf16.mxu0 0
      %954 = vmatpush2.bf16.msra.mxu0 0
      %955 = vmatprep.subr.bf16.mxu0 0
      %956 = vmatpush2.bf16.msra.mxu0 0
      %957 = vmatprep.subr.bf16.mxu0 0
      %958 = vmatpush2.bf16.msra.mxu0 0
      %959 = vmatprep.mubr.bf16.mxu0 0
      %960 = vmatmul.mubr.bf16.gmra.mxu0 %v922
      %v961 = vpop.f32.mrf.mxu0
      %v962 = vadd.f32 0.0, %v961
      %v963 = vpop.f32.mrf.mxu0
      %v964 = vpop.f32.mrf.mxu0
      %v965 = vpop.f32.mrf.mxu0
      %966 = vdwg.mxu0
      %v967 = vpack.c.bf16 %v962, %v962
      %v969 = vunpack.c.l.b16 %v967
      %v970 = vpack.c.b16 %v969, %v969
      %971 = vrot.lane.b32.xlu0 %v970, 16
      %v972 = vpop.permute.xlu0 %971
      %vm974 = vcmask 191616
      %975 = vst.msk [vmem:[#allocation4] sm:$0xf] %vm974, %v972
      %v976 = vld [vmem:[#allocation2] sm:$0xf]
      %v977 = vld [vmem:[#allocation3] sm:$0xf]
      %v979 = vunpack.c.l.b16 %v976
      %v980 = vpack.c.b16 %v979, %v979
      %981 = vrot.lane.b32.xlu0 %v980, 104
      %v982 = vpop.permute.xlu0 %981
      %v984 = vunpack.c.l.b16 %v977
      %v985 = vpack.c.b16 %v984, %v984
      %986 = vrot.lane.b32.xlu0 %v985, 104
      %v987 = vpop.permute.xlu0 %986
      %v989 = vsel %vm608, %v982, 0
      %v992 = vsel %vm608, %v987, 0
      %994 = vmatprep.subr.bf16.mxu0 0
      %995 = vmatpush1.bf16.xpose.msra.mxu0 0
      %996 = vmatprep.subr.bf16.mxu0 0
      %997 = vmatpush1.bf16.xpose.msra.mxu0 0
      %998 = vmatprep.subr.bf16.mxu0 0
      %999 = vmatpush1.bf16.xpose.msra.mxu0 0
      %1000 = vmatprep.subr.bf16.mxu0 0
      %1001 = vmatpush1.bf16.xpose.msra.mxu0 0
      %1002 = vmatprep.subr.bf16.mxu0 0
      %1003 = vmatpush1.bf16.xpose.msra.mxu0 0
      %1004 = vmatprep.subr.bf16.mxu0 0
      %1005 = vmatpush1.bf16.xpose.msra.mxu0 0
      %1006 = vmatprep.subr.bf16.mxu0 0
      %1007 = vmatpush1.bf16.xpose.msra.mxu0 0
      %1008 = vmatprep.subr.bf16.mxu0 0
      %1009 = vmatpush1.bf16.xpose.msra.mxu0 %v992
      %1010 = vmatprep.subr.bf16.mxu0 0
      %1011 = vmatpush2.bf16.xpose.msra.mxu0 0
      %1012 = vmatprep.subr.bf16.mxu0 0
      %1013 = vmatpush2.bf16.xpose.msra.mxu0 0
      %1014 = vmatprep.subr.bf16.mxu0 0
      %1015 = vmatpush2.bf16.xpose.msra.mxu0 0
      %1016 = vmatprep.subr.bf16.mxu0 0
      %1017 = vmatpush2.bf16.xpose.msra.mxu0 0
      %1018 = vmatprep.subr.bf16.mxu0 0
      %1019 = vmatpush2.bf16.xpose.msra.mxu0 0
      %1020 = vmatprep.subr.bf16.mxu0 0
      %1021 = vmatpush2.bf16.xpose.msra.mxu0 0
      %1022 = vmatprep.subr.bf16.mxu0 0
      %1023 = vmatpush2.bf16.xpose.msra.mxu0 0
      %1024 = vmatprep.subr.bf16.mxu0 0
      %1025 = vmatpush2.bf16.xpose.msra.mxu0 0
      %1026 = vmatprep.mubr.bf16.mxu0 0
      %1027 = vmatmul.mubr.bf16.gmra.mxu0 %v989
      %v1028 = vpop.f32.mrf.mxu0
      %v1029 = vadd.f32 %v605, %v1028
      %v1030 = vpop.f32.mrf.mxu0
      %v1031 = vpop.f32.mrf.mxu0
      %v1032 = vpop.f32.mrf.mxu0
      %1033 = vdwg.mxu0
      %v1034 = vsel %vm608, %v1029, -inf
      %1035 = vmax.xlane.f32.xlu0 %v1034
      %v1036 = vpop.xlane.xlu0 %1035
      %v1037 = vsub.f32 %v1029, %v1036
      %v1038 = vmul.f32 %v1037, 1.442695
      %v1039 = vpow.pop %v1038
      %v1040 = vsel %vm608, %v1039, 0.0
      %1041 = vadd.xlane.f32.xlu0 %v1040
      %v1042 = vpop.xlane.xlu0 %1041
      %v1043 = vrcp.pop %v1042
      %v1044 = vmul.f32 %v1039, %v1043
      %v1045 = vpack.c.bf16 %v1044, %v1044
      %1046 = vrot.lane.b32.xlu0 %v985, 72
      %v1047 = vpop.permute.xlu0 %1046
      %v1049 = vsel %vm608, %v1045, 0
      %v1052 = vsel %vm675, %v1047, 0
      %1054 = vmatprep.subr.bf16.mxu0 0
      %1055 = vmatpush1.bf16.msra.mxu0 0
      %1056 = vmatprep.subr.bf16.mxu0 0
      %1057 = vmatpush1.bf16.msra.mxu0 0
      %1058 = vmatprep.subr.bf16.mxu0 0
      %1059 = vmatpush1.bf16.msra.mxu0 0
      %1060 = vmatprep.subr.bf16.mxu0 0
      %1061 = vmatpush1.bf16.msra.mxu0 0
      %1062 = vmatprep.subr.bf16.mxu0 0
      %1063 = vmatpush1.bf16.msra.mxu0 0
      %1064 = vmatprep.subr.bf16.mxu0 0
      %1065 = vmatpush1.bf16.msra.mxu0 0
      %1066 = vmatprep.subr.bf16.mxu0 0
      %1067 = vmatpush1.bf16.msra.mxu0 0
      %1068 = vmatprep.subr.bf16.mxu0 0
      %1069 = vmatpush1.bf16.msra.mxu0 %v1052
      %1070 = vmatprep.subr.bf16.mxu0 0
      %1071 = vmatpush2.bf16.msra.mxu0 0
      %1072 = vmatprep.subr.bf16.mxu0 0
      %1073 = vmatpush2.bf16.msra.mxu0 0
      %1074 = vmatprep.subr.bf16.mxu0 0
      %1075 = vmatpush2.bf16.msra.mxu0 0
      %1076 = vmatprep.subr.bf16.mxu0 0
      %1077 = vmatpush2.bf16.msra.mxu0 0
      %1078 = vmatprep.subr.bf16.mxu0 0
      %1079 = vmatpush2.bf16.msra.mxu0 0
      %1080 = vmatprep.subr.bf16.mxu0 0
      %1081 = vmatpush2.bf16.msra.mxu0 0
      %1082 = vmatprep.subr.bf16.mxu0 0
      %1083 = vmatpush2.bf16.msra.mxu0 0
      %1084 = vmatprep.subr.bf16.mxu0 0
      %1085 = vmatpush2.bf16.msra.mxu0 0
      %1086 = vmatprep.mubr.bf16.mxu0 0
      %1087 = vmatmul.mubr.bf16.gmra.mxu0 %v1049
      %v1088 = vpop.f32.mrf.mxu0
      %v1089 = vadd.f32 0.0, %v1088
      %v1090 = vpop.f32.mrf.mxu0
      %v1091 = vpop.f32.mrf.mxu0
      %v1092 = vpop.f32.mrf.mxu0
      %1093 = vdwg.mxu0
      %v1094 = vpack.c.bf16 %v1089, %v1089
      %v1096 = vunpack.c.l.b16 %v1094
      %v1097 = vpack.c.b16 %v1096, %v1096
      %1098 = vrot.lane.b32.xlu0 %v1097, 24
      %v1099 = vpop.permute.xlu0 %1098
      %vm1101 = vcmask 257216
      %1102 = vst.msk [vmem:[#allocation4] sm:$0xf] %vm1101, %v1099
      %v1103 = vld [vmem:[#allocation4] sm:$0xf]
      %v1104 = vld [vmem:[%s7] sm:$0xf]
      %v1105 = vld [vmem:[%s7 + $0x4] sm:$0xf]
      %v1106 = vld [vmem:[%s7 + $0x8] sm:$0xf]
      %v1107 = vld [vmem:[%s7 + $0xc] sm:$0xf]
      %v1108 = vld [vmem:[%s8] sm:$0x1]
      %v1110 = vlaneseq
      %v1111 = vshrl.u32 %v1110, 7
      %v1112 = vsub.s32 0, %v1111
      %v1113 = vrot.slane %v1108, %v1112
      %v1119 = vunpack.c.l.b16 %v1104
      %v1120 = vunpack.c.l.b16 %v1105
      %v1121 = vunpack.c.l.b16 %v1106
      %v1122 = vunpack.c.l.b16 %v1107
      %v1123 = vpack.c.b16 %v1120, %v1119
      %v1124 = vpack.c.b16 %v1122, %v1121
      %v1128 = vsel %vm484, %v1103, 0
      %1130 = vmatprep.subr.bf16.mxu0 0
      %1131 = vmatpush1.bf16.msra.mxu0 0
      %1132 = vmatprep.subr.bf16.mxu0 0
      %1133 = vmatpush1.bf16.msra.mxu0 0
      %1134 = vmatprep.subr.bf16.mxu0 0
      %1135 = vmatpush1.bf16.msra.mxu0 0
      %1136 = vmatprep.subr.bf16.mxu0 0
      %1137 = vmatpush1.bf16.msra.mxu0 0
      %1138 = vmatprep.subr.bf16.mxu0 0
      %1139 = vmatpush1.bf16.msra.mxu0 0
      %1140 = vmatprep.subr.bf16.mxu0 0
      %1141 = vmatpush1.bf16.msra.mxu0 0
      %1142 = vmatprep.subr.bf16.mxu0 0
      %1143 = vmatpush1.bf16.msra.mxu0 %v1124
      %1144 = vmatprep.subr.bf16.mxu0 0
      %1145 = vmatpush1.bf16.msra.mxu0 %v1123
      %1146 = vmatprep.subr.bf16.mxu0 0
      %1147 = vmatpush2.bf16.msra.mxu0 0
      %1148 = vmatprep.subr.bf16.mxu0 0
      %1149 = vmatpush2.bf16.msra.mxu0 0
      %1150 = vmatprep.subr.bf16.mxu0 0
      %1151 = vmatpush2.bf16.msra.mxu0 0
      %1152 = vmatprep.subr.bf16.mxu0 0
      %1153 = vmatpush2.bf16.msra.mxu0 0
      %1154 = vmatprep.subr.bf16.mxu0 0
      %1155 = vmatpush2.bf16.msra.mxu0 0
      %1156 = vmatprep.subr.bf16.mxu0 0
      %1157 = vmatpush2.bf16.msra.mxu0 0
      %1158 = vmatprep.subr.bf16.mxu0 0
      %1159 = vmatpush2.bf16.msra.mxu0 0
      %1160 = vmatprep.subr.bf16.mxu0 0
      %1161 = vmatpush2.bf16.msra.mxu0 0
      %1162 = vmatprep.mubr.bf16.mxu0 0
      %1163 = vmatmul.mubr.bf16.gmra.mxu0 %v1128
      %v1164 = vpop.f32.mrf.mxu0
      %v1165 = vadd.f32 %v1113, %v1164
      %v1166 = vpop.f32.mrf.mxu0
      %v1167 = vpop.f32.mrf.mxu0
      %v1168 = vpop.f32.mrf.mxu0
      %1169 = vdwg.mxu0
      %v1170 = vunpack.c.l.bf16 %v459
      %v1171 = vadd.f32 %v1170, %v1165
      %v1172 = vsel %vm484, %v1171, 0.0
      %1173 = vadd.xlane.f32.xlu0 %v1172
      %v1174 = vpop.xlane.xlu0 %1173
      %v1175 = vrcp.pop 32.0
      %v1176 = vmul.f32 %v1174, %v1175
      %v1177 = vsub.f32 %v1171, %v1176
      %v1178 = vmul.f32 %v1177, %v1177
      %v1179 = vsel %vm484, %v1178, 0.0
      %1180 = vadd.xlane.f32.xlu0 %v1179
      %v1181 = vpop.xlane.xlu0 %1180
      %v1182 = vmul.f32 %v1181, %v1175
      %v1183 = vadd.f32 %v1182, 1e-05
      %v1184 = vrsqrt.pop %v1183
      %v1185 = vmul.f32 %v1177, %v1184
      %v1186 = vld [vmem:[%s9] sm:$0x1]
      %v1188 = vlaneseq
      %v1189 = vshrl.u32 %v1188, 7
      %v1190 = vsub.s32 0, %v1189
      %v1191 = vrot.slane %v1186, %v1190
      %v1193 = vmul.f32 %v1185, %v1191
      %v1194 = vld [vmem:[%s10] sm:$0x1]
      %v1196 = vlaneseq
      %v1197 = vshrl.u32 %v1196, 7
      %v1198 = vsub.s32 0, %v1197
      %v1199 = vrot.slane %v1194, %v1198
      %v1201 = vadd.f32 %v1193, %v1199
      %v1202 = vpack.c.bf16 %v1201, %v1201
      %1203 = vst.msk [vmem:[%s457] sm:$0xf] %vm530, %v1202
      %p1204 = scmp.lt.s32.totalorder %s26, 1
      %s1205 = scalar_select %p1204, %s26, 1
      %p1206 = scmp.lt.s32.totalorder %s27, 0
      %s1207 = scalar_select %p1206, %s27, 0
      %s1208 = sadd.s32 %s1207, %s1205
      %s1209 = smul.addr %s1208, 4
      %s1210 = scalar_lea.vmem %s11, %s1209
      // Predicated region
      $region65: #{decoder_layer_forward.4} parent=63 // pred_check
        %p1211 = pneg %p304
      $region66: #{decoder_layer_forward.4} parent=63 // pred_check_branch
        %1213 = sbr.rel (%p1211) target = $region68
      $region67: #{decoder_layer_forward.4} parent=63 // pred_region
        _
      $region68: #{decoder_layer_forward.4} parent=63 // pred_fallthru
        _
    $region64: #{decoder_layer_forward.4} parent=5 // pred_fallthru
      _
    %p1214 = scmp.le.s32.totalorder 2, %s17
    // Predicated region
    $region69: #{decoder_layer_forward.4} parent=5 // pred_check
      %p1215 = pneg %p1214
    $region70: #{decoder_layer_forward.4} parent=5 // pred_check_branch
      %1217 = sbr.rel (%p1215) target = $region72
    $region71: #{decoder_layer_forward.4} parent=5 // pred_region
      %s1218 = ssub.s32 %s17, 2
      // Predicated region
      $region73: #{decoder_layer_forward.4} parent=71 // pred_check
        %p1219 = pneg %p310
      $region74: #{decoder_layer_forward.4} parent=71 // pred_check_branch
        %1221 = sbr.rel (%p1219) target = $region76
      $region75: #{decoder_layer_forward.4} parent=71 // pred_region
        %p1222 = scmp.lt.s32.totalorder %s28, 1
        %s1223 = scalar_select %p1222, %s28, 1
        %p1224 = scmp.lt.s32.totalorder %s29, 0
        %s1225 = scalar_select %p1224, %s29, 0
        %s1226 = sadd.s32 %s1225, %s1223
        %s1227 = smul.addr %s1226, 4
        %s1228 = scalar_lea.vmem %s11, %s1227
      $region76: #{decoder_layer_forward.4} parent=71 // pred_fallthru
        _
    $region72: #{decoder_layer_forward.4} parent=5 // pred_fallthru
      _
  $region6: #{decoder_layer_forward.4} parent=0 // loop_footer
    %s21 = sadd.s32 1, %s17
  $region7: #{decoder_layer_forward.4} parent=0 // loop_footer_branch
    %16 = sbr.rel target = $region3
  $region8: #{decoder_layer_forward.4} parent=0 // loop_exit
    _

</llo_original>
